<compile_context>
chip_gen: v7x
topology: tpu7x:2x2x1
jax: 0.10.0
libtpu: 0.0.40
codegen_flags: <defaults>
</compile_context>

<pallas_src>
import jax
import jax.numpy as jnp
from jax import lax
from jax.experimental import pallas as pl
from jax.experimental.pallas import tpu as pltpu

EPS = 1e-5


def _vmem_limit_bytes():
    """Generation-dependent VMEM budget: ~3/4 of per-core capacity, capped.

    ~48 MiB on v7x (64 MiB physical), ~96 MiB on v5e/v6e (128 MiB physical).
    """
    try:
        cap = int(pltpu.get_tpu_info().vmem_capacity_bytes)
    except Exception:  # query unavailable -> conservative (v7x-safe) fallback
        cap = 64 * 1024 * 1024
    return min((cap * 3) // 4, 100 * 1024 * 1024)


def _conv3x3_accum(h, w_ref, acc_ref):
    """3x3 same-padding conv as 3 MXU matmuls (K = 3*C), result-shifted accum.

    h:       (H, W, C) f32 activation (cast to the MXU dtype here).
    w_ref:   (3, 3*C, Cout) packed weights, w_ref[ky][kx*C + c, o].
    acc_ref: (H*W, Cout) f32 VMEM scratch, pre-initialized with bias terms.

    Horizontal (x +- 1) taps are packed on the lane (channel) axis via XLU
    rolls + one masked select each (no sublane concat copies).  Vertical
    (y +- 1) taps are NOT materialized as shifted copies of the wide
    (H, W, 3C) operand: the narrow (M, Cout) matmul result is accumulated
    into row-shifted slices of acc_ref (whole output rows, sublane-aligned
    since W % 8 == 0).  This drops two (H, W, 3C) buffers per tile — the key
    VMEM saving for v7x's 64 MiB VMEM at production shapes.
    """
    H, W, C = h.shape
    M = H * W
    dt = w_ref.dtype
    col = lax.broadcasted_iota(jnp.int32, (H, W, C), 1)
    zero = jnp.zeros((), h.dtype)
    # tap x-1: out[:, x] = h[:, x-1]; the wrapped column at x == 0 is masked.
    left = jnp.where(col == 0, zero, pltpu.roll(h, 1, axis=1))
    # tap x+1: out[:, x] = h[:, x+1]; the wrapped column at x == W-1 is masked.
    right = jnp.where(col == W - 1, zero, pltpu.roll(h, W - 1, axis=1))
    xc = jnp.concatenate([left.astype(dt), h.astype(dt), right.astype(dt)],
                         axis=-1).reshape(M, 3 * C)          # (M, 3C) MXU dtype
    # TODO(synk): for production C >= 128 the K=3C packing buys nothing on the
    #             MXU; switch to 9 accumulating K=C matmuls and drop `xc`.

    # ky = 0: input row y-1 contributes to output row y -> shift result DOWN.
    p0 = jnp.dot(xc, w_ref[0], preferred_element_type=jnp.float32)
    acc_ref[pl.ds(W, M - W), :] += p0[:M - W, :]
    # ky = 1: no shift.
    p1 = jnp.dot(xc, w_ref[1], preferred_element_type=jnp.float32)
    acc_ref[...] += p1
    # ky = 2: input row y+1 contributes to output row y -> shift result UP.
    p2 = jnp.dot(xc, w_ref[2], preferred_element_type=jnp.float32)
    acc_ref[pl.ds(0, M - W), :] += p2[W:, :]


def _stage1_kernel(x_ref, scale1_ref, shift1_ref, w1_ref, b1_ref,
                   h2_ref, stats_ref, acc_ref):
    """BN1 (folded) + ReLU + conv1 for one batch tile; emits BN2 partial sums."""
    _, H, W, _ = x_ref.shape
    Cout = h2_ref.shape[-1]
    M = H * W

    # BN1 + ReLU in f32 on the VPU (stats pre-folded into scale/shift).
    h = jnp.maximum(x_ref[0] * scale1_ref[0] + shift1_ref[0], 0.0)

    # conv1: bias folded into the accumulator init; MXU operands in bf16.
    acc_ref[...] = jnp.broadcast_to(b1_ref[0], (M, Cout)).astype(jnp.float32)
    _conv3x3_accum(h, w1_ref, acc_ref)

    # h2 stored in the MXU dtype (bf16 fast path): halves the HBM traffic of
    # the largest cross-stage intermediate.
    h2 = acc_ref[...].astype(h2_ref.dtype)
    h2_ref[0] = h2.reshape(H, W, Cout)

    # BN2 partial sums computed from the SAME (possibly bf16-rounded) values
    # stage 2 will normalize, so the folded BN2 stats are self-consistent.
    # Two direct row stores — no concatenated temporary.
    hf = h2.astype(jnp.float32)
    stats_ref[0, 0:1] = jnp.sum(hf, axis=0, keepdims=True)
    stats_ref[0, 1:2] = jnp.sum(hf * hf, axis=0, keepdims=True)


def _stage2_kernel(h2_ref, x_ref, scale2_ref, shift2_ref, w2_ref, wb_ref,
                   bias_ref, out_ref, acc_ref):
    """BN2 (global stats, folded) + ReLU + conv2 + 1x1 bypass for one tile."""
    _, H, W, Cout = out_ref.shape
    Cin = x_ref.shape[-1]
    M = H * W

    # BN2 + ReLU in f32 on the VPU.
    g = jnp.maximum(h2_ref[0].astype(jnp.float32) * scale2_ref[0]
                    + shift2_ref[0], 0.0)

    # conv2 bias + bypass bias folded into the accumulator init; the 1x1
    # bypass matmul feeds the same accumulator.  x stays f32 in HBM; the cast
    # to the MXU dtype happens here on the VPU (no wrapper-side bf16 copy).
    acc_ref[...] = (
        jnp.broadcast_to(bias_ref[0], (M, Cout)).astype(jnp.float32)
        + jnp.dot(x_ref[0].reshape(M, Cin).astype(wb_ref.dtype), wb_ref[...],
                  preferred_element_type=jnp.float32))
    _conv3x3_accum(g, w2_ref, acc_ref)

    out_ref[0] = acc_ref[...].reshape(H, W, Cout).astype(out_ref.dtype)


def resblock_generator(x_nchw, params, *, mxu_dtype=jnp.bfloat16):
    """ResBlockGenerator forward. x_nchw: (N, Cin, H, W) f32 -> (N, Cout, H, W)."""
    g1, be1, w1, b1, g2, be2, w2, b2, wb, bb = params
    N, Cin, H, W = x_nchw.shape
    Cout = w1.shape[0]

    # TODO(synk): stride != 1 (bilinear nn.Upsample) not implemented; the
    #             default stride=1 makes the upsample branch the identity.
    # TODO(synk): keep activations NHWC at the model level to drop these
    #             NCHW<->NHWC transposes, and pad Cin/Cout to a multiple of
    #             128 for non-lane-aligned deployments (toy 4/8 channels run
    #             with masked partial stores; production 128/256 are fine).
    x = jnp.transpose(x_nchw, (0, 2, 3, 1)).astype(jnp.float32)   # NHWC

    # ---- BN1 training-mode stats: two-pass (centered) variance in XLA ----
    mean1 = jnp.mean(x, axis=(0, 1, 2))
    var1 = jnp.mean(jnp.square(x - mean1), axis=(0, 1, 2))
    scale1 = g1 * lax.rsqrt(var1 + EPS)
    shift1 = be1 - mean1 * scale1

    # ---- pack conv weights: w[ky][kx*Cin + c, o]; MXU operands in bf16 ----
    w1k = jnp.transpose(w1, (2, 3, 1, 0)).reshape(3, 3 * Cin, Cout).astype(mxu_dtype)
    w2k = jnp.transpose(w2, (2, 3, 1, 0)).reshape(3, 3 * Cout, Cout).astype(mxu_dtype)
    wbk = jnp.transpose(wb.reshape(Cout, Cin), (1, 0)).astype(mxu_dtype)

    cparams = pltpu.CompilerParams(
        dimension_semantics=("parallel",),        # shard batch across TCs
        vmem_limit_bytes=_vmem_limit_bytes(),     # ~48 MiB v7x / ~96 MiB v5e/v6e
    )
    # TODO(synk): at production H/W add a row-tile grid axis with a 1-row conv
    #             halo (and deeper pl.Buffered pipelining on v5e/v6e for the
    #             big stage-2 streams) to shrink the per-step working set and
    #             give the megacore more grid points to balance.

    # ---- stage 1: BN1 + ReLU + conv1, per-image tiles, pipelined ----
    h2, stats = pl.pallas_call(
        _stage1_kernel,
        grid=(N,),
        in_specs=[
            pl.BlockSpec((1, H, W, Cin), lambda n: (n, 0, 0, 0)),
            pl.BlockSpec((1, Cin), lambda n: (0, 0)),
            pl.BlockSpec((1, Cin), lambda n: (0, 0)),
            pl.BlockSpec((3, 3 * Cin, Cout), lambda n: (0, 0, 0)),
            pl.BlockSpec((1, Cout), lambda n: (0, 0)),
        ],
        out_specs=(
            pl.BlockSpec((1, H, W, Cout), lambda n: (n, 0, 0, 0)),
            pl.BlockSpec((1, 2, Cout), lambda n: (n, 0, 0)),
        ),
        out_shape=(
            jax.ShapeDtypeStruct((N, H, W, Cout), mxu_dtype),     # bf16 h2 on fast path
            jax.ShapeDtypeStruct((N, 2, Cout), jnp.float32),
        ),
        scratch_shapes=[pltpu.VMEM((H * W, Cout), jnp.float32)],
        compiler_params=cparams,
    )(x, scale1.reshape(1, Cin), shift1.reshape(1, Cin), w1k, b1.reshape(1, Cout))

    # ---- BN2 training-mode stats from per-tile partial sums ----
    # NOTE: one-pass E[x^2]-E[x]^2 in f32 (clamped at 0); cheap but can lose
    # precision for ill-conditioned activations (acceptable for GAN training).
    nhw = float(N * H * W)
    total = jnp.sum(stats, axis=0)               # (2, Cout)
    mean2 = total[0] / nhw
    var2 = jnp.maximum(total[1] / nhw - jnp.square(mean2), 0.0)
    scale2 = g2 * lax.rsqrt(var2 + EPS)
    shift2 = be2 - mean2 * scale2

    # ---- stage 2: BN2 + ReLU + conv2 + 1x1 bypass ----
    out = pl.pallas_call(
        _stage2_kernel,
        grid=(N,),
        in_specs=[
            pl.BlockSpec((1, H, W, Cout), lambda n: (n, 0, 0, 0)),
            pl.BlockSpec((1, H, W, Cin), lambda n: (n, 0, 0, 0)),
            pl.BlockSpec((1, Cout), lambda n: (0, 0)),
            pl.BlockSpec((1, Cout), lambda n: (0, 0)),
            pl.BlockSpec((3, 3 * Cout, Cout), lambda n: (0, 0, 0)),
            pl.BlockSpec((Cin, Cout), lambda n: (0, 0)),
            pl.BlockSpec((1, Cout), lambda n: (0, 0)),
        ],
        out_specs=pl.BlockSpec((1, H, W, Cout), lambda n: (n, 0, 0, 0)),
        out_shape=jax.ShapeDtypeStruct((N, H, W, Cout), jnp.float32),
        scratch_shapes=[pltpu.VMEM((H * W, Cout), jnp.float32)],
        compiler_params=cparams,
    )(h2, x, scale2.reshape(1, Cout), shift2.reshape(1, Cout),
      w2k, wbk, (b2 + bb).reshape(1, Cout))

    return jnp.transpose(out, (0, 3, 1, 2))      # back to NCHW


def ref_forward(x, params):
    """Pure-JAX f32 reference mirroring the PyTorch module (NCHW)."""
    g1, be1, w1, b1, g2, be2, w2, b2, wb, bb = params

    def bn(t, g, b):
        m = jnp.mean(t, axis=(0, 2, 3), keepdims=True)
        v = jnp.mean((t - m) ** 2, axis=(0, 2, 3), keepdims=True)
        return (t - m) / jnp.sqrt(v + EPS) * g.reshape(1, -1, 1, 1) + b.reshape(1, -1, 1, 1)

    def conv(t, w, b, pad):
        o = lax.conv_general_dilated(t, w, (1, 1), pad,
                                     dimension_numbers=('NCHW', 'OIHW', 'NCHW'))
        return o + b.reshape(1, -1, 1, 1)

    h = jax.nn.relu(bn(x, g1, be1))
    h = conv(h, w1, b1, [(1, 1), (1, 1)])
    h = jax.nn.relu(bn(h, g2, be2))
    h = conv(h, w2, b2, [(1, 1), (1, 1)])
    byp = conv(x, wb, bb, [(0, 0), (0, 0)])
    return h + byp


if __name__ == "__main__":
    key = jax.random.PRNGKey(0)
    N, Cin, Cout, H, W = 2, 4, 8, 16, 16
    keys = jax.random.split(key, 11)

    x = jax.random.normal(keys[0], (N, Cin, H, W), jnp.float32)
    # Deterministic synthetic parameters (shapes match nn.Module __init__).
    g1 = 1.0 + 0.1 * jax.random.normal(keys[1], (Cin,), jnp.float32)    # BN1 weight
    be1 = 0.1 * jax.random.normal(keys[2], (Cin,), jnp.float32)         # BN1 bias
    w1 = 0.1 * jax.random.normal(keys[3], (Cout, Cin, 3, 3), jnp.float32)
    b1 = 0.1 * jax.random.normal(keys[4], (Cout,), jnp.float32)
    g2 = 1.0 + 0.1 * jax.random.normal(keys[5], (Cout,), jnp.float32)   # BN2 weight
    be2 = 0.1 * jax.random.normal(keys[6], (Cout,), jnp.float32)        # BN2 bias
    w2 = 0.1 * jax.random.normal(keys[7], (Cout, Cout, 3, 3), jnp.float32)
    b2 = 0.1 * jax.random.normal(keys[8], (Cout,), jnp.float32)
    wb = 0.1 * jax.random.normal(keys[9], (Cout, Cin, 1, 1), jnp.float32)  # bypass 1x1
    bb = 0.1 * jax.random.normal(keys[10], (Cout,), jnp.float32)
    params = (g1, be1, w1, b1, g2, be2, w2, b2, wb, bb)

    fwd = jax.jit(resblock_generator, static_argnames=("mxu_dtype",))
    ref = jax.block_until_ready(ref_forward(x, params))

    # f32 MXU operands (h2 also f32): tight numerical validation vs reference.
    out_f32 = jax.block_until_ready(fwd(x, params, mxu_dtype=jnp.float32))
    assert out_f32.shape == (N, Cout, H, W), out_f32.shape
    err_f32 = float(jnp.max(jnp.abs(out_f32 - ref)))
    assert err_f32 < 1e-3, f"f32 max abs err {err_f32}"

    # bf16 MXU operands + bf16 h2 (fast path): elementwise abs+rel bound so
    # real regressions (O(0.3+) errors) are not masked by a loose abs check.
    out_bf16 = jax.block_until_ready(fwd(x, params, mxu_dtype=jnp.bfloat16))
    err = jnp.abs(out_bf16 - ref)
    tol = 8e-2 + 8e-2 * jnp.abs(ref)
    worst = float(jnp.max(err - tol))
    assert bool(jnp.all(err <= tol)), f"bf16 error exceeds tol by {worst}"

    print("KERNEL_OK")
</pallas_src>

<mosaic_0001>
module attributes {stable_mosaic.version = 11 : i64} {
  func.func @_stage1_kernel(%arg0: i32, %arg1: memref<1x16x16x4xf32, #tpu.memory_space<vmem>>, %arg2: memref<1x4xf32, #tpu.memory_space<vmem>>, %arg3: memref<1x4xf32, #tpu.memory_space<vmem>>, %arg4: memref<3x12x8xf32, #tpu.memory_space<vmem>>, %arg5: memref<1x8xf32, #tpu.memory_space<vmem>>, %arg6: memref<1x16x16x8xf32, #tpu.memory_space<vmem>>, %arg7: memref<1x2x8xf32, #tpu.memory_space<vmem>>, %arg8: memref<256x8xf32, #tpu.memory_space<vmem>>) attributes {dimension_semantics = [#tpu.dimension_semantics<parallel>], iteration_bounds = array<i64: 2>, scalar_prefetch = 0 : i64, scratch_operands = 1 : i64, tpu.core_type = #tpu.core_type<tc>, window_params = [{transform_indices = @transform_0, window_bounds = array<i64: 1, 16, 16, 4>}, {pipeline_mode = #tpu.pipeline_mode<synchronous>, transform_indices = @transform_1, window_bounds = array<i64: 1, 4>}, {pipeline_mode = #tpu.pipeline_mode<synchronous>, transform_indices = @transform_2, window_bounds = array<i64: 1, 4>}, {pipeline_mode = #tpu.pipeline_mode<synchronous>, transform_indices = @transform_3, window_bounds = array<i64: 3, 12, 8>}, {pipeline_mode = #tpu.pipeline_mode<synchronous>, transform_indices = @transform_4, window_bounds = array<i64: 1, 8>}, {transform_indices = @transform_5, window_bounds = array<i64: 1, 16, 16, 8>}, {transform_indices = @transform_6, window_bounds = array<i64: 1, 2, 8>}]} {
    %c0 = arith.constant 0 : index
    %c0_0 = arith.constant 0 : index
    %c0_1 = arith.constant 0 : index
    %c0_2 = arith.constant 0 : index
    %0 = vector.load %arg1[%c0, %c0_0, %c0_1, %c0_2] : memref<1x16x16x4xf32, #tpu.memory_space<vmem>>, vector<1x16x16x4xf32>
    %1 = vector.shape_cast %0 : vector<1x16x16x4xf32> to vector<16x16x4xf32>
    %c0_3 = arith.constant 0 : index
    %c0_4 = arith.constant 0 : index
    %2 = vector.load %arg2[%c0_3, %c0_4] : memref<1x4xf32, #tpu.memory_space<vmem>>, vector<1x4xf32>
    %3 = vector.shape_cast %2 : vector<1x4xf32> to vector<4xf32>
    %4 = vector.shape_cast %3 : vector<4xf32> to vector<1x1x4xf32>
    %5 = vector.broadcast %4 : vector<1x1x4xf32> to vector<16x16x4xf32>
    %6 = arith.mulf %1, %5 : vector<16x16x4xf32>
    %c0_5 = arith.constant 0 : index
    %c0_6 = arith.constant 0 : index
    %7 = vector.load %arg3[%c0_5, %c0_6] : memref<1x4xf32, #tpu.memory_space<vmem>>, vector<1x4xf32>
    %8 = vector.shape_cast %7 : vector<1x4xf32> to vector<4xf32>
    %9 = vector.shape_cast %8 : vector<4xf32> to vector<1x1x4xf32>
    %10 = vector.broadcast %9 : vector<1x1x4xf32> to vector<16x16x4xf32>
    %11 = arith.addf %6, %10 : vector<16x16x4xf32>
    %cst = arith.constant 0.000000e+00 : f32
    %12 = vector.broadcast %cst : f32 to vector<16x16x4xf32>
    %13 = arith.maximumf %11, %12 : vector<16x16x4xf32>
    %c0_7 = arith.constant 0 : index
    %c0_8 = arith.constant 0 : index
    %14 = vector.load %arg5[%c0_7, %c0_8] : memref<1x8xf32, #tpu.memory_space<vmem>>, vector<1x8xf32>
    %15 = vector.shape_cast %14 : vector<1x8xf32> to vector<8xf32>
    %16 = vector.shape_cast %15 : vector<8xf32> to vector<1x8xf32>
    %17 = vector.broadcast %16 : vector<1x8xf32> to vector<256x8xf32>
    %c0_9 = arith.constant 0 : index
    %c0_10 = arith.constant 0 : index
    %18 = vector.load %arg8[%c0_9, %c0_10] : memref<256x8xf32, #tpu.memory_space<vmem>>, vector<256x8xf32>
    tpu.vector_store %arg8[%c0_9, %c0_10], %17 {strides = array<i32>} : memref<256x8xf32, #tpu.memory_space<vmem>>, vector<256x8xf32>,
    %19 = tpu.iota {dimensions = array<i32: 1>} : vector<16x16x4xi32>
    %c0_i32 = arith.constant 0 : i32
    %20 = vector.broadcast %c0_i32 : i32 to vector<16x16x4xi32>
    %21 = arith.cmpi eq, %19, %20 : vector<16x16x4xi32>
    %c1_i32 = arith.constant 1 : i32
    %22 = tpu.dynamic_rotate %13 by %c1_i32 dim 1 : vector<16x16x4xf32>, i32 -> vector<16x16x4xf32>
    %cst_11 = arith.constant 0.000000e+00 : f32
    %23 = vector.broadcast %cst_11 : f32 to vector<16x16x4xf32>
    %24 = arith.select %21, %23, %22 : vector<16x16x4xi1>, vector<16x16x4xf32>
    %c15_i32 = arith.constant 15 : i32
    %25 = vector.broadcast %c15_i32 : i32 to vector<16x16x4xi32>
    %26 = arith.cmpi eq, %19, %25 : vector<16x16x4xi32>
    %c15_i32_12 = arith.constant 15 : i32
    %27 = tpu.dynamic_rotate %13 by %c15_i32_12 dim 1 : vector<16x16x4xf32>, i32 -> vector<16x16x4xf32>
    %cst_13 = arith.constant 0.000000e+00 : f32
    %28 = vector.broadcast %cst_13 : f32 to vector<16x16x4xf32>
    %29 = arith.select %26, %28, %27 : vector<16x16x4xi1>, vector<16x16x4xf32>
    %30 = tpu.concatenate %24, %13, %29 in 2 : vector<16x16x4xf32>, vector<16x16x4xf32>, vector<16x16x4xf32> -> vector<16x16x12xf32>
    %31 = vector.shape_cast %30 : vector<16x16x12xf32> to vector<256x12xf32>
    %c0_14 = arith.constant 0 : index
    %c0_15 = arith.constant 0 : index
    %c0_16 = arith.constant 0 : index
    %32 = vector.load %arg4[%c0_14, %c0_15, %c0_16] : memref<3x12x8xf32, #tpu.memory_space<vmem>>, vector<1x12x8xf32>
    %33 = vector.shape_cast %32 : vector<1x12x8xf32> to vector<12x8xf32>
    %cst_17 = arith.constant dense<0.000000e+00> : vector<256x8xf32>
    %34 = tpu.matmul %31, %33, %cst_17 {dimension_numbers = #tpu.dot_dimension_numbers<[1], [0], [0], [1], [0, 0, 1, 1], [], []>} : vector<256x12xf32>, vector<12x8xf32>, vector<256x8xf32> -> vector<256x8xf32>
    %c16 = arith.constant 16 : index
    %c0_18 = arith.constant 0 : index
    %35 = vector.load %arg8[%c16, %c0_18] : memref<256x8xf32, #tpu.memory_space<vmem>>, vector<240x8xf32>
    %36 = vector.extract_strided_slice %34 {offsets = [0, 0], sizes = [240, 8], strides = [1, 1]} : vector<256x8xf32> to vector<240x8xf32>
    %37 = arith.addf %35, %36 : vector<240x8xf32>
    %c16_19 = arith.constant 16 : index
    %c0_20 = arith.constant 0 : index
    %38 = vector.load %arg8[%c16_19, %c0_20] : memref<256x8xf32, #tpu.memory_space<vmem>>, vector<240x8xf32>
    tpu.vector_store %arg8[%c16_19, %c0_20], %37 {strides = array<i32>} : memref<256x8xf32, #tpu.memory_space<vmem>>, vector<240x8xf32>,
    %c1 = arith.constant 1 : index
    %c0_21 = arith.constant 0 : index
    %c0_22 = arith.constant 0 : index
    %39 = vector.load %arg4[%c1, %c0_21, %c0_22] : memref<3x12x8xf32, #tpu.memory_space<vmem>>, vector<1x12x8xf32>
    %40 = vector.shape_cast %39 : vector<1x12x8xf32> to vector<12x8xf32>
    %cst_23 = arith.constant dense<0.000000e+00> : vector<256x8xf32>
    %41 = tpu.matmul %31, %40, %cst_23 {dimension_numbers = #tpu.dot_dimension_numbers<[1], [0], [0], [1], [0, 0, 1, 1], [], []>} : vector<256x12xf32>, vector<12x8xf32>, vector<256x8xf32> -> vector<256x8xf32>
    %c0_24 = arith.constant 0 : index
    %c0_25 = arith.constant 0 : index
    %42 = vector.load %arg8[%c0_24, %c0_25] : memref<256x8xf32, #tpu.memory_space<vmem>>, vector<256x8xf32>
    %43 = arith.addf %42, %41 : vector<256x8xf32>
    %c0_26 = arith.constant 0 : index
    %c0_27 = arith.constant 0 : index
    %44 = vector.load %arg8[%c0_26, %c0_27] : memref<256x8xf32, #tpu.memory_space<vmem>>, vector<256x8xf32>
    tpu.vector_store %arg8[%c0_26, %c0_27], %43 {strides = array<i32>} : memref<256x8xf32, #tpu.memory_space<vmem>>, vector<256x8xf32>,
    %c2 = arith.constant 2 : index
    %c0_28 = arith.constant 0 : index
    %c0_29 = arith.constant 0 : index
    %45 = vector.load %arg4[%c2, %c0_28, %c0_29] : memref<3x12x8xf32, #tpu.memory_space<vmem>>, vector<1x12x8xf32>
    %46 = vector.shape_cast %45 : vector<1x12x8xf32> to vector<12x8xf32>
    %cst_30 = arith.constant dense<0.000000e+00> : vector<256x8xf32>
    %47 = tpu.matmul %31, %46, %cst_30 {dimension_numbers = #tpu.dot_dimension_numbers<[1], [0], [0], [1], [0, 0, 1, 1], [], []>} : vector<256x12xf32>, vector<12x8xf32>, vector<256x8xf32> -> vector<256x8xf32>
    %c0_31 = arith.constant 0 : index
    %c0_32 = arith.constant 0 : index
    %48 = vector.load %arg8[%c0_31, %c0_32] : memref<256x8xf32, #tpu.memory_space<vmem>>, vector<240x8xf32>
    %49 = vector.extract_strided_slice %47 {offsets = [16, 0], sizes = [240, 8], strides = [1, 1]} : vector<256x8xf32> to vector<240x8xf32>
    %50 = arith.addf %48, %49 : vector<240x8xf32>
    %c0_33 = arith.constant 0 : index
    %c0_34 = arith.constant 0 : index
    %51 = vector.load %arg8[%c0_33, %c0_34] : memref<256x8xf32, #tpu.memory_space<vmem>>, vector<240x8xf32>
    tpu.vector_store %arg8[%c0_33, %c0_34], %50 {strides = array<i32>} : memref<256x8xf32, #tpu.memory_space<vmem>>, vector<240x8xf32>,
    %c0_35 = arith.constant 0 : index
    %c0_36 = arith.constant 0 : index
    %52 = vector.load %arg8[%c0_35, %c0_36] : memref<256x8xf32, #tpu.memory_space<vmem>>, vector<256x8xf32>
    %53 = vector.shape_cast %52 : vector<256x8xf32> to vector<16x16x8xf32>
    %c0_37 = arith.constant 0 : index
    %c0_38 = arith.constant 0 : index
    %c0_39 = arith.constant 0 : index
    %c0_40 = arith.constant 0 : index
    %54 = vector.load %arg6[%c0_37, %c0_38, %c0_39, %c0_40] : memref<1x16x16x8xf32, #tpu.memory_space<vmem>>, vector<1x16x16x8xf32>
    %55 = vector.shape_cast %54 : vector<1x16x16x8xf32> to vector<16x16x8xf32>
    %56 = vector.shape_cast %53 : vector<16x16x8xf32> to vector<1x16x16x8xf32>
    tpu.vector_store %arg6[%c0_37, %c0_38, %c0_39, %c0_40], %56 {strides = array<i32>} : memref<1x16x16x8xf32, #tpu.memory_space<vmem>>, vector<1x16x16x8xf32>,
    %cst_41 = arith.constant dense<0.000000e+00> : vector<8xf32>
    %57 = vector.multi_reduction <add>, %52, %cst_41 [0] : vector<256x8xf32> to vector<8xf32>
    %58 = vector.shape_cast %57 : vector<8xf32> to vector<1x8xf32>
    %c0_42 = arith.constant 0 : index
    %c0_43 = arith.constant 0 : index
    %c0_44 = arith.constant 0 : index
    %59 = vector.load %arg7[%c0_42, %c0_43, %c0_44] : memref<1x2x8xf32, #tpu.memory_space<vmem>>, vector<1x1x8xf32>
    %60 = vector.shape_cast %59 : vector<1x1x8xf32> to vector<1x8xf32>
    %61 = vector.shape_cast %58 : vector<1x8xf32> to vector<1x1x8xf32>
    tpu.vector_store %arg7[%c0_42, %c0_43, %c0_44], %61 {strides = array<i32>} : memref<1x2x8xf32, #tpu.memory_space<vmem>>, vector<1x1x8xf32>,
    %62 = arith.mulf %52, %52 : vector<256x8xf32>
    %cst_45 = arith.constant dense<0.000000e+00> : vector<8xf32>
    %63 = vector.multi_reduction <add>, %62, %cst_45 [0] : vector<256x8xf32> to vector<8xf32>
    %64 = vector.shape_cast %63 : vector<8xf32> to vector<1x8xf32>
    %c0_46 = arith.constant 0 : index
    %c1_47 = arith.constant 1 : index
    %c0_48 = arith.constant 0 : index
    %65 = vector.load %arg7[%c0_46, %c1_47, %c0_48] : memref<1x2x8xf32, #tpu.memory_space<vmem>>, vector<1x1x8xf32>
    %66 = vector.shape_cast %65 : vector<1x1x8xf32> to vector<1x8xf32>
    %67 = vector.shape_cast %64 : vector<1x8xf32> to vector<1x1x8xf32>
    tpu.vector_store %arg7[%c0_46, %c1_47, %c0_48], %67 {strides = array<i32>} : memref<1x2x8xf32, #tpu.memory_space<vmem>>, vector<1x1x8xf32>,
    return
  }
  func.func @transform_0(%arg0: i32) -> (i32, i32, i32, i32) {
    %c0_i32 = arith.constant 0 : i32
    %c0_i32_0 = arith.constant 0 : i32
    %c0_i32_1 = arith.constant 0 : i32
    %c0_i32_2 = arith.constant 0 : i32
    return %arg0, %c0_i32, %c0_i32_0, %c0_i32_1 : i32, i32, i32, i32
  }
  func.func @transform_1(%arg0: i32) -> (i32, i32) {
    %c0_i32 = arith.constant 0 : i32
    %c0_i32_0 = arith.constant 0 : i32
    %c0_i32_1 = arith.constant 0 : i32
    return %c0_i32, %c0_i32_0 : i32, i32
  }
  func.func @transform_2(%arg0: i32) -> (i32, i32) {
    %c0_i32 = arith.constant 0 : i32
    %c0_i32_0 = arith.constant 0 : i32
    %c0_i32_1 = arith.constant 0 : i32
    return %c0_i32, %c0_i32_0 : i32, i32
  }
  func.func @transform_3(%arg0: i32) -> (i32, i32, i32) {
    %c0_i32 = arith.constant 0 : i32
    %c0_i32_0 = arith.constant 0 : i32
    %c0_i32_1 = arith.constant 0 : i32
    %c0_i32_2 = arith.constant 0 : i32
    return %c0_i32, %c0_i32_0, %c0_i32_1 : i32, i32, i32
  }
  func.func @transform_4(%arg0: i32) -> (i32, i32) {
    %c0_i32 = arith.constant 0 : i32
    %c0_i32_0 = arith.constant 0 : i32
    %c0_i32_1 = arith.constant 0 : i32
    return %c0_i32, %c0_i32_0 : i32, i32
  }
  func.func @transform_5(%arg0: i32) -> (i32, i32, i32, i32) {
    %c0_i32 = arith.constant 0 : i32
    %c0_i32_0 = arith.constant 0 : i32
    %c0_i32_1 = arith.constant 0 : i32
    %c0_i32_2 = arith.constant 0 : i32
    return %arg0, %c0_i32, %c0_i32_0, %c0_i32_1 : i32, i32, i32, i32
  }
  func.func @transform_6(%arg0: i32) -> (i32, i32, i32) {
    %c0_i32 = arith.constant 0 : i32
    %c0_i32_0 = arith.constant 0 : i32
    %c0_i32_1 = arith.constant 0 : i32
    return %arg0, %c0_i32, %c0_i32_0 : i32, i32, i32
  }
}

module attributes {stable_mosaic.version = 11 : i64} {
  func.func @_stage2_kernel(%arg0: i32, %arg1: memref<1x16x16x8xf32, #tpu.memory_space<vmem>>, %arg2: memref<1x16x16x4xf32, #tpu.memory_space<vmem>>, %arg3: memref<1x8xf32, #tpu.memory_space<vmem>>, %arg4: memref<1x8xf32, #tpu.memory_space<vmem>>, %arg5: memref<3x24x8xf32, #tpu.memory_space<vmem>>, %arg6: memref<4x8xf32, #tpu.memory_space<vmem>>, %arg7: memref<1x8xf32, #tpu.memory_space<vmem>>, %arg8: memref<1x16x16x8xf32, #tpu.memory_space<vmem>>, %arg9: memref<256x8xf32, #tpu.memory_space<vmem>>) attributes {dimension_semantics = [#tpu.dimension_semantics<parallel>], iteration_bounds = array<i64: 2>, scalar_prefetch = 0 : i64, scratch_operands = 1 : i64, tpu.core_type = #tpu.core_type<tc>, window_params = [{transform_indices = @transform_0, window_bounds = array<i64: 1, 16, 16, 8>}, {transform_indices = @transform_1, window_bounds = array<i64: 1, 16, 16, 4>}, {pipeline_mode = #tpu.pipeline_mode<synchronous>, transform_indices = @transform_2, window_bounds = array<i64: 1, 8>}, {pipeline_mode = #tpu.pipeline_mode<synchronous>, transform_indices = @transform_3, window_bounds = array<i64: 1, 8>}, {pipeline_mode = #tpu.pipeline_mode<synchronous>, transform_indices = @transform_4, window_bounds = array<i64: 3, 24, 8>}, {pipeline_mode = #tpu.pipeline_mode<synchronous>, transform_indices = @transform_5, window_bounds = array<i64: 4, 8>}, {pipeline_mode = #tpu.pipeline_mode<synchronous>, transform_indices = @transform_6, window_bounds = array<i64: 1, 8>}, {transform_indices = @transform_7, window_bounds = array<i64: 1, 16, 16, 8>}]} {
    %c0 = arith.constant 0 : index
    %c0_0 = arith.constant 0 : index
    %c0_1 = arith.constant 0 : index
    %c0_2 = arith.constant 0 : index
    %0 = vector.load %arg1[%c0, %c0_0, %c0_1, %c0_2] : memref<1x16x16x8xf32, #tpu.memory_space<vmem>>, vector<1x16x16x8xf32>
    %1 = vector.shape_cast %0 : vector<1x16x16x8xf32> to vector<16x16x8xf32>
    %c0_3 = arith.constant 0 : index
    %c0_4 = arith.constant 0 : index
    %2 = vector.load %arg3[%c0_3, %c0_4] : memref<1x8xf32, #tpu.memory_space<vmem>>, vector<1x8xf32>
    %3 = vector.shape_cast %2 : vector<1x8xf32> to vector<8xf32>
    %4 = vector.shape_cast %3 : vector<8xf32> to vector<1x1x8xf32>
    %5 = vector.broadcast %4 : vector<1x1x8xf32> to vector<16x16x8xf32>
    %6 = arith.mulf %1, %5 : vector<16x16x8xf32>
    %c0_5 = arith.constant 0 : index
    %c0_6 = arith.constant 0 : index
    %7 = vector.load %arg4[%c0_5, %c0_6] : memref<1x8xf32, #tpu.memory_space<vmem>>, vector<1x8xf32>
    %8 = vector.shape_cast %7 : vector<1x8xf32> to vector<8xf32>
    %9 = vector.shape_cast %8 : vector<8xf32> to vector<1x1x8xf32>
    %10 = vector.broadcast %9 : vector<1x1x8xf32> to vector<16x16x8xf32>
    %11 = arith.addf %6, %10 : vector<16x16x8xf32>
    %cst = arith.constant 0.000000e+00 : f32
    %12 = vector.broadcast %cst : f32 to vector<16x16x8xf32>
    %13 = arith.maximumf %11, %12 : vector<16x16x8xf32>
    %c0_7 = arith.constant 0 : index
    %c0_8 = arith.constant 0 : index
    %14 = vector.load %arg7[%c0_7, %c0_8] : memref<1x8xf32, #tpu.memory_space<vmem>>, vector<1x8xf32>
    %15 = vector.shape_cast %14 : vector<1x8xf32> to vector<8xf32>
    %16 = vector.shape_cast %15 : vector<8xf32> to vector<1x8xf32>
    %17 = vector.broadcast %16 : vector<1x8xf32> to vector<256x8xf32>
    %c0_9 = arith.constant 0 : index
    %c0_10 = arith.constant 0 : index
    %c0_11 = arith.constant 0 : index
    %c0_12 = arith.constant 0 : index
    %18 = vector.load %arg2[%c0_9, %c0_10, %c0_11, %c0_12] : memref<1x16x16x4xf32, #tpu.memory_space<vmem>>, vector<1x16x16x4xf32>
    %19 = vector.shape_cast %18 : vector<1x16x16x4xf32> to vector<16x16x4xf32>
    %20 = vector.shape_cast %19 : vector<16x16x4xf32> to vector<256x4xf32>
    %c0_13 = arith.constant 0 : index
    %c0_14 = arith.constant 0 : index
    %21 = vector.load %arg6[%c0_13, %c0_14] : memref<4x8xf32, #tpu.memory_space<vmem>>, vector<4x8xf32>
    %cst_15 = arith.constant dense<0.000000e+00> : vector<256x8xf32>
    %22 = tpu.matmul %20, %21, %cst_15 {dimension_numbers = #tpu.dot_dimension_numbers<[1], [0], [0], [1], [0, 0, 1, 1], [], []>} : vector<256x4xf32>, vector<4x8xf32>, vector<256x8xf32> -> vector<256x8xf32>
    %23 = arith.addf %17, %22 : vector<256x8xf32>
    %c0_16 = arith.constant 0 : index
    %c0_17 = arith.constant 0 : index
    %24 = vector.load %arg9[%c0_16, %c0_17] : memref<256x8xf32, #tpu.memory_space<vmem>>, vector<256x8xf32>
    tpu.vector_store %arg9[%c0_16, %c0_17], %23 {strides = array<i32>} : memref<256x8xf32, #tpu.memory_space<vmem>>, vector<256x8xf32>,
    %25 = tpu.iota {dimensions = array<i32: 1>} : vector<16x16x8xi32>
    %c0_i32 = arith.constant 0 : i32
    %26 = vector.broadcast %c0_i32 : i32 to vector<16x16x8xi32>
    %27 = arith.cmpi eq, %25, %26 : vector<16x16x8xi32>
    %c1_i32 = arith.constant 1 : i32
    %28 = tpu.dynamic_rotate %13 by %c1_i32 dim 1 : vector<16x16x8xf32>, i32 -> vector<16x16x8xf32>
    %cst_18 = arith.constant 0.000000e+00 : f32
    %29 = vector.broadcast %cst_18 : f32 to vector<16x16x8xf32>
    %30 = arith.select %27, %29, %28 : vector<16x16x8xi1>, vector<16x16x8xf32>
    %c15_i32 = arith.constant 15 : i32
    %31 = vector.broadcast %c15_i32 : i32 to vector<16x16x8xi32>
    %32 = arith.cmpi eq, %25, %31 : vector<16x16x8xi32>
    %c15_i32_19 = arith.constant 15 : i32
    %33 = tpu.dynamic_rotate %13 by %c15_i32_19 dim 1 : vector<16x16x8xf32>, i32 -> vector<16x16x8xf32>
    %cst_20 = arith.constant 0.000000e+00 : f32
    %34 = vector.broadcast %cst_20 : f32 to vector<16x16x8xf32>
    %35 = arith.select %32, %34, %33 : vector<16x16x8xi1>, vector<16x16x8xf32>
    %36 = tpu.concatenate %30, %13, %35 in 2 : vector<16x16x8xf32>, vector<16x16x8xf32>, vector<16x16x8xf32> -> vector<16x16x24xf32>
    %37 = vector.shape_cast %36 : vector<16x16x24xf32> to vector<256x24xf32>
    %c0_21 = arith.constant 0 : index
    %c0_22 = arith.constant 0 : index
    %c0_23 = arith.constant 0 : index
    %38 = vector.load %arg5[%c0_21, %c0_22, %c0_23] : memref<3x24x8xf32, #tpu.memory_space<vmem>>, vector<1x24x8xf32>
    %39 = vector.shape_cast %38 : vector<1x24x8xf32> to vector<24x8xf32>
    %cst_24 = arith.constant dense<0.000000e+00> : vector<256x8xf32>
    %40 = tpu.matmul %37, %39, %cst_24 {dimension_numbers = #tpu.dot_dimension_numbers<[1], [0], [0], [1], [0, 0, 1, 1], [], []>} : vector<256x24xf32>, vector<24x8xf32>, vector<256x8xf32> -> vector<256x8xf32>
    %c16 = arith.constant 16 : index
    %c0_25 = arith.constant 0 : index
    %41 = vector.load %arg9[%c16, %c0_25] : memref<256x8xf32, #tpu.memory_space<vmem>>, vector<240x8xf32>
    %42 = vector.extract_strided_slice %40 {offsets = [0, 0], sizes = [240, 8], strides = [1, 1]} : vector<256x8xf32> to vector<240x8xf32>
    %43 = arith.addf %41, %42 : vector<240x8xf32>
    %c16_26 = arith.constant 16 : index
    %c0_27 = arith.constant 0 : index
    %44 = vector.load %arg9[%c16_26, %c0_27] : memref<256x8xf32, #tpu.memory_space<vmem>>, vector<240x8xf32>
    tpu.vector_store %arg9[%c16_26, %c0_27], %43 {strides = array<i32>} : memref<256x8xf32, #tpu.memory_space<vmem>>, vector<240x8xf32>,
    %c1 = arith.constant 1 : index
    %c0_28 = arith.constant 0 : index
    %c0_29 = arith.constant 0 : index
    %45 = vector.load %arg5[%c1, %c0_28, %c0_29] : memref<3x24x8xf32, #tpu.memory_space<vmem>>, vector<1x24x8xf32>
    %46 = vector.shape_cast %45 : vector<1x24x8xf32> to vector<24x8xf32>
    %cst_30 = arith.constant dense<0.000000e+00> : vector<256x8xf32>
    %47 = tpu.matmul %37, %46, %cst_30 {dimension_numbers = #tpu.dot_dimension_numbers<[1], [0], [0], [1], [0, 0, 1, 1], [], []>} : vector<256x24xf32>, vector<24x8xf32>, vector<256x8xf32> -> vector<256x8xf32>
    %c0_31 = arith.constant 0 : index
    %c0_32 = arith.constant 0 : index
    %48 = vector.load %arg9[%c0_31, %c0_32] : memref<256x8xf32, #tpu.memory_space<vmem>>, vector<256x8xf32>
    %49 = arith.addf %48, %47 : vector<256x8xf32>
    %c0_33 = arith.constant 0 : index
    %c0_34 = arith.constant 0 : index
    %50 = vector.load %arg9[%c0_33, %c0_34] : memref<256x8xf32, #tpu.memory_space<vmem>>, vector<256x8xf32>
    tpu.vector_store %arg9[%c0_33, %c0_34], %49 {strides = array<i32>} : memref<256x8xf32, #tpu.memory_space<vmem>>, vector<256x8xf32>,
    %c2 = arith.constant 2 : index
    %c0_35 = arith.constant 0 : index
    %c0_36 = arith.constant 0 : index
    %51 = vector.load %arg5[%c2, %c0_35, %c0_36] : memref<3x24x8xf32, #tpu.memory_space<vmem>>, vector<1x24x8xf32>
    %52 = vector.shape_cast %51 : vector<1x24x8xf32> to vector<24x8xf32>
    %cst_37 = arith.constant dense<0.000000e+00> : vector<256x8xf32>
    %53 = tpu.matmul %37, %52, %cst_37 {dimension_numbers = #tpu.dot_dimension_numbers<[1], [0], [0], [1], [0, 0, 1, 1], [], []>} : vector<256x24xf32>, vector<24x8xf32>, vector<256x8xf32> -> vector<256x8xf32>
    %c0_38 = arith.constant 0 : index
    %c0_39 = arith.constant 0 : index
    %54 = vector.load %arg9[%c0_38, %c0_39] : memref<256x8xf32, #tpu.memory_space<vmem>>, vector<240x8xf32>
    %55 = vector.extract_strided_slice %53 {offsets = [16, 0], sizes = [240, 8], strides = [1, 1]} : vector<256x8xf32> to vector<240x8xf32>
    %56 = arith.addf %54, %55 : vector<240x8xf32>
    %c0_40 = arith.constant 0 : index
    %c0_41 = arith.constant 0 : index
    %57 = vector.load %arg9[%c0_40, %c0_41] : memref<256x8xf32, #tpu.memory_space<vmem>>, vector<240x8xf32>
    tpu.vector_store %arg9[%c0_40, %c0_41], %56 {strides = array<i32>} : memref<256x8xf32, #tpu.memory_space<vmem>>, vector<240x8xf32>,
    %c0_42 = arith.constant 0 : index
    %c0_43 = arith.constant 0 : index
    %58 = vector.load %arg9[%c0_42, %c0_43] : memref<256x8xf32, #tpu.memory_space<vmem>>, vector<256x8xf32>
    %59 = vector.shape_cast %58 : vector<256x8xf32> to vector<16x16x8xf32>
    %c0_44 = arith.constant 0 : index
    %c0_45 = arith.constant 0 : index
    %c0_46 = arith.constant 0 : index
    %c0_47 = arith.constant 0 : index
    %60 = vector.load %arg8[%c0_44, %c0_45, %c0_46, %c0_47] : memref<1x16x16x8xf32, #tpu.memory_space<vmem>>, vector<1x16x16x8xf32>
    %61 = vector.shape_cast %60 : vector<1x16x16x8xf32> to vector<16x16x8xf32>
    %62 = vector.shape_cast %59 : vector<16x16x8xf32> to vector<1x16x16x8xf32>
    tpu.vector_store %arg8[%c0_44, %c0_45, %c0_46, %c0_47], %62 {strides = array<i32>} : memref<1x16x16x8xf32, #tpu.memory_space<vmem>>, vector<1x16x16x8xf32>,
    return
  }
  func.func @transform_0(%arg0: i32) -> (i32, i32, i32, i32) {
    %c0_i32 = arith.constant 0 : i32
    %c0_i32_0 = arith.constant 0 : i32
    %c0_i32_1 = arith.constant 0 : i32
    %c0_i32_2 = arith.constant 0 : i32
    return %arg0, %c0_i32, %c0_i32_0, %c0_i32_1 : i32, i32, i32, i32
  }
  func.func @transform_1(%arg0: i32) -> (i32, i32, i32, i32) {
    %c0_i32 = arith.constant 0 : i32
    %c0_i32_0 = arith.constant 0 : i32
    %c0_i32_1 = arith.constant 0 : i32
    %c0_i32_2 = arith.constant 0 : i32
    return %arg0, %c0_i32, %c0_i32_0, %c0_i32_1 : i32, i32, i32, i32
  }
  func.func @transform_2(%arg0: i32) -> (i32, i32) {
    %c0_i32 = arith.constant 0 : i32
    %c0_i32_0 = arith.constant 0 : i32
    %c0_i32_1 = arith.constant 0 : i32
    return %c0_i32, %c0_i32_0 : i32, i32
  }
  func.func @transform_3(%arg0: i32) -> (i32, i32) {
    %c0_i32 = arith.constant 0 : i32
    %c0_i32_0 = arith.constant 0 : i32
    %c0_i32_1 = arith.constant 0 : i32
    return %c0_i32, %c0_i32_0 : i32, i32
  }
  func.func @transform_4(%arg0: i32) -> (i32, i32, i32) {
    %c0_i32 = arith.constant 0 : i32
    %c0_i32_0 = arith.constant 0 : i32
    %c0_i32_1 = arith.constant 0 : i32
    %c0_i32_2 = arith.constant 0 : i32
    return %c0_i32, %c0_i32_0, %c0_i32_1 : i32, i32, i32
  }
  func.func @transform_5(%arg0: i32) -> (i32, i32) {
    %c0_i32 = arith.constant 0 : i32
    %c0_i32_0 = arith.constant 0 : i32
    %c0_i32_1 = arith.constant 0 : i32
    return %c0_i32, %c0_i32_0 : i32, i32
  }
  func.func @transform_6(%arg0: i32) -> (i32, i32) {
    %c0_i32 = arith.constant 0 : i32
    %c0_i32_0 = arith.constant 0 : i32
    %c0_i32_1 = arith.constant 0 : i32
    return %c0_i32, %c0_i32_0 : i32, i32
  }
  func.func @transform_7(%arg0: i32) -> (i32, i32, i32, i32) {
    %c0_i32 = arith.constant 0 : i32
    %c0_i32_0 = arith.constant 0 : i32
    %c0_i32_1 = arith.constant 0 : i32
    %c0_i32_2 = arith.constant 0 : i32
    return %arg0, %c0_i32, %c0_i32_0, %c0_i32_1 : i32, i32, i32, i32
  }
}

</mosaic_0001>

<llo_original>
// kernel: resblock_generator.2
$region0: #{resblock_generator.2}
  #allocation0 [shape = 'u32[]', space=smem, size = 0x4, offset = 0x4, fixed_abs, tag = 'smem constant byte address 0x4 - core index']
  #allocation1 [shape = 'u32[144,128]{1,0:T(1,128)}', space=vmem, size = 0x12000, scoped, tag = 'internal scratch']
  #allocation2 [shape = 'f32[256,8]{1,0:T(8,128)}', space=vmem, size = 0x20000, scoped, tag = 'scratch operand']
  %s0 = inlined_call_operand.vmem [shape: f32[2,16,16,4], index: 0, kind: input, shape index: {}]
  %s1 = inlined_call_operand.vmem [shape: f32[1,4], index: 1, kind: input, shape index: {}]
  %s2 = inlined_call_operand.vmem [shape: f32[1,4], index: 2, kind: input, shape index: {}]
  %s3 = inlined_call_operand.vmem [shape: f32[3,12,8], index: 3, kind: input, shape index: {}]
  %s4 = inlined_call_operand.vmem [shape: f32[1,8], index: 4, kind: input, shape index: {}]
  %s5 = inlined_call_operand.vmem [shape: f32[2,16,16,8], index: 5, kind: output, shape index: {0}]
  %s6 = inlined_call_operand.vmem [shape: f32[2,2,8], index: 6, kind: output, shape index: {1}]
  %7 = xla_tuple %s5, %s6
  %s8 = sld [smem:[#allocation0]]
  $region61: #{resblock_generator.2} parent=0
    _
  %s10 = ssub.s32 1, %s8
  %s11 = scalar_select 0, %s10, %s8
  loop: start=0, step=1, limit=4
  $region2: #{resblock_generator.2} parent=0 // loop_pre_header
    _
  $region3: #{resblock_generator.2} parent=0 // loop_header
    %s13 = sphi 0, %s17
    %p14 = scmp.ge.s32.totalorder %s13, 4
    %s23 = sphi 0, %s25
    %s26 = sphi 0, %s23
    %s27 = sphi 0, %s26
    %s43 = sphi 0, %s27
    %s47 = sphi 0, %s47
    %s49 = sphi 0, %s47
    %s50 = sphi 0, %s49
    %s64 = sphi 0, %s50
    %s68 = sphi 0, %s68
    %s70 = sphi 0, %s68
    %s71 = sphi 0, %s70
    %s85 = sphi 0, %s71
    %s89 = sphi 0, %s89
    %s91 = sphi 0, %s89
    %s92 = sphi 0, %s91
    %s106 = sphi 0, %s92
    %s110 = sphi 0, %s110
    %s112 = sphi 0, %s110
    %s113 = sphi 0, %s112
    %s127 = sphi 0, %s113
    %s133 = sphi 0, %s135
    %s136 = sphi 0, %s133
    %s137 = sphi 0, %s136
    %s153 = sphi 0, %s137
    %s159 = sphi 0, %s161
    %s162 = sphi 0, %s159
    %s163 = sphi 0, %s162
    %s179 = sphi 0, %s163
  $region4: #{resblock_generator.2} parent=0 // loop_header_branch
    %16 = sbr.rel (%p14) target = $region8
  $region5: #{resblock_generator.2} parent=0 // loop_body
    %s18 = ssub.s32 %s13, 1
    %s19 = ssub.s32 %s13, 2
    %s20 = sadd.s32 %s13, 1
    %s21 = ssub.s32 %s13, %s20
    %p22 = scmp.eq.s32.totalorder %s21, 0
    %s24 = sadd.s32 %s23, 1
    %s25 = scalar_select %p22, %s23, %s24
    %p28 = pneg %p22
    %p29 = scmp.eq.s32.totalorder %s13, 1
    %p30 = por %p28, %p29
    %p31 = scmp.ne.s32.totalorder %s23, %s26
    %p32 = scmp.eq.s32.totalorder %s13, 0
    %p33 = por %p31, %p32
    %p34 = scmp.ne.s32.totalorder %s23, %s26
    %p35 = scmp.eq.s32.totalorder %s18, 1
    %p36 = por %p34, %p35
    %p37 = scmp.ne.s32.totalorder %s26, %s27
    %p38 = scmp.eq.s32.totalorder %s18, 0
    %p39 = por %p37, %p38
    %p40 = scmp.ne.s32.totalorder %s26, %s27
    %p41 = scmp.eq.s32.totalorder %s19, 1
    %p42 = por %p40, %p41
    %p44 = scmp.ne.s32.totalorder %s27, %s43
    %p45 = scmp.eq.s32.totalorder %s19, 0
    %p46 = por %p44, %p45
    %s48 = sadd.s32 %s47, 1
    %p51 = scmp.eq.s32.totalorder %s13, 1
    %p52 = scmp.ne.s32.totalorder %s47, %s49
    %p53 = scmp.eq.s32.totalorder %s13, 0
    %p54 = por %p52, %p53
    %p55 = scmp.ne.s32.totalorder %s47, %s49
    %p56 = scmp.eq.s32.totalorder %s18, 1
    %p57 = por %p55, %p56
    %p58 = scmp.ne.s32.totalorder %s49, %s50
    %p59 = scmp.eq.s32.totalorder %s18, 0
    %p60 = por %p58, %p59
    %p61 = scmp.ne.s32.totalorder %s49, %s50
    %p62 = scmp.eq.s32.totalorder %s19, 1
    %p63 = por %p61, %p62
    %p65 = scmp.ne.s32.totalorder %s50, %s64
    %p66 = scmp.eq.s32.totalorder %s19, 0
    %p67 = por %p65, %p66
    %s69 = sadd.s32 %s68, 1
    %p72 = scmp.eq.s32.totalorder %s13, 1
    %p73 = scmp.ne.s32.totalorder %s68, %s70
    %p74 = scmp.eq.s32.totalorder %s13, 0
    %p75 = por %p73, %p74
    %p76 = scmp.ne.s32.totalorder %s68, %s70
    %p77 = scmp.eq.s32.totalorder %s18, 1
    %p78 = por %p76, %p77
    %p79 = scmp.ne.s32.totalorder %s70, %s71
    %p80 = scmp.eq.s32.totalorder %s18, 0
    %p81 = por %p79, %p80
    %p82 = scmp.ne.s32.totalorder %s70, %s71
    %p83 = scmp.eq.s32.totalorder %s19, 1
    %p84 = por %p82, %p83
    %p86 = scmp.ne.s32.totalorder %s71, %s85
    %p87 = scmp.eq.s32.totalorder %s19, 0
    %p88 = por %p86, %p87
    %s90 = sadd.s32 %s89, 1
    %p93 = scmp.eq.s32.totalorder %s13, 1
    %p94 = scmp.ne.s32.totalorder %s89, %s91
    %p95 = scmp.eq.s32.totalorder %s13, 0
    %p96 = por %p94, %p95
    %p97 = scmp.ne.s32.totalorder %s89, %s91
    %p98 = scmp.eq.s32.totalorder %s18, 1
    %p99 = por %p97, %p98
    %p100 = scmp.ne.s32.totalorder %s91, %s92
    %p101 = scmp.eq.s32.totalorder %s18, 0
    %p102 = por %p100, %p101
    %p103 = scmp.ne.s32.totalorder %s91, %s92
    %p104 = scmp.eq.s32.totalorder %s19, 1
    %p105 = por %p103, %p104
    %p107 = scmp.ne.s32.totalorder %s92, %s106
    %p108 = scmp.eq.s32.totalorder %s19, 0
    %p109 = por %p107, %p108
    %s111 = sadd.s32 %s110, 1
    %p114 = scmp.eq.s32.totalorder %s13, 1
    %p115 = scmp.ne.s32.totalorder %s110, %s112
    %p116 = scmp.eq.s32.totalorder %s13, 0
    %p117 = por %p115, %p116
    %p118 = scmp.ne.s32.totalorder %s110, %s112
    %p119 = scmp.eq.s32.totalorder %s18, 1
    %p120 = por %p118, %p119
    %p121 = scmp.ne.s32.totalorder %s112, %s113
    %p122 = scmp.eq.s32.totalorder %s18, 0
    %p123 = por %p121, %p122
    %p124 = scmp.ne.s32.totalorder %s112, %s113
    %p125 = scmp.eq.s32.totalorder %s19, 1
    %p126 = por %p124, %p125
    %p128 = scmp.ne.s32.totalorder %s113, %s127
    %p129 = scmp.eq.s32.totalorder %s19, 0
    %p130 = por %p128, %p129
    %s131 = ssub.s32 %s13, %s20
    %p132 = scmp.eq.s32.totalorder %s131, 0
    %s134 = sadd.s32 %s133, 1
    %s135 = scalar_select %p132, %s133, %s134
    %p138 = pneg %p132
    %p139 = scmp.eq.s32.totalorder %s13, 1
    %p140 = por %p138, %p139
    %p141 = scmp.ne.s32.totalorder %s133, %s136
    %p142 = scmp.eq.s32.totalorder %s13, 0
    %p143 = por %p141, %p142
    %p144 = scmp.ne.s32.totalorder %s133, %s136
    %p145 = scmp.eq.s32.totalorder %s18, 1
    %p146 = por %p144, %p145
    %p147 = scmp.ne.s32.totalorder %s136, %s137
    %p148 = scmp.eq.s32.totalorder %s18, 0
    %p149 = por %p147, %p148
    %p150 = scmp.ne.s32.totalorder %s136, %s137
    %p151 = scmp.eq.s32.totalorder %s19, 1
    %p152 = por %p150, %p151
    %p154 = scmp.ne.s32.totalorder %s137, %s153
    %p155 = scmp.eq.s32.totalorder %s19, 0
    %p156 = por %p154, %p155
    %s157 = ssub.s32 %s13, %s20
    %p158 = scmp.eq.s32.totalorder %s157, 0
    %s160 = sadd.s32 %s159, 1
    %s161 = scalar_select %p158, %s159, %s160
    %p164 = pneg %p158
    %p165 = scmp.eq.s32.totalorder %s13, 1
    %p166 = por %p164, %p165
    %p167 = scmp.ne.s32.totalorder %s159, %s162
    %p168 = scmp.eq.s32.totalorder %s13, 0
    %p169 = por %p167, %p168
    %p170 = scmp.ne.s32.totalorder %s159, %s162
    %p171 = scmp.eq.s32.totalorder %s18, 1
    %p172 = por %p170, %p171
    %p173 = scmp.ne.s32.totalorder %s162, %s163
    %p174 = scmp.eq.s32.totalorder %s18, 0
    %p175 = por %p173, %p174
    %p176 = scmp.ne.s32.totalorder %s162, %s163
    %p177 = scmp.eq.s32.totalorder %s19, 1
    %p178 = por %p176, %p177
    %p180 = scmp.ne.s32.totalorder %s163, %s179
    %p181 = scmp.eq.s32.totalorder %s19, 0
    %p182 = por %p180, %p181
    %p183 = scmp.le.s32.totalorder 1, %s13
    %p184 = scmp.lt.s32.totalorder %s13, 3
    %p185 = pnand %p183, %p184
    %p186 = pneg %p185
    // Predicated region
    $region9: #{resblock_generator.2} parent=5 // pred_check
      _
    $region10: #{resblock_generator.2} parent=5 // pred_check_branch
      %188 = sbr.rel (%p185) target = $region12
    $region11: #{resblock_generator.2} parent=5 // pred_region
      %s189 = ssub.s32 %s13, 1
      // Predicated region
      $region13: #{resblock_generator.2} parent=11 // pred_check
        %p190 = pneg %p60
      $region14: #{resblock_generator.2} parent=11 // pred_check_branch
        %192 = sbr.rel (%p190) target = $region16
      $region15: #{resblock_generator.2} parent=11 // pred_region
        _
      $region16: #{resblock_generator.2} parent=11 // pred_fallthru
        _
      // Predicated region
      $region17: #{resblock_generator.2} parent=11 // pred_check
        %p193 = pneg %p81
      $region18: #{resblock_generator.2} parent=11 // pred_check_branch
        %195 = sbr.rel (%p193) target = $region20
      $region19: #{resblock_generator.2} parent=11 // pred_region
        _
      $region20: #{resblock_generator.2} parent=11 // pred_fallthru
        _
      // Predicated region
      $region21: #{resblock_generator.2} parent=11 // pred_check
        %p196 = pneg %p102
      $region22: #{resblock_generator.2} parent=11 // pred_check_branch
        %198 = sbr.rel (%p196) target = $region24
      $region23: #{resblock_generator.2} parent=11 // pred_region
        _
      $region24: #{resblock_generator.2} parent=11 // pred_fallthru
        _
      // Predicated region
      $region25: #{resblock_generator.2} parent=11 // pred_check
        %p199 = pneg %p123
      $region26: #{resblock_generator.2} parent=11 // pred_check_branch
        %201 = sbr.rel (%p199) target = $region28
      $region27: #{resblock_generator.2} parent=11 // pred_region
        _
      $region28: #{resblock_generator.2} parent=11 // pred_fallthru
        _
    $region12: #{resblock_generator.2} parent=5 // pred_fallthru
      _
    %p202 = scmp.lt.s32.totalorder %s13, 2
    // Predicated region
    $region29: #{resblock_generator.2} parent=5 // pred_check
      %p203 = pneg %p202
    $region30: #{resblock_generator.2} parent=5 // pred_check_branch
      %205 = sbr.rel (%p203) target = $region32
    $region31: #{resblock_generator.2} parent=5 // pred_region
      // Predicated region
      $region33: #{resblock_generator.2} parent=31 // pred_check
        %p206 = pneg %p33
      $region34: #{resblock_generator.2} parent=31 // pred_check_branch
        %208 = sbr.rel (%p206) target = $region36
      $region35: #{resblock_generator.2} parent=31 // pred_region
        %p209 = scmp.lt.s32.totalorder %s13, 1
        %s210 = scalar_select %p209, %s13, 1
        %s211 = smul.addr %s210, 32
        %s212 = smul.addr %s211, 8
        %s213 = scalar_lea.vmem %s0, %s212
      $region36: #{resblock_generator.2} parent=31 // pred_fallthru
        _
    $region32: #{resblock_generator.2} parent=5 // pred_fallthru
      _
    %p214 = scmp.le.s32.totalorder 1, %s13
    %p215 = scmp.lt.s32.totalorder %s13, 3
    %p216 = pnand %p214, %p215
    %p217 = pneg %p216
    // Predicated region
    $region37: #{resblock_generator.2} parent=5 // pred_check
      _
    $region38: #{resblock_generator.2} parent=5 // pred_check_branch
      %219 = sbr.rel (%p216) target = $region40
    $region39: #{resblock_generator.2} parent=5 // pred_region
      %s220 = ssub.s32 %s13, 1
      %p221 = scmp.lt.s32.totalorder %s18, 1
      %s222 = scalar_select %p221, %s18, 1
      %s223 = smul.addr %s222, 32
      %s224 = smul.addr %s223, 8
      %s225 = scalar_lea.vmem %s0, %s224
      %p226 = pneg %p39
      %p227 = pneg %p36
      %p228 = pneg %p60
      %p229 = pneg %p57
      %p230 = pneg %p81
      %p231 = pneg %p78
      %p232 = pneg %p102
      %p233 = pneg %p99
      %p234 = pneg %p123
      %p235 = pneg %p120
      %p236 = pneg %p149
      %p237 = pneg %p146
      %p238 = scmp.lt.s32.totalorder %s18, 1
      %s239 = scalar_select %p238, %s18, 1
      %s240 = smul.addr %s239, 32
      %s241 = smul.addr %s240, 8
      %s242 = scalar_lea.vmem %s5, %s241
      %p243 = pneg %p175
      %p244 = pneg %p172
      %p245 = scmp.lt.s32.totalorder %s18, 1
      %s246 = scalar_select %p245, %s18, 1
      %s247 = smul.addr %s246, 2
      %s248 = scalar_lea.vmem %s6, %s247
      %p249 = scmp.lt.s32.totalorder %s18, 1
      %s250 = scalar_select %p249, %s18, 1
      %s251 = smul.addr %s250, 32
      %s252 = smul.addr %s251, 8
      %s253 = scalar_lea.vmem %s0, %s252
      %p254 = scmp.lt.s32.totalorder %s18, 1
      %s255 = scalar_select %p254, %s18, 1
      %s256 = smul.addr %s255, 32
      %s257 = smul.addr %s256, 8
      %s258 = scalar_lea.vmem %s5, %s257
      %p259 = scmp.lt.s32.totalorder %s18, 1
      %s260 = scalar_select %p259, %s18, 1
      %s261 = smul.addr %s260, 2
      %s262 = scalar_lea.vmem %s6, %s261
      %v263 = vld [vmem:[%s253] sm:$0xff]
      %v264 = vld [vmem:[%s253 + $0x8] sm:$0xff]
      %v265 = vld [vmem:[%s253 + $0x10] sm:$0xff]
      %v266 = vld [vmem:[%s253 + $0x18] sm:$0xff]
      %v267 = vld [vmem:[%s253 + $0x20] sm:$0xff]
      %v268 = vld [vmem:[%s253 + $0x28] sm:$0xff]
      %v269 = vld [vmem:[%s253 + $0x30] sm:$0xff]
      %v270 = vld [vmem:[%s253 + $0x38] sm:$0xff]
      %v271 = vld [vmem:[%s253 + $0x40] sm:$0xff]
      %v272 = vld [vmem:[%s253 + $0x48] sm:$0xff]
      %v273 = vld [vmem:[%s253 + $0x50] sm:$0xff]
      %v274 = vld [vmem:[%s253 + $0x58] sm:$0xff]
      %v275 = vld [vmem:[%s253 + $0x60] sm:$0xff]
      %v276 = vld [vmem:[%s253 + $0x68] sm:$0xff]
      %v277 = vld [vmem:[%s253 + $0x70] sm:$0xff]
      %v278 = vld [vmem:[%s253 + $0x78] sm:$0xff]
      %v279 = vld [vmem:[%s253 + $0x80] sm:$0xff]
      %v280 = vld [vmem:[%s253 + $0x88] sm:$0xff]
      %v281 = vld [vmem:[%s253 + $0x90] sm:$0xff]
      %v282 = vld [vmem:[%s253 + $0x98] sm:$0xff]
      %v283 = vld [vmem:[%s253 + $0xa0] sm:$0xff]
      %v284 = vld [vmem:[%s253 + $0xa8] sm:$0xff]
      %v285 = vld [vmem:[%s253 + $0xb0] sm:$0xff]
      %v286 = vld [vmem:[%s253 + $0xb8] sm:$0xff]
      %v287 = vld [vmem:[%s253 + $0xc0] sm:$0xff]
      %v288 = vld [vmem:[%s253 + $0xc8] sm:$0xff]
      %v289 = vld [vmem:[%s253 + $0xd0] sm:$0xff]
      %v290 = vld [vmem:[%s253 + $0xd8] sm:$0xff]
      %v291 = vld [vmem:[%s253 + $0xe0] sm:$0xff]
      %v292 = vld [vmem:[%s253 + $0xe8] sm:$0xff]
      %v293 = vld [vmem:[%s253 + $0xf0] sm:$0xff]
      %v294 = vld [vmem:[%s253 + $0xf8] sm:$0xff]
      %v295 = vld [vmem:[%s1] sm:$0x1]
      %v297 = vlaneseq
      %v298 = vshrl.u32 %v297, 7
      %v299 = vsub.s32 0, %v298
      %v300 = vrot.slane %v295, %v299
      %v302 = vmul.f32 %v263, %v300
      %v303 = vmul.f32 %v264, %v300
      %v304 = vmul.f32 %v265, %v300
      %v305 = vmul.f32 %v266, %v300
      %v306 = vmul.f32 %v267, %v300
      %v307 = vmul.f32 %v268, %v300
      %v308 = vmul.f32 %v269, %v300
      %v309 = vmul.f32 %v270, %v300
      %v310 = vmul.f32 %v271, %v300
      %v311 = vmul.f32 %v272, %v300
      %v312 = vmul.f32 %v273, %v300
      %v313 = vmul.f32 %v274, %v300
      %v314 = vmul.f32 %v275, %v300
      %v315 = vmul.f32 %v276, %v300
      %v316 = vmul.f32 %v277, %v300
      %v317 = vmul.f32 %v278, %v300
      %v318 = vmul.f32 %v279, %v300
      %v319 = vmul.f32 %v280, %v300
      %v320 = vmul.f32 %v281, %v300
      %v321 = vmul.f32 %v282, %v300
      %v322 = vmul.f32 %v283, %v300
      %v323 = vmul.f32 %v284, %v300
      %v324 = vmul.f32 %v285, %v300
      %v325 = vmul.f32 %v286, %v300
      %v326 = vmul.f32 %v287, %v300
      %v327 = vmul.f32 %v288, %v300
      %v328 = vmul.f32 %v289, %v300
      %v329 = vmul.f32 %v290, %v300
      %v330 = vmul.f32 %v291, %v300
      %v331 = vmul.f32 %v292, %v300
      %v332 = vmul.f32 %v293, %v300
      %v333 = vmul.f32 %v294, %v300
      %v334 = vld [vmem:[%s2] sm:$0x1]
      %v336 = vlaneseq
      %v337 = vshrl.u32 %v336, 7
      %v338 = vsub.s32 0, %v337
      %v339 = vrot.slane %v334, %v338
      %v341 = vadd.f32 %v302, %v339
      %v342 = vadd.f32 %v303, %v339
      %v343 = vadd.f32 %v304, %v339
      %v344 = vadd.f32 %v305, %v339
      %v345 = vadd.f32 %v306, %v339
      %v346 = vadd.f32 %v307, %v339
      %v347 = vadd.f32 %v308, %v339
      %v348 = vadd.f32 %v309, %v339
      %v349 = vadd.f32 %v310, %v339
      %v350 = vadd.f32 %v311, %v339
      %v351 = vadd.f32 %v312, %v339
      %v352 = vadd.f32 %v313, %v339
      %v353 = vadd.f32 %v314, %v339
      %v354 = vadd.f32 %v315, %v339
      %v355 = vadd.f32 %v316, %v339
      %v356 = vadd.f32 %v317, %v339
      %v357 = vadd.f32 %v318, %v339
      %v358 = vadd.f32 %v319, %v339
      %v359 = vadd.f32 %v320, %v339
      %v360 = vadd.f32 %v321, %v339
      %v361 = vadd.f32 %v322, %v339
      %v362 = vadd.f32 %v323, %v339
      %v363 = vadd.f32 %v324, %v339
      %v364 = vadd.f32 %v325, %v339
      %v365 = vadd.f32 %v326, %v339
      %v366 = vadd.f32 %v327, %v339
      %v367 = vadd.f32 %v328, %v339
      %v368 = vadd.f32 %v329, %v339
      %v369 = vadd.f32 %v330, %v339
      %v370 = vadd.f32 %v331, %v339
      %v371 = vadd.f32 %v332, %v339
      %v372 = vadd.f32 %v333, %v339
      %v373 = vmax.f32 %v341, 0.0
      %v374 = vmax.f32 %v342, 0.0
      %v375 = vmax.f32 %v343, 0.0
      %v376 = vmax.f32 %v344, 0.0
      %v377 = vmax.f32 %v345, 0.0
      %v378 = vmax.f32 %v346, 0.0
      %v379 = vmax.f32 %v347, 0.0
      %v380 = vmax.f32 %v348, 0.0
      %v381 = vmax.f32 %v349, 0.0
      %v382 = vmax.f32 %v350, 0.0
      %v383 = vmax.f32 %v351, 0.0
      %v384 = vmax.f32 %v352, 0.0
      %v385 = vmax.f32 %v353, 0.0
      %v386 = vmax.f32 %v354, 0.0
      %v387 = vmax.f32 %v355, 0.0
      %v388 = vmax.f32 %v356, 0.0
      %v389 = vmax.f32 %v357, 0.0
      %v390 = vmax.f32 %v358, 0.0
      %v391 = vmax.f32 %v359, 0.0
      %v392 = vmax.f32 %v360, 0.0
      %v393 = vmax.f32 %v361, 0.0
      %v394 = vmax.f32 %v362, 0.0
      %v395 = vmax.f32 %v363, 0.0
      %v396 = vmax.f32 %v364, 0.0
      %v397 = vmax.f32 %v365, 0.0
      %v398 = vmax.f32 %v366, 0.0
      %v399 = vmax.f32 %v367, 0.0
      %v400 = vmax.f32 %v368, 0.0
      %v401 = vmax.f32 %v369, 0.0
      %v402 = vmax.f32 %v370, 0.0
      %v403 = vmax.f32 %v371, 0.0
      %v404 = vmax.f32 %v372, 0.0
      %v405 = vld [vmem:[%s4] sm:$0x1]
      %v407 = vlaneseq
      %v408 = vshrl.u32 %v407, 7
      %v409 = vsub.s32 0, %v408
      %v410 = vrot.slane %v405, %v409
      %vm412 = vcmask 64512
      %413 = vst.msk [vmem:[#allocation2] sm:$0xff] %vm412, %v410
      %414 = vst.msk [vmem:[#allocation2 + $0x8] sm:$0xff] %vm412, %v410
      %415 = vst.msk [vmem:[#allocation2 + $0x10] sm:$0xff] %vm412, %v410
      %416 = vst.msk [vmem:[#allocation2 + $0x18] sm:$0xff] %vm412, %v410
      %417 = vst.msk [vmem:[#allocation2 + $0x20] sm:$0xff] %vm412, %v410
      %418 = vst.msk [vmem:[#allocation2 + $0x28] sm:$0xff] %vm412, %v410
      %419 = vst.msk [vmem:[#allocation2 + $0x30] sm:$0xff] %vm412, %v410
      %420 = vst.msk [vmem:[#allocation2 + $0x38] sm:$0xff] %vm412, %v410
      %421 = vst.msk [vmem:[#allocation2 + $0x40] sm:$0xff] %vm412, %v410
      %422 = vst.msk [vmem:[#allocation2 + $0x48] sm:$0xff] %vm412, %v410
      %423 = vst.msk [vmem:[#allocation2 + $0x50] sm:$0xff] %vm412, %v410
      %424 = vst.msk [vmem:[#allocation2 + $0x58] sm:$0xff] %vm412, %v410
      %425 = vst.msk [vmem:[#allocation2 + $0x60] sm:$0xff] %vm412, %v410
      %426 = vst.msk [vmem:[#allocation2 + $0x68] sm:$0xff] %vm412, %v410
      %427 = vst.msk [vmem:[#allocation2 + $0x70] sm:$0xff] %vm412, %v410
      %428 = vst.msk [vmem:[#allocation2 + $0x78] sm:$0xff] %vm412, %v410
      %429 = vst.msk [vmem:[#allocation2 + $0x80] sm:$0xff] %vm412, %v410
      %430 = vst.msk [vmem:[#allocation2 + $0x88] sm:$0xff] %vm412, %v410
      %431 = vst.msk [vmem:[#allocation2 + $0x90] sm:$0xff] %vm412, %v410
      %432 = vst.msk [vmem:[#allocation2 + $0x98] sm:$0xff] %vm412, %v410
      %433 = vst.msk [vmem:[#allocation2 + $0xa0] sm:$0xff] %vm412, %v410
      %434 = vst.msk [vmem:[#allocation2 + $0xa8] sm:$0xff] %vm412, %v410
      %435 = vst.msk [vmem:[#allocation2 + $0xb0] sm:$0xff] %vm412, %v410
      %436 = vst.msk [vmem:[#allocation2 + $0xb8] sm:$0xff] %vm412, %v410
      %437 = vst.msk [vmem:[#allocation2 + $0xc0] sm:$0xff] %vm412, %v410
      %438 = vst.msk [vmem:[#allocation2 + $0xc8] sm:$0xff] %vm412, %v410
      %439 = vst.msk [vmem:[#allocation2 + $0xd0] sm:$0xff] %vm412, %v410
      %440 = vst.msk [vmem:[#allocation2 + $0xd8] sm:$0xff] %vm412, %v410
      %441 = vst.msk [vmem:[#allocation2 + $0xe0] sm:$0xff] %vm412, %v410
      %442 = vst.msk [vmem:[#allocation2 + $0xe8] sm:$0xff] %vm412, %v410
      %443 = vst.msk [vmem:[#allocation2 + $0xf0] sm:$0xff] %vm412, %v410
      %444 = vst.msk [vmem:[#allocation2 + $0xf8] sm:$0xff] %vm412, %v410
      %v445 = vlaneseq
      %v446 = vshrl.u32 %v445, 7
      %v447 = vadd.s32 %v446, 8
      %vm448 = vcmp.eq.s32.totalorder %v446, 0
      %vm449 = vcmp.eq.s32.totalorder %v447, 0
      %v450 = vrot.slane %v373, 7
      %v451 = vrot.slane %v375, 7
      %v452 = vrot.slane %v377, 7
      %v453 = vrot.slane %v379, 7
      %v454 = vrot.slane %v381, 7
      %v455 = vrot.slane %v383, 7
      %v456 = vrot.slane %v385, 7
      %v457 = vrot.slane %v387, 7
      %v458 = vrot.slane %v389, 7
      %v459 = vrot.slane %v391, 7
      %v460 = vrot.slane %v393, 7
      %v461 = vrot.slane %v395, 7
      %v462 = vrot.slane %v397, 7
      %v463 = vrot.slane %v399, 7
      %v464 = vrot.slane %v401, 7
      %v465 = vrot.slane %v403, 7
      %v466 = vrot.slane %v374, 7
      %v467 = vrot.slane %v376, 7
      %v468 = vrot.slane %v378, 7
      %v469 = vrot.slane %v380, 7
      %v470 = vrot.slane %v382, 7
      %v471 = vrot.slane %v384, 7
      %v472 = vrot.slane %v386, 7
      %v473 = vrot.slane %v388, 7
      %v474 = vrot.slane %v390, 7
      %v475 = vrot.slane %v392, 7
      %v476 = vrot.slane %v394, 7
      %v477 = vrot.slane %v396, 7
      %v478 = vrot.slane %v398, 7
      %v479 = vrot.slane %v400, 7
      %v480 = vrot.slane %v402, 7
      %v481 = vrot.slane %v404, 7
      %vm482 = vcmp.lt.s32.totalorder %v446, 1
      %v483 = vsel %vm482, %v450, %v466
      %v484 = vsel %vm482, %v451, %v467
      %v485 = vsel %vm482, %v452, %v468
      %v486 = vsel %vm482, %v453, %v469
      %v487 = vsel %vm482, %v454, %v470
      %v488 = vsel %vm482, %v455, %v471
      %v489 = vsel %vm482, %v456, %v472
      %v490 = vsel %vm482, %v457, %v473
      %v491 = vsel %vm482, %v458, %v474
      %v492 = vsel %vm482, %v459, %v475
      %v493 = vsel %vm482, %v460, %v476
      %v494 = vsel %vm482, %v461, %v477
      %v495 = vsel %vm482, %v462, %v478
      %v496 = vsel %vm482, %v463, %v479
      %v497 = vsel %vm482, %v464, %v480
      %v498 = vsel %vm482, %v465, %v481
      %v499 = vsel %vm482, %v466, %v450
      %v500 = vsel %vm482, %v467, %v451
      %v501 = vsel %vm482, %v468, %v452
      %v502 = vsel %vm482, %v469, %v453
      %v503 = vsel %vm482, %v470, %v454
      %v504 = vsel %vm482, %v471, %v455
      %v505 = vsel %vm482, %v472, %v456
      %v506 = vsel %vm482, %v473, %v457
      %v507 = vsel %vm482, %v474, %v458
      %v508 = vsel %vm482, %v475, %v459
      %v509 = vsel %vm482, %v476, %v460
      %v510 = vsel %vm482, %v477, %v461
      %v511 = vsel %vm482, %v478, %v462
      %v512 = vsel %vm482, %v479, %v463
      %v513 = vsel %vm482, %v480, %v464
      %v514 = vsel %vm482, %v481, %v465
      %v515 = vsel %vm448, 0.0, %v499
      %v516 = vsel %vm449, 0.0, %v483
      %v517 = vsel %vm448, 0.0, %v500
      %v518 = vsel %vm449, 0.0, %v484
      %v519 = vsel %vm448, 0.0, %v501
      %v520 = vsel %vm449, 0.0, %v485
      %v521 = vsel %vm448, 0.0, %v502
      %v522 = vsel %vm449, 0.0, %v486
      %v523 = vsel %vm448, 0.0, %v503
      %v524 = vsel %vm449, 0.0, %v487
      %v525 = vsel %vm448, 0.0, %v504
      %v526 = vsel %vm449, 0.0, %v488
      %v527 = vsel %vm448, 0.0, %v505
      %v528 = vsel %vm449, 0.0, %v489
      %v529 = vsel %vm448, 0.0, %v506
      %v530 = vsel %vm449, 0.0, %v490
      %v531 = vsel %vm448, 0.0, %v507
      %v532 = vsel %vm449, 0.0, %v491
      %v533 = vsel %vm448, 0.0, %v508
      %v534 = vsel %vm449, 0.0, %v492
      %v535 = vsel %vm448, 0.0, %v509
      %v536 = vsel %vm449, 0.0, %v493
      %v537 = vsel %vm448, 0.0, %v510
      %v538 = vsel %vm449, 0.0, %v494
      %v539 = vsel %vm448, 0.0, %v511
      %v540 = vsel %vm449, 0.0, %v495
      %v541 = vsel %vm448, 0.0, %v512
      %v542 = vsel %vm449, 0.0, %v496
      %v543 = vsel %vm448, 0.0, %v513
      %v544 = vsel %vm449, 0.0, %v497
      %v545 = vsel %vm448, 0.0, %v514
      %v546 = vsel %vm449, 0.0, %v498
      %vm547 = vcmp.eq.s32.totalorder %v446, 15
      %vm548 = vcmp.eq.s32.totalorder %v447, 15
      %v549 = vrot.slane %v373, 1
      %v550 = vrot.slane %v375, 1
      %v551 = vrot.slane %v377, 1
      %v552 = vrot.slane %v379, 1
      %v553 = vrot.slane %v381, 1
      %v554 = vrot.slane %v383, 1
      %v555 = vrot.slane %v385, 1
      %v556 = vrot.slane %v387, 1
      %v557 = vrot.slane %v389, 1
      %v558 = vrot.slane %v391, 1
      %v559 = vrot.slane %v393, 1
      %v560 = vrot.slane %v395, 1
      %v561 = vrot.slane %v397, 1
      %v562 = vrot.slane %v399, 1
      %v563 = vrot.slane %v401, 1
      %v564 = vrot.slane %v403, 1
      %v565 = vrot.slane %v374, 1
      %v566 = vrot.slane %v376, 1
      %v567 = vrot.slane %v378, 1
      %v568 = vrot.slane %v380, 1
      %v569 = vrot.slane %v382, 1
      %v570 = vrot.slane %v384, 1
      %v571 = vrot.slane %v386, 1
      %v572 = vrot.slane %v388, 1
      %v573 = vrot.slane %v390, 1
      %v574 = vrot.slane %v392, 1
      %v575 = vrot.slane %v394, 1
      %v576 = vrot.slane %v396, 1
      %v577 = vrot.slane %v398, 1
      %v578 = vrot.slane %v400, 1
      %v579 = vrot.slane %v402, 1
      %v580 = vrot.slane %v404, 1
      %vm581 = vcmp.lt.s32.totalorder %v446, 7
      %v582 = vsel %vm581, %v549, %v565
      %v583 = vsel %vm581, %v550, %v566
      %v584 = vsel %vm581, %v551, %v567
      %v585 = vsel %vm581, %v552, %v568
      %v586 = vsel %vm581, %v553, %v569
      %v587 = vsel %vm581, %v554, %v570
      %v588 = vsel %vm581, %v555, %v571
      %v589 = vsel %vm581, %v556, %v572
      %v590 = vsel %vm581, %v557, %v573
      %v591 = vsel %vm581, %v558, %v574
      %v592 = vsel %vm581, %v559, %v575
      %v593 = vsel %vm581, %v560, %v576
      %v594 = vsel %vm581, %v561, %v577
      %v595 = vsel %vm581, %v562, %v578
      %v596 = vsel %vm581, %v563, %v579
      %v597 = vsel %vm581, %v564, %v580
      %v598 = vsel %vm581, %v565, %v549
      %v599 = vsel %vm581, %v566, %v550
      %v600 = vsel %vm581, %v567, %v551
      %v601 = vsel %vm581, %v568, %v552
      %v602 = vsel %vm581, %v569, %v553
      %v603 = vsel %vm581, %v570, %v554
      %v604 = vsel %vm581, %v571, %v555
      %v605 = vsel %vm581, %v572, %v556
      %v606 = vsel %vm581, %v573, %v557
      %v607 = vsel %vm581, %v574, %v558
      %v608 = vsel %vm581, %v575, %v559
      %v609 = vsel %vm581, %v576, %v560
      %v610 = vsel %vm581, %v577, %v561
      %v611 = vsel %vm581, %v578, %v562
      %v612 = vsel %vm581, %v579, %v563
      %v613 = vsel %vm581, %v580, %v564
      %v614 = vsel %vm547, 0.0, %v582
      %v615 = vsel %vm548, 0.0, %v598
      %v616 = vsel %vm547, 0.0, %v583
      %v617 = vsel %vm548, 0.0, %v599
      %v618 = vsel %vm547, 0.0, %v584
      %v619 = vsel %vm548, 0.0, %v600
      %v620 = vsel %vm547, 0.0, %v585
      %v621 = vsel %vm548, 0.0, %v601
      %v622 = vsel %vm547, 0.0, %v586
      %v623 = vsel %vm548, 0.0, %v602
      %v624 = vsel %vm547, 0.0, %v587
      %v625 = vsel %vm548, 0.0, %v603
      %v626 = vsel %vm547, 0.0, %v588
      %v627 = vsel %vm548, 0.0, %v604
      %v628 = vsel %vm547, 0.0, %v589
      %v629 = vsel %vm548, 0.0, %v605
      %v630 = vsel %vm547, 0.0, %v590
      %v631 = vsel %vm548, 0.0, %v606
      %v632 = vsel %vm547, 0.0, %v591
      %v633 = vsel %vm548, 0.0, %v607
      %v634 = vsel %vm547, 0.0, %v592
      %v635 = vsel %vm548, 0.0, %v608
      %v636 = vsel %vm547, 0.0, %v593
      %v637 = vsel %vm548, 0.0, %v609
      %v638 = vsel %vm547, 0.0, %v594
      %v639 = vsel %vm548, 0.0, %v610
      %v640 = vsel %vm547, 0.0, %v595
      %v641 = vsel %vm548, 0.0, %v611
      %v642 = vsel %vm547, 0.0, %v596
      %v643 = vsel %vm548, 0.0, %v612
      %v644 = vsel %vm547, 0.0, %v597
      %v645 = vsel %vm548, 0.0, %v613
      %678 = vrot.lane.b32.xlu0 %v373, 4
      %v679 = vpop.permute.xlu0 %678
      %680 = vrot.lane.b32.xlu0 %v374, 4
      %v681 = vpop.permute.xlu0 %680
      %682 = vrot.lane.b32.xlu0 %v375, 4
      %v683 = vpop.permute.xlu0 %682
      %684 = vrot.lane.b32.xlu0 %v376, 4
      %v685 = vpop.permute.xlu0 %684
      %686 = vrot.lane.b32.xlu0 %v377, 4
      %v687 = vpop.permute.xlu0 %686
      %688 = vrot.lane.b32.xlu0 %v378, 4
      %v689 = vpop.permute.xlu0 %688
      %690 = vrot.lane.b32.xlu0 %v379, 4
      %v691 = vpop.permute.xlu0 %690
      %692 = vrot.lane.b32.xlu0 %v380, 4
      %v693 = vpop.permute.xlu0 %692
      %694 = vrot.lane.b32.xlu0 %v381, 4
      %v695 = vpop.permute.xlu0 %694
      %696 = vrot.lane.b32.xlu0 %v382, 4
      %v697 = vpop.permute.xlu0 %696
      %698 = vrot.lane.b32.xlu0 %v383, 4
      %v699 = vpop.permute.xlu0 %698
      %700 = vrot.lane.b32.xlu0 %v384, 4
      %v701 = vpop.permute.xlu0 %700
      %702 = vrot.lane.b32.xlu0 %v385, 4
      %v703 = vpop.permute.xlu0 %702
      %704 = vrot.lane.b32.xlu0 %v386, 4
      %v705 = vpop.permute.xlu0 %704
      %706 = vrot.lane.b32.xlu0 %v387, 4
      %v707 = vpop.permute.xlu0 %706
      %708 = vrot.lane.b32.xlu0 %v388, 4
      %v709 = vpop.permute.xlu0 %708
      %710 = vrot.lane.b32.xlu0 %v389, 4
      %v711 = vpop.permute.xlu0 %710
      %712 = vrot.lane.b32.xlu0 %v390, 4
      %v713 = vpop.permute.xlu0 %712
      %714 = vrot.lane.b32.xlu0 %v391, 4
      %v715 = vpop.permute.xlu0 %714
      %716 = vrot.lane.b32.xlu0 %v392, 4
      %v717 = vpop.permute.xlu0 %716
      %718 = vrot.lane.b32.xlu0 %v393, 4
      %v719 = vpop.permute.xlu0 %718
      %720 = vrot.lane.b32.xlu0 %v394, 4
      %v721 = vpop.permute.xlu0 %720
      %722 = vrot.lane.b32.xlu0 %v395, 4
      %v723 = vpop.permute.xlu0 %722
      %724 = vrot.lane.b32.xlu0 %v396, 4
      %v725 = vpop.permute.xlu0 %724
      %726 = vrot.lane.b32.xlu0 %v397, 4
      %v727 = vpop.permute.xlu0 %726
      %728 = vrot.lane.b32.xlu0 %v398, 4
      %v729 = vpop.permute.xlu0 %728
      %730 = vrot.lane.b32.xlu0 %v399, 4
      %v731 = vpop.permute.xlu0 %730
      %732 = vrot.lane.b32.xlu0 %v400, 4
      %v733 = vpop.permute.xlu0 %732
      %734 = vrot.lane.b32.xlu0 %v401, 4
      %v735 = vpop.permute.xlu0 %734
      %736 = vrot.lane.b32.xlu0 %v402, 4
      %v737 = vpop.permute.xlu0 %736
      %738 = vrot.lane.b32.xlu0 %v403, 4
      %v739 = vpop.permute.xlu0 %738
      %740 = vrot.lane.b32.xlu0 %v404, 4
      %v741 = vpop.permute.xlu0 %740
      %806 = vrot.lane.b32.xlu0 %v614, 8
      %v807 = vpop.permute.xlu0 %806
      %808 = vrot.lane.b32.xlu0 %v615, 8
      %v809 = vpop.permute.xlu0 %808
      %810 = vrot.lane.b32.xlu0 %v616, 8
      %v811 = vpop.permute.xlu0 %810
      %812 = vrot.lane.b32.xlu0 %v617, 8
      %v813 = vpop.permute.xlu0 %812
      %814 = vrot.lane.b32.xlu0 %v618, 8
      %v815 = vpop.permute.xlu0 %814
      %816 = vrot.lane.b32.xlu0 %v619, 8
      %v817 = vpop.permute.xlu0 %816
      %818 = vrot.lane.b32.xlu0 %v620, 8
      %v819 = vpop.permute.xlu0 %818
      %820 = vrot.lane.b32.xlu0 %v621, 8
      %v821 = vpop.permute.xlu0 %820
      %822 = vrot.lane.b32.xlu0 %v622, 8
      %v823 = vpop.permute.xlu0 %822
      %824 = vrot.lane.b32.xlu0 %v623, 8
      %v825 = vpop.permute.xlu0 %824
      %826 = vrot.lane.b32.xlu0 %v624, 8
      %v827 = vpop.permute.xlu0 %826
      %828 = vrot.lane.b32.xlu0 %v625, 8
      %v829 = vpop.permute.xlu0 %828
      %830 = vrot.lane.b32.xlu0 %v626, 8
      %v831 = vpop.permute.xlu0 %830
      %832 = vrot.lane.b32.xlu0 %v627, 8
      %v833 = vpop.permute.xlu0 %832
      %834 = vrot.lane.b32.xlu0 %v628, 8
      %v835 = vpop.permute.xlu0 %834
      %836 = vrot.lane.b32.xlu0 %v629, 8
      %v837 = vpop.permute.xlu0 %836
      %838 = vrot.lane.b32.xlu0 %v630, 8
      %v839 = vpop.permute.xlu0 %838
      %840 = vrot.lane.b32.xlu0 %v631, 8
      %v841 = vpop.permute.xlu0 %840
      %842 = vrot.lane.b32.xlu0 %v632, 8
      %v843 = vpop.permute.xlu0 %842
      %844 = vrot.lane.b32.xlu0 %v633, 8
      %v845 = vpop.permute.xlu0 %844
      %846 = vrot.lane.b32.xlu0 %v634, 8
      %v847 = vpop.permute.xlu0 %846
      %848 = vrot.lane.b32.xlu0 %v635, 8
      %v849 = vpop.permute.xlu0 %848
      %850 = vrot.lane.b32.xlu0 %v636, 8
      %v851 = vpop.permute.xlu0 %850
      %852 = vrot.lane.b32.xlu0 %v637, 8
      %v853 = vpop.permute.xlu0 %852
      %854 = vrot.lane.b32.xlu0 %v638, 8
      %v855 = vpop.permute.xlu0 %854
      %856 = vrot.lane.b32.xlu0 %v639, 8
      %v857 = vpop.permute.xlu0 %856
      %858 = vrot.lane.b32.xlu0 %v640, 8
      %v859 = vpop.permute.xlu0 %858
      %860 = vrot.lane.b32.xlu0 %v641, 8
      %v861 = vpop.permute.xlu0 %860
      %862 = vrot.lane.b32.xlu0 %v642, 8
      %v863 = vpop.permute.xlu0 %862
      %864 = vrot.lane.b32.xlu0 %v643, 8
      %v865 = vpop.permute.xlu0 %864
      %866 = vrot.lane.b32.xlu0 %v644, 8
      %v867 = vpop.permute.xlu0 %866
      %868 = vrot.lane.b32.xlu0 %v645, 8
      %v869 = vpop.permute.xlu0 %868
      %vm902 = vcmask 31744
      %v903 = vsel %vm902, %v515, %v679
      %v904 = vsel %vm902, %v516, %v681
      %v905 = vsel %vm902, %v517, %v683
      %v906 = vsel %vm902, %v518, %v685
      %v907 = vsel %vm902, %v519, %v687
      %v908 = vsel %vm902, %v520, %v689
      %v909 = vsel %vm902, %v521, %v691
      %v910 = vsel %vm902, %v522, %v693
      %v911 = vsel %vm902, %v523, %v695
      %v912 = vsel %vm902, %v524, %v697
      %v913 = vsel %vm902, %v525, %v699
      %v914 = vsel %vm902, %v526, %v701
      %v915 = vsel %vm902, %v527, %v703
      %v916 = vsel %vm902, %v528, %v705
      %v917 = vsel %vm902, %v529, %v707
      %v918 = vsel %vm902, %v530, %v709
      %v919 = vsel %vm902, %v531, %v711
      %v920 = vsel %vm902, %v532, %v713
      %v921 = vsel %vm902, %v533, %v715
      %v922 = vsel %vm902, %v534, %v717
      %v923 = vsel %vm902, %v535, %v719
      %v924 = vsel %vm902, %v536, %v721
      %v925 = vsel %vm902, %v537, %v723
      %v926 = vsel %vm902, %v538, %v725
      %v927 = vsel %vm902, %v539, %v727
      %v928 = vsel %vm902, %v540, %v729
      %v929 = vsel %vm902, %v541, %v731
      %v930 = vsel %vm902, %v542, %v733
      %v931 = vsel %vm902, %v543, %v735
      %v932 = vsel %vm902, %v544, %v737
      %v933 = vsel %vm902, %v545, %v739
      %v934 = vsel %vm902, %v546, %v741
      %v935 = vsel %vm412, %v903, %v807
      %v936 = vsel %vm412, %v904, %v809
      %v937 = vsel %vm412, %v905, %v811
      %v938 = vsel %vm412, %v906, %v813
      %v939 = vsel %vm412, %v907, %v815
      %v940 = vsel %vm412, %v908, %v817
      %v941 = vsel %vm412, %v909, %v819
      %v942 = vsel %vm412, %v910, %v821
      %v943 = vsel %vm412, %v911, %v823
      %v944 = vsel %vm412, %v912, %v825
      %v945 = vsel %vm412, %v913, %v827
      %v946 = vsel %vm412, %v914, %v829
      %v947 = vsel %vm412, %v915, %v831
      %v948 = vsel %vm412, %v916, %v833
      %v949 = vsel %vm412, %v917, %v835
      %v950 = vsel %vm412, %v918, %v837
      %v951 = vsel %vm412, %v919, %v839
      %v952 = vsel %vm412, %v920, %v841
      %v953 = vsel %vm412, %v921, %v843
      %v954 = vsel %vm412, %v922, %v845
      %v955 = vsel %vm412, %v923, %v847
      %v956 = vsel %vm412, %v924, %v849
      %v957 = vsel %vm412, %v925, %v851
      %v958 = vsel %vm412, %v926, %v853
      %v959 = vsel %vm412, %v927, %v855
      %v960 = vsel %vm412, %v928, %v857
      %v961 = vsel %vm412, %v929, %v859
      %v962 = vsel %vm412, %v930, %v861
      %v963 = vsel %vm412, %v931, %v863
      %v964 = vsel %vm412, %v932, %v865
      %v965 = vsel %vm412, %v933, %v867
      %v966 = vsel %vm412, %v934, %v869
      %v967 = vld [vmem:[%s3] sm:$0xff]
      %v968 = vld [vmem:[%s3 + $0x8] sm:$0xf]
      %vm969 = vcmask 97280
      %v971 = vsel %vm969, %v935, 0
      %v974 = vsel %vm969, %v936, 0
      %v977 = vsel %vm969, %v937, 0
      %v980 = vsel %vm969, %v938, 0
      %v983 = vsel %vm969, %v939, 0
      %v986 = vsel %vm969, %v940, 0
      %v989 = vsel %vm969, %v941, 0
      %v992 = vsel %vm969, %v942, 0
      %v995 = vsel %vm969, %v943, 0
      %v998 = vsel %vm969, %v944, 0
      %v1001 = vsel %vm969, %v945, 0
      %v1004 = vsel %vm969, %v946, 0
      %v1007 = vsel %vm969, %v947, 0
      %v1010 = vsel %vm969, %v948, 0
      %v1013 = vsel %vm969, %v949, 0
      %v1016 = vsel %vm969, %v950, 0
      %v1019 = vsel %vm969, %v951, 0
      %v1022 = vsel %vm969, %v952, 0
      %v1025 = vsel %vm969, %v953, 0
      %v1028 = vsel %vm969, %v954, 0
      %v1031 = vsel %vm969, %v955, 0
      %v1034 = vsel %vm969, %v956, 0
      %v1037 = vsel %vm969, %v957, 0
      %v1040 = vsel %vm969, %v958, 0
      %v1043 = vsel %vm969, %v959, 0
      %v1046 = vsel %vm969, %v960, 0
      %v1049 = vsel %vm969, %v961, 0
      %v1052 = vsel %vm969, %v962, 0
      %v1055 = vsel %vm969, %v963, 0
      %v1058 = vsel %vm969, %v964, 0
      %v1061 = vsel %vm969, %v965, 0
      %v1064 = vsel %vm969, %v966, 0
      %vm1066 = vcmask 1043456
      %v1068 = vsel %vm1066, %v968, 0
      %1070 = vmatprep.subr.mxu0 0.0
      %1071 = vmatpush1.msra.mxu0 %v967
      %1072 = vmatprep.subr.mxu0 0.0
      %1073 = vmatpush1.msra.mxu0 %v1068
      %1074 = vmatprep.subr.mxu0 0.0
      %1075 = vmatpush1.msra.mxu0 0.0
      %1076 = vmatprep.subr.mxu0 0.0
      %1077 = vmatpush1.msra.mxu0 0.0
      %1078 = vmatprep.subr.mxu0 0.0
      %1079 = vmatpush1.msra.mxu0 0.0
      %1080 = vmatprep.subr.mxu0 0.0
      %1081 = vmatpush1.msra.mxu0 0.0
      %1082 = vmatprep.subr.mxu0 0.0
      %1083 = vmatpush1.msra.mxu0 0.0
      %1084 = vmatprep.subr.mxu0 0.0
      %1085 = vmatpush1.msra.mxu0 0.0
      %1086 = vmatprep.subr.mxu0 0.0
      %1087 = vmatpush1.msra.mxu0 0.0
      %1088 = vmatprep.subr.mxu0 0.0
      %1089 = vmatpush1.msra.mxu0 0.0
      %1090 = vmatprep.subr.mxu0 0.0
      %1091 = vmatpush1.msra.mxu0 0.0
      %1092 = vmatprep.subr.mxu0 0.0
      %1093 = vmatpush1.msra.mxu0 0.0
      %1094 = vmatprep.subr.mxu0 0.0
      %1095 = vmatpush1.msra.mxu0 0.0
      %1096 = vmatprep.subr.mxu0 0.0
      %1097 = vmatpush1.msra.mxu0 0.0
      %1098 = vmatprep.subr.mxu0 0.0
      %1099 = vmatpush1.msra.mxu0 0.0
      %1100 = vmatprep.subr.mxu0 0.0
      %1101 = vmatpush1.msra.mxu0 0.0
      %1102 = vmatprep.subr.mxu0 0.0
      %1103 = vmatpush1.msra.mxu0 0.0
      %1104 = vmatprep.subr.mxu0 0.0
      %1105 = vmatpush1.msra.mxu0 0.0
      %1106 = vmatprep.subr.mxu0 0.0
      %1107 = vmatpush1.msra.mxu0 0.0
      %1108 = vmatprep.subr.mxu0 0.0
      %1109 = vmatpush1.msra.mxu0 0.0
      %1110 = vmatprep.subr.mxu0 0.0
      %1111 = vmatpush1.msra.mxu0 0.0
      %1112 = vmatprep.subr.mxu0 0.0
      %1113 = vmatpush1.msra.mxu0 0.0
      %1114 = vmatprep.subr.mxu0 0.0
      %1115 = vmatpush1.msra.mxu0 0.0
      %1116 = vmatprep.subr.mxu0 0.0
      %1117 = vmatpush1.msra.mxu0 0.0
      %1118 = vmatprep.subr.mxu0 0.0
      %1119 = vmatpush1.msra.mxu0 0.0
      %1120 = vmatprep.subr.mxu0 0.0
      %1121 = vmatpush1.msra.mxu0 0.0
      %1122 = vmatprep.subr.mxu0 0.0
      %1123 = vmatpush1.msra.mxu0 0.0
      %1124 = vmatprep.subr.mxu0 0.0
      %1125 = vmatpush1.msra.mxu0 0.0
      %1126 = vmatprep.subr.mxu0 0.0
      %1127 = vmatpush1.msra.mxu0 0.0
      %1128 = vmatprep.subr.mxu0 0.0
      %1129 = vmatpush1.msra.mxu0 0.0
      %1130 = vmatprep.subr.mxu0 0.0
      %1131 = vmatpush1.msra.mxu0 0.0
      %1132 = vmatprep.subr.mxu0 0.0
      %1133 = vmatpush1.msra.mxu0 0.0
      %1134 = vmatprep.mubr.f32.mxu0 0.0
      %1135 = vmatmul.mubr.f32.gmra.mrb[0].mxu0 %v971
      %v1136 = vpop.f32.mrb[0].mxu0
      %v1137 = vadd.f32 0.0, %v1136
      %v1138 = vpop.f32.mrb[0].mxu0
      %1139 = vmatprep.mubr.f32.mxu0 0.0
      %1140 = vmatmul.mubr.f32.gmra.mrb[0].mxu0 %v974
      %v1141 = vpop.f32.mrb[0].mxu0
      %v1142 = vadd.f32 0.0, %v1141
      %v1143 = vpop.f32.mrb[0].mxu0
      %1144 = vmatprep.mubr.f32.mxu0 0.0
      %1145 = vmatmul.mubr.f32.gmra.mrb[0].mxu0 %v977
      %v1146 = vpop.f32.mrb[0].mxu0
      %v1147 = vadd.f32 0.0, %v1146
      %v1148 = vpop.f32.mrb[0].mxu0
      %1149 = vmatprep.mubr.f32.mxu0 0.0
      %1150 = vmatmul.mubr.f32.gmra.mrb[0].mxu0 %v980
      %v1151 = vpop.f32.mrb[0].mxu0
      %v1152 = vadd.f32 0.0, %v1151
      %v1153 = vpop.f32.mrb[0].mxu0
      %1154 = vmatprep.mubr.f32.mxu0 0.0
      %1155 = vmatmul.mubr.f32.gmra.mrb[0].mxu0 %v983
      %v1156 = vpop.f32.mrb[0].mxu0
      %v1157 = vadd.f32 0.0, %v1156
      %v1158 = vpop.f32.mrb[0].mxu0
      %1159 = vmatprep.mubr.f32.mxu0 0.0
      %1160 = vmatmul.mubr.f32.gmra.mrb[0].mxu0 %v986
      %v1161 = vpop.f32.mrb[0].mxu0
      %v1162 = vadd.f32 0.0, %v1161
      %v1163 = vpop.f32.mrb[0].mxu0
      %1164 = vmatprep.mubr.f32.mxu0 0.0
      %1165 = vmatmul.mubr.f32.gmra.mrb[0].mxu0 %v989
      %v1166 = vpop.f32.mrb[0].mxu0
      %v1167 = vadd.f32 0.0, %v1166
      %v1168 = vpop.f32.mrb[0].mxu0
      %1169 = vmatprep.mubr.f32.mxu0 0.0
      %1170 = vmatmul.mubr.f32.gmra.mrb[0].mxu0 %v992
      %v1171 = vpop.f32.mrb[0].mxu0
      %v1172 = vadd.f32 0.0, %v1171
      %v1173 = vpop.f32.mrb[0].mxu0
      %1174 = vmatprep.mubr.f32.mxu0 0.0
      %1175 = vmatmul.mubr.f32.gmra.mrb[0].mxu0 %v995
      %v1176 = vpop.f32.mrb[0].mxu0
      %v1177 = vadd.f32 0.0, %v1176
      %v1178 = vpop.f32.mrb[0].mxu0
      %1179 = vmatprep.mubr.f32.mxu0 0.0
      %1180 = vmatmul.mubr.f32.gmra.mrb[0].mxu0 %v998
      %v1181 = vpop.f32.mrb[0].mxu0
      %v1182 = vadd.f32 0.0, %v1181
      %v1183 = vpop.f32.mrb[0].mxu0
      %1184 = vmatprep.mubr.f32.mxu0 0.0
      %1185 = vmatmul.mubr.f32.gmra.mrb[0].mxu0 %v1001
      %v1186 = vpop.f32.mrb[0].mxu0
      %v1187 = vadd.f32 0.0, %v1186
      %v1188 = vpop.f32.mrb[0].mxu0
      %1189 = vmatprep.mubr.f32.mxu0 0.0
      %1190 = vmatmul.mubr.f32.gmra.mrb[0].mxu0 %v1004
      %v1191 = vpop.f32.mrb[0].mxu0
      %v1192 = vadd.f32 0.0, %v1191
      %v1193 = vpop.f32.mrb[0].mxu0
      %1194 = vmatprep.mubr.f32.mxu0 0.0
      %1195 = vmatmul.mubr.f32.gmra.mrb[0].mxu0 %v1007
      %v1196 = vpop.f32.mrb[0].mxu0
      %v1197 = vadd.f32 0.0, %v1196
      %v1198 = vpop.f32.mrb[0].mxu0
      %1199 = vmatprep.mubr.f32.mxu0 0.0
      %1200 = vmatmul.mubr.f32.gmra.mrb[0].mxu0 %v1010
      %v1201 = vpop.f32.mrb[0].mxu0
      %v1202 = vadd.f32 0.0, %v1201
      %v1203 = vpop.f32.mrb[0].mxu0
      %1204 = vmatprep.mubr.f32.mxu0 0.0
      %1205 = vmatmul.mubr.f32.gmra.mrb[0].mxu0 %v1013
      %v1206 = vpop.f32.mrb[0].mxu0
      %v1207 = vadd.f32 0.0, %v1206
      %v1208 = vpop.f32.mrb[0].mxu0
      %1209 = vmatprep.mubr.f32.mxu0 0.0
      %1210 = vmatmul.mubr.f32.gmra.mrb[0].mxu0 %v1016
      %v1211 = vpop.f32.mrb[0].mxu0
      %v1212 = vadd.f32 0.0, %v1211
      %v1213 = vpop.f32.mrb[0].mxu0
      %1214 = vmatprep.mubr.f32.mxu0 0.0
      %1215 = vmatmul.mubr.f32.gmra.mrb[0].mxu0 %v1019
      %v1216 = vpop.f32.mrb[0].mxu0
      %v1217 = vadd.f32 0.0, %v1216
      %v1218 = vpop.f32.mrb[0].mxu0
      %1219 = vmatprep.mubr.f32.mxu0 0.0
      %1220 = vmatmul.mubr.f32.gmra.mrb[0].mxu0 %v1022
      %v1221 = vpop.f32.mrb[0].mxu0
      %v1222 = vadd.f32 0.0, %v1221
      %v1223 = vpop.f32.mrb[0].mxu0
      %1224 = vmatprep.mubr.f32.mxu0 0.0
      %1225 = vmatmul.mubr.f32.gmra.mrb[0].mxu0 %v1025
      %v1226 = vpop.f32.mrb[0].mxu0
      %v1227 = vadd.f32 0.0, %v1226
      %v1228 = vpop.f32.mrb[0].mxu0
      %1229 = vmatprep.mubr.f32.mxu0 0.0
      %1230 = vmatmul.mubr.f32.gmra.mrb[0].mxu0 %v1028
      %v1231 = vpop.f32.mrb[0].mxu0
      %v1232 = vadd.f32 0.0, %v1231
      %v1233 = vpop.f32.mrb[0].mxu0
      %1234 = vmatprep.mubr.f32.mxu0 0.0
      %1235 = vmatmul.mubr.f32.gmra.mrb[0].mxu0 %v1031
      %v1236 = vpop.f32.mrb[0].mxu0
      %v1237 = vadd.f32 0.0, %v1236
      %v1238 = vpop.f32.mrb[0].mxu0
      %1239 = vmatprep.mubr.f32.mxu0 0.0
      %1240 = vmatmul.mubr.f32.gmra.mrb[0].mxu0 %v1034
      %v1241 = vpop.f32.mrb[0].mxu0
      %v1242 = vadd.f32 0.0, %v1241
      %v1243 = vpop.f32.mrb[0].mxu0
      %1244 = vmatprep.mubr.f32.mxu0 0.0
      %1245 = vmatmul.mubr.f32.gmra.mrb[0].mxu0 %v1037
      %v1246 = vpop.f32.mrb[0].mxu0
      %v1247 = vadd.f32 0.0, %v1246
      %v1248 = vpop.f32.mrb[0].mxu0
      %1249 = vmatprep.mubr.f32.mxu0 0.0
      %1250 = vmatmul.mubr.f32.gmra.mrb[0].mxu0 %v1040
      %v1251 = vpop.f32.mrb[0].mxu0
      %v1252 = vadd.f32 0.0, %v1251
      %v1253 = vpop.f32.mrb[0].mxu0
      %1254 = vmatprep.mubr.f32.mxu0 0.0
      %1255 = vmatmul.mubr.f32.gmra.mrb[0].mxu0 %v1043
      %v1256 = vpop.f32.mrb[0].mxu0
      %v1257 = vadd.f32 0.0, %v1256
      %v1258 = vpop.f32.mrb[0].mxu0
      %1259 = vmatprep.mubr.f32.mxu0 0.0
      %1260 = vmatmul.mubr.f32.gmra.mrb[0].mxu0 %v1046
      %v1261 = vpop.f32.mrb[0].mxu0
      %v1262 = vadd.f32 0.0, %v1261
      %v1263 = vpop.f32.mrb[0].mxu0
      %1264 = vmatprep.mubr.f32.mxu0 0.0
      %1265 = vmatmul.mubr.f32.gmra.mrb[0].mxu0 %v1049
      %v1266 = vpop.f32.mrb[0].mxu0
      %v1267 = vadd.f32 0.0, %v1266
      %v1268 = vpop.f32.mrb[0].mxu0
      %1269 = vmatprep.mubr.f32.mxu0 0.0
      %1270 = vmatmul.mubr.f32.gmra.mrb[0].mxu0 %v1052
      %v1271 = vpop.f32.mrb[0].mxu0
      %v1272 = vadd.f32 0.0, %v1271
      %v1273 = vpop.f32.mrb[0].mxu0
      %1274 = vmatprep.mubr.f32.mxu0 0.0
      %1275 = vmatmul.mubr.f32.gmra.mrb[0].mxu0 %v1055
      %v1276 = vpop.f32.mrb[0].mxu0
      %v1277 = vadd.f32 0.0, %v1276
      %v1278 = vpop.f32.mrb[0].mxu0
      %1279 = vmatprep.mubr.f32.mxu0 0.0
      %1280 = vmatmul.mubr.f32.gmra.mrb[0].mxu0 %v1058
      %v1281 = vpop.f32.mrb[0].mxu0
      %v1282 = vadd.f32 0.0, %v1281
      %v1283 = vpop.f32.mrb[0].mxu0
      %1284 = vmatprep.mubr.f32.mxu0 0.0
      %1285 = vmatmul.mubr.f32.gmra.mrb[0].mxu0 %v1061
      %v1286 = vpop.f32.mrb[0].mxu0
      %v1287 = vpop.f32.mrb[0].mxu0
      %1288 = vmatprep.mubr.f32.mxu0 0.0
      %1289 = vmatmul.mubr.f32.gmra.mrb[0].mxu0 %v1064
      %v1290 = vpop.f32.mrb[0].mxu0
      %v1291 = vpop.f32.mrb[0].mxu0
      %1292 = vdwg.mxu0
      %v1293 = vld [vmem:[#allocation2 + $0x10] sm:$0xff]
      %v1294 = vld [vmem:[#allocation2 + $0x18] sm:$0xff]
      %v1295 = vld [vmem:[#allocation2 + $0x20] sm:$0xff]
      %v1296 = vld [vmem:[#allocation2 + $0x28] sm:$0xff]
      %v1297 = vld [vmem:[#allocation2 + $0x30] sm:$0xff]
      %v1298 = vld [vmem:[#allocation2 + $0x38] sm:$0xff]
      %v1299 = vld [vmem:[#allocation2 + $0x40] sm:$0xff]
      %v1300 = vld [vmem:[#allocation2 + $0x48] sm:$0xff]
      %v1301 = vld [vmem:[#allocation2 + $0x50] sm:$0xff]
      %v1302 = vld [vmem:[#allocation2 + $0x58] sm:$0xff]
      %v1303 = vld [vmem:[#allocation2 + $0x60] sm:$0xff]
      %v1304 = vld [vmem:[#allocation2 + $0x68] sm:$0xff]
      %v1305 = vld [vmem:[#allocation2 + $0x70] sm:$0xff]
      %v1306 = vld [vmem:[#allocation2 + $0x78] sm:$0xff]
      %v1307 = vld [vmem:[#allocation2 + $0x80] sm:$0xff]
      %v1308 = vld [vmem:[#allocation2 + $0x88] sm:$0xff]
      %v1309 = vld [vmem:[#allocation2 + $0x90] sm:$0xff]
      %v1310 = vld [vmem:[#allocation2 + $0x98] sm:$0xff]
      %v1311 = vld [vmem:[#allocation2 + $0xa0] sm:$0xff]
      %v1312 = vld [vmem:[#allocation2 + $0xa8] sm:$0xff]
      %v1313 = vld [vmem:[#allocation2 + $0xb0] sm:$0xff]
      %v1314 = vld [vmem:[#allocation2 + $0xb8] sm:$0xff]
      %v1315 = vld [vmem:[#allocation2 + $0xc0] sm:$0xff]
      %v1316 = vld [vmem:[#allocation2 + $0xc8] sm:$0xff]
      %v1317 = vld [vmem:[#allocation2 + $0xd0] sm:$0xff]
      %v1318 = vld [vmem:[#allocation2 + $0xd8] sm:$0xff]
      %v1319 = vld [vmem:[#allocation2 + $0xe0] sm:$0xff]
      %v1320 = vld [vmem:[#allocation2 + $0xe8] sm:$0xff]
      %v1321 = vld [vmem:[#allocation2 + $0xf0] sm:$0xff]
      %v1322 = vld [vmem:[#allocation2 + $0xf8] sm:$0xff]
      %v1323 = vadd.f32 %v1293, %v1137
      %v1324 = vadd.f32 %v1294, %v1142
      %v1325 = vadd.f32 %v1295, %v1147
      %v1326 = vadd.f32 %v1296, %v1152
      %v1327 = vadd.f32 %v1297, %v1157
      %v1328 = vadd.f32 %v1298, %v1162
      %v1329 = vadd.f32 %v1299, %v1167
      %v1330 = vadd.f32 %v1300, %v1172
      %v1331 = vadd.f32 %v1301, %v1177
      %v1332 = vadd.f32 %v1302, %v1182
      %v1333 = vadd.f32 %v1303, %v1187
      %v1334 = vadd.f32 %v1304, %v1192
      %v1335 = vadd.f32 %v1305, %v1197
      %v1336 = vadd.f32 %v1306, %v1202
      %v1337 = vadd.f32 %v1307, %v1207
      %v1338 = vadd.f32 %v1308, %v1212
      %v1339 = vadd.f32 %v1309, %v1217
      %v1340 = vadd.f32 %v1310, %v1222
      %v1341 = vadd.f32 %v1311, %v1227
      %v1342 = vadd.f32 %v1312, %v1232
      %v1343 = vadd.f32 %v1313, %v1237
      %v1344 = vadd.f32 %v1314, %v1242
      %v1345 = vadd.f32 %v1315, %v1247
      %v1346 = vadd.f32 %v1316, %v1252
      %v1347 = vadd.f32 %v1317, %v1257
      %v1348 = vadd.f32 %v1318, %v1262
      %v1349 = vadd.f32 %v1319, %v1267
      %v1350 = vadd.f32 %v1320, %v1272
      %v1351 = vadd.f32 %v1321, %v1277
      %v1352 = vadd.f32 %v1322, %v1282
      %1353 = vst.msk [vmem:[#allocation2 + $0x10] sm:$0xff] %vm412, %v1323
      %1354 = vst.msk [vmem:[#allocation2 + $0x18] sm:$0xff] %vm412, %v1324
      %1355 = vst.msk [vmem:[#allocation2 + $0x20] sm:$0xff] %vm412, %v1325
      %1356 = vst.msk [vmem:[#allocation2 + $0x28] sm:$0xff] %vm412, %v1326
      %1357 = vst.msk [vmem:[#allocation2 + $0x30] sm:$0xff] %vm412, %v1327
      %1358 = vst.msk [vmem:[#allocation2 + $0x38] sm:$0xff] %vm412, %v1328
      %1359 = vst.msk [vmem:[#allocation2 + $0x40] sm:$0xff] %vm412, %v1329
      %1360 = vst.msk [vmem:[#allocation2 + $0x48] sm:$0xff] %vm412, %v1330
      %1361 = vst.msk [vmem:[#allocation2 + $0x50] sm:$0xff] %vm412, %v1331
      %1362 = vst.msk [vmem:[#allocation2 + $0x58] sm:$0xff] %vm412, %v1332
      %1363 = vst.msk [vmem:[#allocation2 + $0x60] sm:$0xff] %vm412, %v1333
      %1364 = vst.msk [vmem:[#allocation2 + $0x68] sm:$0xff] %vm412, %v1334
      %1365 = vst.msk [vmem:[#allocation2 + $0x70] sm:$0xff] %vm412, %v1335
      %1366 = vst.msk [vmem:[#allocation2 + $0x78] sm:$0xff] %vm412, %v1336
      %1367 = vst.msk [vmem:[#allocation2 + $0x80] sm:$0xff] %vm412, %v1337
      %1368 = vst.msk [vmem:[#allocation2 + $0x88] sm:$0xff] %vm412, %v1338
      %1369 = vst.msk [vmem:[#allocation2 + $0x90] sm:$0xff] %vm412, %v1339
      %1370 = vst.msk [vmem:[#allocation2 + $0x98] sm:$0xff] %vm412, %v1340
      %1371 = vst.msk [vmem:[#allocation2 + $0xa0] sm:$0xff] %vm412, %v1341
      %1372 = vst.msk [vmem:[#allocation2 + $0xa8] sm:$0xff] %vm412, %v1342
      %1373 = vst.msk [vmem:[#allocation2 + $0xb0] sm:$0xff] %vm412, %v1343
      %1374 = vst.msk [vmem:[#allocation2 + $0xb8] sm:$0xff] %vm412, %v1344
      %1375 = vst.msk [vmem:[#allocation2 + $0xc0] sm:$0xff] %vm412, %v1345
      %1376 = vst.msk [vmem:[#allocation2 + $0xc8] sm:$0xff] %vm412, %v1346
      %1377 = vst.msk [vmem:[#allocation2 + $0xd0] sm:$0xff] %vm412, %v1347
      %1378 = vst.msk [vmem:[#allocation2 + $0xd8] sm:$0xff] %vm412, %v1348
      %1379 = vst.msk [vmem:[#allocation2 + $0xe0] sm:$0xff] %vm412, %v1349
      %1380 = vst.msk [vmem:[#allocation2 + $0xe8] sm:$0xff] %vm412, %v1350
      %1381 = vst.msk [vmem:[#allocation2 + $0xf0] sm:$0xff] %vm412, %v1351
      %1382 = vst.msk [vmem:[#allocation2 + $0xf8] sm:$0xff] %vm412, %v1352
      %s1383 = scalar_lea.vmem %s3, 16
      %v1384 = vld [vmem:[%s1383] sm:$0xff]
      %v1385 = vld [vmem:[%s1383 + $0x8] sm:$0xf]
      %v1387 = vsel %vm1066, %v1385, 0
      %1389 = vmatprep.subr.mxu0 0.0
      %1390 = vmatpush1.msra.mxu0 %v1384
      %1391 = vmatprep.subr.mxu0 0.0
      %1392 = vmatpush1.msra.mxu0 %v1387
      %1393 = vmatprep.subr.mxu0 0.0
      %1394 = vmatpush1.msra.mxu0 0.0
      %1395 = vmatprep.subr.mxu0 0.0
      %1396 = vmatpush1.msra.mxu0 0.0
      %1397 = vmatprep.subr.mxu0 0.0
      %1398 = vmatpush1.msra.mxu0 0.0
      %1399 = vmatprep.subr.mxu0 0.0
      %1400 = vmatpush1.msra.mxu0 0.0
      %1401 = vmatprep.subr.mxu0 0.0
      %1402 = vmatpush1.msra.mxu0 0.0
      %1403 = vmatprep.subr.mxu0 0.0
      %1404 = vmatpush1.msra.mxu0 0.0
      %1405 = vmatprep.subr.mxu0 0.0
      %1406 = vmatpush1.msra.mxu0 0.0
      %1407 = vmatprep.subr.mxu0 0.0
      %1408 = vmatpush1.msra.mxu0 0.0
      %1409 = vmatprep.subr.mxu0 0.0
      %1410 = vmatpush1.msra.mxu0 0.0
      %1411 = vmatprep.subr.mxu0 0.0
      %1412 = vmatpush1.msra.mxu0 0.0
      %1413 = vmatprep.subr.mxu0 0.0
      %1414 = vmatpush1.msra.mxu0 0.0
      %1415 = vmatprep.subr.mxu0 0.0
      %1416 = vmatpush1.msra.mxu0 0.0
      %1417 = vmatprep.subr.mxu0 0.0
      %1418 = vmatpush1.msra.mxu0 0.0
      %1419 = vmatprep.subr.mxu0 0.0
      %1420 = vmatpush1.msra.mxu0 0.0
      %1421 = vmatprep.subr.mxu0 0.0
      %1422 = vmatpush1.msra.mxu0 0.0
      %1423 = vmatprep.subr.mxu0 0.0
      %1424 = vmatpush1.msra.mxu0 0.0
      %1425 = vmatprep.subr.mxu0 0.0
      %1426 = vmatpush1.msra.mxu0 0.0
      %1427 = vmatprep.subr.mxu0 0.0
      %1428 = vmatpush1.msra.mxu0 0.0
      %1429 = vmatprep.subr.mxu0 0.0
      %1430 = vmatpush1.msra.mxu0 0.0
      %1431 = vmatprep.subr.mxu0 0.0
      %1432 = vmatpush1.msra.mxu0 0.0
      %1433 = vmatprep.subr.mxu0 0.0
      %1434 = vmatpush1.msra.mxu0 0.0
      %1435 = vmatprep.subr.mxu0 0.0
      %1436 = vmatpush1.msra.mxu0 0.0
      %1437 = vmatprep.subr.mxu0 0.0
      %1438 = vmatpush1.msra.mxu0 0.0
      %1439 = vmatprep.subr.mxu0 0.0
      %1440 = vmatpush1.msra.mxu0 0.0
      %1441 = vmatprep.subr.mxu0 0.0
      %1442 = vmatpush1.msra.mxu0 0.0
      %1443 = vmatprep.subr.mxu0 0.0
      %1444 = vmatpush1.msra.mxu0 0.0
      %1445 = vmatprep.subr.mxu0 0.0
      %1446 = vmatpush1.msra.mxu0 0.0
      %1447 = vmatprep.subr.mxu0 0.0
      %1448 = vmatpush1.msra.mxu0 0.0
      %1449 = vmatprep.subr.mxu0 0.0
      %1450 = vmatpush1.msra.mxu0 0.0
      %1451 = vmatprep.subr.mxu0 0.0
      %1452 = vmatpush1.msra.mxu0 0.0
      %1453 = vmatprep.mubr.f32.mxu0 0.0
      %1454 = vmatmul.mubr.f32.gmra.mrb[0].mxu0 %v971
      %v1455 = vpop.f32.mrb[0].mxu0
      %v1456 = vadd.f32 0.0, %v1455
      %v1457 = vpop.f32.mrb[0].mxu0
      %1458 = vmatprep.mubr.f32.mxu0 0.0
      %1459 = vmatmul.mubr.f32.gmra.mrb[0].mxu0 %v974
      %v1460 = vpop.f32.mrb[0].mxu0
      %v1461 = vadd.f32 0.0, %v1460
      %v1462 = vpop.f32.mrb[0].mxu0
      %1463 = vmatprep.mubr.f32.mxu0 0.0
      %1464 = vmatmul.mubr.f32.gmra.mrb[0].mxu0 %v977
      %v1465 = vpop.f32.mrb[0].mxu0
      %v1466 = vadd.f32 0.0, %v1465
      %v1467 = vpop.f32.mrb[0].mxu0
      %1468 = vmatprep.mubr.f32.mxu0 0.0
      %1469 = vmatmul.mubr.f32.gmra.mrb[0].mxu0 %v980
      %v1470 = vpop.f32.mrb[0].mxu0
      %v1471 = vadd.f32 0.0, %v1470
      %v1472 = vpop.f32.mrb[0].mxu0
      %1473 = vmatprep.mubr.f32.mxu0 0.0
      %1474 = vmatmul.mubr.f32.gmra.mrb[0].mxu0 %v983
      %v1475 = vpop.f32.mrb[0].mxu0
      %v1476 = vadd.f32 0.0, %v1475
      %v1477 = vpop.f32.mrb[0].mxu0
      %1478 = vmatprep.mubr.f32.mxu0 0.0
      %1479 = vmatmul.mubr.f32.gmra.mrb[0].mxu0 %v986
      %v1480 = vpop.f32.mrb[0].mxu0
      %v1481 = vadd.f32 0.0, %v1480
      %v1482 = vpop.f32.mrb[0].mxu0
      %1483 = vmatprep.mubr.f32.mxu0 0.0
      %1484 = vmatmul.mubr.f32.gmra.mrb[0].mxu0 %v989
      %v1485 = vpop.f32.mrb[0].mxu0
      %v1486 = vadd.f32 0.0, %v1485
      %v1487 = vpop.f32.mrb[0].mxu0
      %1488 = vmatprep.mubr.f32.mxu0 0.0
      %1489 = vmatmul.mubr.f32.gmra.mrb[0].mxu0 %v992
      %v1490 = vpop.f32.mrb[0].mxu0
      %v1491 = vadd.f32 0.0, %v1490
      %v1492 = vpop.f32.mrb[0].mxu0
      %1493 = vmatprep.mubr.f32.mxu0 0.0
      %1494 = vmatmul.mubr.f32.gmra.mrb[0].mxu0 %v995
      %v1495 = vpop.f32.mrb[0].mxu0
      %v1496 = vadd.f32 0.0, %v1495
      %v1497 = vpop.f32.mrb[0].mxu0
      %1498 = vmatprep.mubr.f32.mxu0 0.0
      %1499 = vmatmul.mubr.f32.gmra.mrb[0].mxu0 %v998
      %v1500 = vpop.f32.mrb[0].mxu0
      %v1501 = vadd.f32 0.0, %v1500
      %v1502 = vpop.f32.mrb[0].mxu0
      %1503 = vmatprep.mubr.f32.mxu0 0.0
      %1504 = vmatmul.mubr.f32.gmra.mrb[0].mxu0 %v1001
      %v1505 = vpop.f32.mrb[0].mxu0
      %v1506 = vadd.f32 0.0, %v1505
      %v1507 = vpop.f32.mrb[0].mxu0
      %1508 = vmatprep.mubr.f32.mxu0 0.0
      %1509 = vmatmul.mubr.f32.gmra.mrb[0].mxu0 %v1004
      %v1510 = vpop.f32.mrb[0].mxu0
      %v1511 = vadd.f32 0.0, %v1510
      %v1512 = vpop.f32.mrb[0].mxu0
      %1513 = vmatprep.mubr.f32.mxu0 0.0
      %1514 = vmatmul.mubr.f32.gmra.mrb[0].mxu0 %v1007
      %v1515 = vpop.f32.mrb[0].mxu0
      %v1516 = vadd.f32 0.0, %v1515
      %v1517 = vpop.f32.mrb[0].mxu0
      %1518 = vmatprep.mubr.f32.mxu0 0.0
      %1519 = vmatmul.mubr.f32.gmra.mrb[0].mxu0 %v1010
      %v1520 = vpop.f32.mrb[0].mxu0
      %v1521 = vadd.f32 0.0, %v1520
      %v1522 = vpop.f32.mrb[0].mxu0
      %1523 = vmatprep.mubr.f32.mxu0 0.0
      %1524 = vmatmul.mubr.f32.gmra.mrb[0].mxu0 %v1013
      %v1525 = vpop.f32.mrb[0].mxu0
      %v1526 = vadd.f32 0.0, %v1525
      %v1527 = vpop.f32.mrb[0].mxu0
      %1528 = vmatprep.mubr.f32.mxu0 0.0
      %1529 = vmatmul.mubr.f32.gmra.mrb[0].mxu0 %v1016
      %v1530 = vpop.f32.mrb[0].mxu0
      %v1531 = vadd.f32 0.0, %v1530
      %v1532 = vpop.f32.mrb[0].mxu0
      %1533 = vmatprep.mubr.f32.mxu0 0.0
      %1534 = vmatmul.mubr.f32.gmra.mrb[0].mxu0 %v1019
      %v1535 = vpop.f32.mrb[0].mxu0
      %v1536 = vadd.f32 0.0, %v1535
      %v1537 = vpop.f32.mrb[0].mxu0
      %1538 = vmatprep.mubr.f32.mxu0 0.0
      %1539 = vmatmul.mubr.f32.gmra.mrb[0].mxu0 %v1022
      %v1540 = vpop.f32.mrb[0].mxu0
      %v1541 = vadd.f32 0.0, %v1540
      %v1542 = vpop.f32.mrb[0].mxu0
      %1543 = vmatprep.mubr.f32.mxu0 0.0
      %1544 = vmatmul.mubr.f32.gmra.mrb[0].mxu0 %v1025
      %v1545 = vpop.f32.mrb[0].mxu0
      %v1546 = vadd.f32 0.0, %v1545
      %v1547 = vpop.f32.mrb[0].mxu0
      %1548 = vmatprep.mubr.f32.mxu0 0.0
      %1549 = vmatmul.mubr.f32.gmra.mrb[0].mxu0 %v1028
      %v1550 = vpop.f32.mrb[0].mxu0
      %v1551 = vadd.f32 0.0, %v1550
      %v1552 = vpop.f32.mrb[0].mxu0
      %1553 = vmatprep.mubr.f32.mxu0 0.0
      %1554 = vmatmul.mubr.f32.gmra.mrb[0].mxu0 %v1031
      %v1555 = vpop.f32.mrb[0].mxu0
      %v1556 = vadd.f32 0.0, %v1555
      %v1557 = vpop.f32.mrb[0].mxu0
      %1558 = vmatprep.mubr.f32.mxu0 0.0
      %1559 = vmatmul.mubr.f32.gmra.mrb[0].mxu0 %v1034
      %v1560 = vpop.f32.mrb[0].mxu0
      %v1561 = vadd.f32 0.0, %v1560
      %v1562 = vpop.f32.mrb[0].mxu0
      %1563 = vmatprep.mubr.f32.mxu0 0.0
      %1564 = vmatmul.mubr.f32.gmra.mrb[0].mxu0 %v1037
      %v1565 = vpop.f32.mrb[0].mxu0
      %v1566 = vadd.f32 0.0, %v1565
      %v1567 = vpop.f32.mrb[0].mxu0
      %1568 = vmatprep.mubr.f32.mxu0 0.0
      %1569 = vmatmul.mubr.f32.gmra.mrb[0].mxu0 %v1040
      %v1570 = vpop.f32.mrb[0].mxu0
      %v1571 = vadd.f32 0.0, %v1570
      %v1572 = vpop.f32.mrb[0].mxu0
      %1573 = vmatprep.mubr.f32.mxu0 0.0
      %1574 = vmatmul.mubr.f32.gmra.mrb[0].mxu0 %v1043
      %v1575 = vpop.f32.mrb[0].mxu0
      %v1576 = vadd.f32 0.0, %v1575
      %v1577 = vpop.f32.mrb[0].mxu0
      %1578 = vmatprep.mubr.f32.mxu0 0.0
      %1579 = vmatmul.mubr.f32.gmra.mrb[0].mxu0 %v1046
      %v1580 = vpop.f32.mrb[0].mxu0
      %v1581 = vadd.f32 0.0, %v1580
      %v1582 = vpop.f32.mrb[0].mxu0
      %1583 = vmatprep.mubr.f32.mxu0 0.0
      %1584 = vmatmul.mubr.f32.gmra.mrb[0].mxu0 %v1049
      %v1585 = vpop.f32.mrb[0].mxu0
      %v1586 = vadd.f32 0.0, %v1585
      %v1587 = vpop.f32.mrb[0].mxu0
      %1588 = vmatprep.mubr.f32.mxu0 0.0
      %1589 = vmatmul.mubr.f32.gmra.mrb[0].mxu0 %v1052
      %v1590 = vpop.f32.mrb[0].mxu0
      %v1591 = vadd.f32 0.0, %v1590
      %v1592 = vpop.f32.mrb[0].mxu0
      %1593 = vmatprep.mubr.f32.mxu0 0.0
      %1594 = vmatmul.mubr.f32.gmra.mrb[0].mxu0 %v1055
      %v1595 = vpop.f32.mrb[0].mxu0
      %v1596 = vadd.f32 0.0, %v1595
      %v1597 = vpop.f32.mrb[0].mxu0
      %1598 = vmatprep.mubr.f32.mxu0 0.0
      %1599 = vmatmul.mubr.f32.gmra.mrb[0].mxu0 %v1058
      %v1600 = vpop.f32.mrb[0].mxu0
      %v1601 = vadd.f32 0.0, %v1600
      %v1602 = vpop.f32.mrb[0].mxu0
      %1603 = vmatprep.mubr.f32.mxu0 0.0
      %1604 = vmatmul.mubr.f32.gmra.mrb[0].mxu0 %v1061
      %v1605 = vpop.f32.mrb[0].mxu0
      %v1606 = vadd.f32 0.0, %v1605
      %v1607 = vpop.f32.mrb[0].mxu0
      %1608 = vmatprep.mubr.f32.mxu0 0.0
      %1609 = vmatmul.mubr.f32.gmra.mrb[0].mxu0 %v1064
      %v1610 = vpop.f32.mrb[0].mxu0
      %v1611 = vadd.f32 0.0, %v1610
      %v1612 = vpop.f32.mrb[0].mxu0
      %1613 = vdwg.mxu0
      %v1614 = vld [vmem:[#allocation2] sm:$0xff]
      %v1615 = vld [vmem:[#allocation2 + $0x8] sm:$0xff]
      %v1616 = vld [vmem:[#allocation2 + $0x10] sm:$0xff]
      %v1617 = vld [vmem:[#allocation2 + $0x18] sm:$0xff]
      %v1618 = vld [vmem:[#allocation2 + $0x20] sm:$0xff]
      %v1619 = vld [vmem:[#allocation2 + $0x28] sm:$0xff]
      %v1620 = vld [vmem:[#allocation2 + $0x30] sm:$0xff]
      %v1621 = vld [vmem:[#allocation2 + $0x38] sm:$0xff]
      %v1622 = vld [vmem:[#allocation2 + $0x40] sm:$0xff]
      %v1623 = vld [vmem:[#allocation2 + $0x48] sm:$0xff]
      %v1624 = vld [vmem:[#allocation2 + $0x50] sm:$0xff]
      %v1625 = vld [vmem:[#allocation2 + $0x58] sm:$0xff]
      %v1626 = vld [vmem:[#allocation2 + $0x60] sm:$0xff]
      %v1627 = vld [vmem:[#allocation2 + $0x68] sm:$0xff]
      %v1628 = vld [vmem:[#allocation2 + $0x70] sm:$0xff]
      %v1629 = vld [vmem:[#allocation2 + $0x78] sm:$0xff]
      %v1630 = vld [vmem:[#allocation2 + $0x80] sm:$0xff]
      %v1631 = vld [vmem:[#allocation2 + $0x88] sm:$0xff]
      %v1632 = vld [vmem:[#allocation2 + $0x90] sm:$0xff]
      %v1633 = vld [vmem:[#allocation2 + $0x98] sm:$0xff]
      %v1634 = vld [vmem:[#allocation2 + $0xa0] sm:$0xff]
      %v1635 = vld [vmem:[#allocation2 + $0xa8] sm:$0xff]
      %v1636 = vld [vmem:[#allocation2 + $0xb0] sm:$0xff]
      %v1637 = vld [vmem:[#allocation2 + $0xb8] sm:$0xff]
      %v1638 = vld [vmem:[#allocation2 + $0xc0] sm:$0xff]
      %v1639 = vld [vmem:[#allocation2 + $0xc8] sm:$0xff]
      %v1640 = vld [vmem:[#allocation2 + $0xd0] sm:$0xff]
      %v1641 = vld [vmem:[#allocation2 + $0xd8] sm:$0xff]
      %v1642 = vld [vmem:[#allocation2 + $0xe0] sm:$0xff]
      %v1643 = vld [vmem:[#allocation2 + $0xe8] sm:$0xff]
      %v1644 = vld [vmem:[#allocation2 + $0xf0] sm:$0xff]
      %v1645 = vld [vmem:[#allocation2 + $0xf8] sm:$0xff]
      %v1646 = vadd.f32 %v1614, %v1456
      %v1647 = vadd.f32 %v1615, %v1461
      %v1648 = vadd.f32 %v1616, %v1466
      %v1649 = vadd.f32 %v1617, %v1471
      %v1650 = vadd.f32 %v1618, %v1476
      %v1651 = vadd.f32 %v1619, %v1481
      %v1652 = vadd.f32 %v1620, %v1486
      %v1653 = vadd.f32 %v1621, %v1491
      %v1654 = vadd.f32 %v1622, %v1496
      %v1655 = vadd.f32 %v1623, %v1501
      %v1656 = vadd.f32 %v1624, %v1506
      %v1657 = vadd.f32 %v1625, %v1511
      %v1658 = vadd.f32 %v1626, %v1516
      %v1659 = vadd.f32 %v1627, %v1521
      %v1660 = vadd.f32 %v1628, %v1526
      %v1661 = vadd.f32 %v1629, %v1531
      %v1662 = vadd.f32 %v1630, %v1536
      %v1663 = vadd.f32 %v1631, %v1541
      %v1664 = vadd.f32 %v1632, %v1546
      %v1665 = vadd.f32 %v1633, %v1551
      %v1666 = vadd.f32 %v1634, %v1556
      %v1667 = vadd.f32 %v1635, %v1561
      %v1668 = vadd.f32 %v1636, %v1566
      %v1669 = vadd.f32 %v1637, %v1571
      %v1670 = vadd.f32 %v1638, %v1576
      %v1671 = vadd.f32 %v1639, %v1581
      %v1672 = vadd.f32 %v1640, %v1586
      %v1673 = vadd.f32 %v1641, %v1591
      %v1674 = vadd.f32 %v1642, %v1596
      %v1675 = vadd.f32 %v1643, %v1601
      %v1676 = vadd.f32 %v1644, %v1606
      %v1677 = vadd.f32 %v1645, %v1611
      %1678 = vst.msk [vmem:[#allocation2] sm:$0xff] %vm412, %v1646
      %1679 = vst.msk [vmem:[#allocation2 + $0x8] sm:$0xff] %vm412, %v1647
      %1680 = vst.msk [vmem:[#allocation2 + $0x10] sm:$0xff] %vm412, %v1648
      %1681 = vst.msk [vmem:[#allocation2 + $0x18] sm:$0xff] %vm412, %v1649
      %1682 = vst.msk [vmem:[#allocation2 + $0x20] sm:$0xff] %vm412, %v1650
      %1683 = vst.msk [vmem:[#allocation2 + $0x28] sm:$0xff] %vm412, %v1651
      %1684 = vst.msk [vmem:[#allocation2 + $0x30] sm:$0xff] %vm412, %v1652
      %1685 = vst.msk [vmem:[#allocation2 + $0x38] sm:$0xff] %vm412, %v1653
      %1686 = vst.msk [vmem:[#allocation2 + $0x40] sm:$0xff] %vm412, %v1654
      %1687 = vst.msk [vmem:[#allocation2 + $0x48] sm:$0xff] %vm412, %v1655
      %1688 = vst.msk [vmem:[#allocation2 + $0x50] sm:$0xff] %vm412, %v1656
      %1689 = vst.msk [vmem:[#allocation2 + $0x58] sm:$0xff] %vm412, %v1657
      %1690 = vst.msk [vmem:[#allocation2 + $0x60] sm:$0xff] %vm412, %v1658
      %1691 = vst.msk [vmem:[#allocation2 + $0x68] sm:$0xff] %vm412, %v1659
      %1692 = vst.msk [vmem:[#allocation2 + $0x70] sm:$0xff] %vm412, %v1660
      %1693 = vst.msk [vmem:[#allocation2 + $0x78] sm:$0xff] %vm412, %v1661
      %1694 = vst.msk [vmem:[#allocation2 + $0x80] sm:$0xff] %vm412, %v1662
      %1695 = vst.msk [vmem:[#allocation2 + $0x88] sm:$0xff] %vm412, %v1663
      %1696 = vst.msk [vmem:[#allocation2 + $0x90] sm:$0xff] %vm412, %v1664
      %1697 = vst.msk [vmem:[#allocation2 + $0x98] sm:$0xff] %vm412, %v1665
      %1698 = vst.msk [vmem:[#allocation2 + $0xa0] sm:$0xff] %vm412, %v1666
      %1699 = vst.msk [vmem:[#allocation2 + $0xa8] sm:$0xff] %vm412, %v1667
      %1700 = vst.msk [vmem:[#allocation2 + $0xb0] sm:$0xff] %vm412, %v1668
      %1701 = vst.msk [vmem:[#allocation2 + $0xb8] sm:$0xff] %vm412, %v1669
      %1702 = vst.msk [vmem:[#allocation2 + $0xc0] sm:$0xff] %vm412, %v1670
      %1703 = vst.msk [vmem:[#allocation2 + $0xc8] sm:$0xff] %vm412, %v1671
      %1704 = vst.msk [vmem:[#allocation2 + $0xd0] sm:$0xff] %vm412, %v1672
      %1705 = vst.msk [vmem:[#allocation2 + $0xd8] sm:$0xff] %vm412, %v1673
      %1706 = vst.msk [vmem:[#allocation2 + $0xe0] sm:$0xff] %vm412, %v1674
      %1707 = vst.msk [vmem:[#allocation2 + $0xe8] sm:$0xff] %vm412, %v1675
      %1708 = vst.msk [vmem:[#allocation2 + $0xf0] sm:$0xff] %vm412, %v1676
      %1709 = vst.msk [vmem:[#allocation2 + $0xf8] sm:$0xff] %vm412, %v1677
      %s1710 = scalar_lea.vmem %s3, 32
      %v1711 = vld [vmem:[%s1710] sm:$0xff]
      %v1712 = vld [vmem:[%s1710 + $0x8] sm:$0xf]
      %v1714 = vsel %vm1066, %v1712, 0
      %1716 = vmatprep.subr.mxu0 0.0
      %1717 = vmatpush1.msra.mxu0 %v1711
      %1718 = vmatprep.subr.mxu0 0.0
      %1719 = vmatpush1.msra.mxu0 %v1714
      %1720 = vmatprep.subr.mxu0 0.0
      %1721 = vmatpush1.msra.mxu0 0.0
      %1722 = vmatprep.subr.mxu0 0.0
      %1723 = vmatpush1.msra.mxu0 0.0
      %1724 = vmatprep.subr.mxu0 0.0
      %1725 = vmatpush1.msra.mxu0 0.0
      %1726 = vmatprep.subr.mxu0 0.0
      %1727 = vmatpush1.msra.mxu0 0.0
      %1728 = vmatprep.subr.mxu0 0.0
      %1729 = vmatpush1.msra.mxu0 0.0
      %1730 = vmatprep.subr.mxu0 0.0
      %1731 = vmatpush1.msra.mxu0 0.0
      %1732 = vmatprep.subr.mxu0 0.0
      %1733 = vmatpush1.msra.mxu0 0.0
      %1734 = vmatprep.subr.mxu0 0.0
      %1735 = vmatpush1.msra.mxu0 0.0
      %1736 = vmatprep.subr.mxu0 0.0
      %1737 = vmatpush1.msra.mxu0 0.0
      %1738 = vmatprep.subr.mxu0 0.0
      %1739 = vmatpush1.msra.mxu0 0.0
      %1740 = vmatprep.subr.mxu0 0.0
      %1741 = vmatpush1.msra.mxu0 0.0
      %1742 = vmatprep.subr.mxu0 0.0
      %1743 = vmatpush1.msra.mxu0 0.0
      %1744 = vmatprep.subr.mxu0 0.0
      %1745 = vmatpush1.msra.mxu0 0.0
      %1746 = vmatprep.subr.mxu0 0.0
      %1747 = vmatpush1.msra.mxu0 0.0
      %1748 = vmatprep.subr.mxu0 0.0
      %1749 = vmatpush1.msra.mxu0 0.0
      %1750 = vmatprep.subr.mxu0 0.0
      %1751 = vmatpush1.msra.mxu0 0.0
      %1752 = vmatprep.subr.mxu0 0.0
      %1753 = vmatpush1.msra.mxu0 0.0
      %1754 = vmatprep.subr.mxu0 0.0
      %1755 = vmatpush1.msra.mxu0 0.0
      %1756 = vmatprep.subr.mxu0 0.0
      %1757 = vmatpush1.msra.mxu0 0.0
      %1758 = vmatprep.subr.mxu0 0.0
      %1759 = vmatpush1.msra.mxu0 0.0
      %1760 = vmatprep.subr.mxu0 0.0
      %1761 = vmatpush1.msra.mxu0 0.0
      %1762 = vmatprep.subr.mxu0 0.0
      %1763 = vmatpush1.msra.mxu0 0.0
      %1764 = vmatprep.subr.mxu0 0.0
      %1765 = vmatpush1.msra.mxu0 0.0
      %1766 = vmatprep.subr.mxu0 0.0
      %1767 = vmatpush1.msra.mxu0 0.0
      %1768 = vmatprep.subr.mxu0 0.0
      %1769 = vmatpush1.msra.mxu0 0.0
      %1770 = vmatprep.subr.mxu0 0.0
      %1771 = vmatpush1.msra.mxu0 0.0
      %1772 = vmatprep.subr.mxu0 0.0
      %1773 = vmatpush1.msra.mxu0 0.0
      %1774 = vmatprep.subr.mxu0 0.0
      %1775 = vmatpush1.msra.mxu0 0.0
      %1776 = vmatprep.subr.mxu0 0.0
      %1777 = vmatpush1.msra.mxu0 0.0
      %1778 = vmatprep.subr.mxu0 0.0
      %1779 = vmatpush1.msra.mxu0 0.0
      %1780 = vmatprep.mubr.f32.mxu0 0.0
      %1781 = vmatmul.mubr.f32.gmra.mrb[0].mxu0 %v971
      %v1782 = vpop.f32.mrb[0].mxu0
      %v1783 = vpop.f32.mrb[0].mxu0
      %1784 = vmatprep.mubr.f32.mxu0 0.0
      %1785 = vmatmul.mubr.f32.gmra.mrb[0].mxu0 %v974
      %v1786 = vpop.f32.mrb[0].mxu0
      %v1787 = vpop.f32.mrb[0].mxu0
      %1788 = vmatprep.mubr.f32.mxu0 0.0
      %1789 = vmatmul.mubr.f32.gmra.mrb[0].mxu0 %v977
      %v1790 = vpop.f32.mrb[0].mxu0
      %v1791 = vadd.f32 0.0, %v1790
      %v1792 = vpop.f32.mrb[0].mxu0
      %1793 = vmatprep.mubr.f32.mxu0 0.0
      %1794 = vmatmul.mubr.f32.gmra.mrb[0].mxu0 %v980
      %v1795 = vpop.f32.mrb[0].mxu0
      %v1796 = vadd.f32 0.0, %v1795
      %v1797 = vpop.f32.mrb[0].mxu0
      %1798 = vmatprep.mubr.f32.mxu0 0.0
      %1799 = vmatmul.mubr.f32.gmra.mrb[0].mxu0 %v983
      %v1800 = vpop.f32.mrb[0].mxu0
      %v1801 = vadd.f32 0.0, %v1800
      %v1802 = vpop.f32.mrb[0].mxu0
      %1803 = vmatprep.mubr.f32.mxu0 0.0
      %1804 = vmatmul.mubr.f32.gmra.mrb[0].mxu0 %v986
      %v1805 = vpop.f32.mrb[0].mxu0
      %v1806 = vadd.f32 0.0, %v1805
      %v1807 = vpop.f32.mrb[0].mxu0
      %1808 = vmatprep.mubr.f32.mxu0 0.0
      %1809 = vmatmul.mubr.f32.gmra.mrb[0].mxu0 %v989
      %v1810 = vpop.f32.mrb[0].mxu0
      %v1811 = vadd.f32 0.0, %v1810
      %v1812 = vpop.f32.mrb[0].mxu0
      %1813 = vmatprep.mubr.f32.mxu0 0.0
      %1814 = vmatmul.mubr.f32.gmra.mrb[0].mxu0 %v992
      %v1815 = vpop.f32.mrb[0].mxu0
      %v1816 = vadd.f32 0.0, %v1815
      %v1817 = vpop.f32.mrb[0].mxu0
      %1818 = vmatprep.mubr.f32.mxu0 0.0
      %1819 = vmatmul.mubr.f32.gmra.mrb[0].mxu0 %v995
      %v1820 = vpop.f32.mrb[0].mxu0
      %v1821 = vadd.f32 0.0, %v1820
      %v1822 = vpop.f32.mrb[0].mxu0
      %1823 = vmatprep.mubr.f32.mxu0 0.0
      %1824 = vmatmul.mubr.f32.gmra.mrb[0].mxu0 %v998
      %v1825 = vpop.f32.mrb[0].mxu0
      %v1826 = vadd.f32 0.0, %v1825
      %v1827 = vpop.f32.mrb[0].mxu0
      %1828 = vmatprep.mubr.f32.mxu0 0.0
      %1829 = vmatmul.mubr.f32.gmra.mrb[0].mxu0 %v1001
      %v1830 = vpop.f32.mrb[0].mxu0
      %v1831 = vadd.f32 0.0, %v1830
      %v1832 = vpop.f32.mrb[0].mxu0
      %1833 = vmatprep.mubr.f32.mxu0 0.0
      %1834 = vmatmul.mubr.f32.gmra.mrb[0].mxu0 %v1004
      %v1835 = vpop.f32.mrb[0].mxu0
      %v1836 = vadd.f32 0.0, %v1835
      %v1837 = vpop.f32.mrb[0].mxu0
      %1838 = vmatprep.mubr.f32.mxu0 0.0
      %1839 = vmatmul.mubr.f32.gmra.mrb[0].mxu0 %v1007
      %v1840 = vpop.f32.mrb[0].mxu0
      %v1841 = vadd.f32 0.0, %v1840
      %v1842 = vpop.f32.mrb[0].mxu0
      %1843 = vmatprep.mubr.f32.mxu0 0.0
      %1844 = vmatmul.mubr.f32.gmra.mrb[0].mxu0 %v1010
      %v1845 = vpop.f32.mrb[0].mxu0
      %v1846 = vadd.f32 0.0, %v1845
      %v1847 = vpop.f32.mrb[0].mxu0
      %1848 = vmatprep.mubr.f32.mxu0 0.0
      %1849 = vmatmul.mubr.f32.gmra.mrb[0].mxu0 %v1013
      %v1850 = vpop.f32.mrb[0].mxu0
      %v1851 = vadd.f32 0.0, %v1850
      %v1852 = vpop.f32.mrb[0].mxu0
      %1853 = vmatprep.mubr.f32.mxu0 0.0
      %1854 = vmatmul.mubr.f32.gmra.mrb[0].mxu0 %v1016
      %v1855 = vpop.f32.mrb[0].mxu0
      %v1856 = vadd.f32 0.0, %v1855
      %v1857 = vpop.f32.mrb[0].mxu0
      %1858 = vmatprep.mubr.f32.mxu0 0.0
      %1859 = vmatmul.mubr.f32.gmra.mrb[0].mxu0 %v1019
      %v1860 = vpop.f32.mrb[0].mxu0
      %v1861 = vadd.f32 0.0, %v1860
      %v1862 = vpop.f32.mrb[0].mxu0
      %1863 = vmatprep.mubr.f32.mxu0 0.0
      %1864 = vmatmul.mubr.f32.gmra.mrb[0].mxu0 %v1022
      %v1865 = vpop.f32.mrb[0].mxu0
      %v1866 = vadd.f32 0.0, %v1865
      %v1867 = vpop.f32.mrb[0].mxu0
      %1868 = vmatprep.mubr.f32.mxu0 0.0
      %1869 = vmatmul.mubr.f32.gmra.mrb[0].mxu0 %v1025
      %v1870 = vpop.f32.mrb[0].mxu0
      %v1871 = vadd.f32 0.0, %v1870
      %v1872 = vpop.f32.mrb[0].mxu0
      %1873 = vmatprep.mubr.f32.mxu0 0.0
      %1874 = vmatmul.mubr.f32.gmra.mrb[0].mxu0 %v1028
      %v1875 = vpop.f32.mrb[0].mxu0
      %v1876 = vadd.f32 0.0, %v1875
      %v1877 = vpop.f32.mrb[0].mxu0
      %1878 = vmatprep.mubr.f32.mxu0 0.0
      %1879 = vmatmul.mubr.f32.gmra.mrb[0].mxu0 %v1031
      %v1880 = vpop.f32.mrb[0].mxu0
      %v1881 = vadd.f32 0.0, %v1880
      %v1882 = vpop.f32.mrb[0].mxu0
      %1883 = vmatprep.mubr.f32.mxu0 0.0
      %1884 = vmatmul.mubr.f32.gmra.mrb[0].mxu0 %v1034
      %v1885 = vpop.f32.mrb[0].mxu0
      %v1886 = vadd.f32 0.0, %v1885
      %v1887 = vpop.f32.mrb[0].mxu0
      %1888 = vmatprep.mubr.f32.mxu0 0.0
      %1889 = vmatmul.mubr.f32.gmra.mrb[0].mxu0 %v1037
      %v1890 = vpop.f32.mrb[0].mxu0
      %v1891 = vadd.f32 0.0, %v1890
      %v1892 = vpop.f32.mrb[0].mxu0
      %1893 = vmatprep.mubr.f32.mxu0 0.0
      %1894 = vmatmul.mubr.f32.gmra.mrb[0].mxu0 %v1040
      %v1895 = vpop.f32.mrb[0].mxu0
      %v1896 = vadd.f32 0.0, %v1895
      %v1897 = vpop.f32.mrb[0].mxu0
      %1898 = vmatprep.mubr.f32.mxu0 0.0
      %1899 = vmatmul.mubr.f32.gmra.mrb[0].mxu0 %v1043
      %v1900 = vpop.f32.mrb[0].mxu0
      %v1901 = vadd.f32 0.0, %v1900
      %v1902 = vpop.f32.mrb[0].mxu0
      %1903 = vmatprep.mubr.f32.mxu0 0.0
      %1904 = vmatmul.mubr.f32.gmra.mrb[0].mxu0 %v1046
      %v1905 = vpop.f32.mrb[0].mxu0
      %v1906 = vadd.f32 0.0, %v1905
      %v1907 = vpop.f32.mrb[0].mxu0
      %1908 = vmatprep.mubr.f32.mxu0 0.0
      %1909 = vmatmul.mubr.f32.gmra.mrb[0].mxu0 %v1049
      %v1910 = vpop.f32.mrb[0].mxu0
      %v1911 = vadd.f32 0.0, %v1910
      %v1912 = vpop.f32.mrb[0].mxu0
      %1913 = vmatprep.mubr.f32.mxu0 0.0
      %1914 = vmatmul.mubr.f32.gmra.mrb[0].mxu0 %v1052
      %v1915 = vpop.f32.mrb[0].mxu0
      %v1916 = vadd.f32 0.0, %v1915
      %v1917 = vpop.f32.mrb[0].mxu0
      %1918 = vmatprep.mubr.f32.mxu0 0.0
      %1919 = vmatmul.mubr.f32.gmra.mrb[0].mxu0 %v1055
      %v1920 = vpop.f32.mrb[0].mxu0
      %v1921 = vadd.f32 0.0, %v1920
      %v1922 = vpop.f32.mrb[0].mxu0
      %1923 = vmatprep.mubr.f32.mxu0 0.0
      %1924 = vmatmul.mubr.f32.gmra.mrb[0].mxu0 %v1058
      %v1925 = vpop.f32.mrb[0].mxu0
      %v1926 = vadd.f32 0.0, %v1925
      %v1927 = vpop.f32.mrb[0].mxu0
      %1928 = vmatprep.mubr.f32.mxu0 0.0
      %1929 = vmatmul.mubr.f32.gmra.mrb[0].mxu0 %v1061
      %v1930 = vpop.f32.mrb[0].mxu0
      %v1931 = vadd.f32 0.0, %v1930
      %v1932 = vpop.f32.mrb[0].mxu0
      %1933 = vmatprep.mubr.f32.mxu0 0.0
      %1934 = vmatmul.mubr.f32.gmra.mrb[0].mxu0 %v1064
      %v1935 = vpop.f32.mrb[0].mxu0
      %v1936 = vadd.f32 0.0, %v1935
      %v1937 = vpop.f32.mrb[0].mxu0
      %1938 = vdwg.mxu0
      %v1939 = vld [vmem:[#allocation2] sm:$0xff]
      %v1940 = vld [vmem:[#allocation2 + $0x8] sm:$0xff]
      %v1941 = vld [vmem:[#allocation2 + $0x10] sm:$0xff]
      %v1942 = vld [vmem:[#allocation2 + $0x18] sm:$0xff]
      %v1943 = vld [vmem:[#allocation2 + $0x20] sm:$0xff]
      %v1944 = vld [vmem:[#allocation2 + $0x28] sm:$0xff]
      %v1945 = vld [vmem:[#allocation2 + $0x30] sm:$0xff]
      %v1946 = vld [vmem:[#allocation2 + $0x38] sm:$0xff]
      %v1947 = vld [vmem:[#allocation2 + $0x40] sm:$0xff]
      %v1948 = vld [vmem:[#allocation2 + $0x48] sm:$0xff]
      %v1949 = vld [vmem:[#allocation2 + $0x50] sm:$0xff]
      %v1950 = vld [vmem:[#allocation2 + $0x58] sm:$0xff]
      %v1951 = vld [vmem:[#allocation2 + $0x60] sm:$0xff]
      %v1952 = vld [vmem:[#allocation2 + $0x68] sm:$0xff]
      %v1953 = vld [vmem:[#allocation2 + $0x70] sm:$0xff]
      %v1954 = vld [vmem:[#allocation2 + $0x78] sm:$0xff]
      %v1955 = vld [vmem:[#allocation2 + $0x80] sm:$0xff]
      %v1956 = vld [vmem:[#allocation2 + $0x88] sm:$0xff]
      %v1957 = vld [vmem:[#allocation2 + $0x90] sm:$0xff]
      %v1958 = vld [vmem:[#allocation2 + $0x98] sm:$0xff]
      %v1959 = vld [vmem:[#allocation2 + $0xa0] sm:$0xff]
      %v1960 = vld [vmem:[#allocation2 + $0xa8] sm:$0xff]
      %v1961 = vld [vmem:[#allocation2 + $0xb0] sm:$0xff]
      %v1962 = vld [vmem:[#allocation2 + $0xb8] sm:$0xff]
      %v1963 = vld [vmem:[#allocation2 + $0xc0] sm:$0xff]
      %v1964 = vld [vmem:[#allocation2 + $0xc8] sm:$0xff]
      %v1965 = vld [vmem:[#allocation2 + $0xd0] sm:$0xff]
      %v1966 = vld [vmem:[#allocation2 + $0xd8] sm:$0xff]
      %v1967 = vld [vmem:[#allocation2 + $0xe0] sm:$0xff]
      %v1968 = vld [vmem:[#allocation2 + $0xe8] sm:$0xff]
      %v1969 = vadd.f32 %v1939, %v1791
      %v1970 = vadd.f32 %v1940, %v1796
      %v1971 = vadd.f32 %v1941, %v1801
      %v1972 = vadd.f32 %v1942, %v1806
      %v1973 = vadd.f32 %v1943, %v1811
      %v1974 = vadd.f32 %v1944, %v1816
      %v1975 = vadd.f32 %v1945, %v1821
      %v1976 = vadd.f32 %v1946, %v1826
      %v1977 = vadd.f32 %v1947, %v1831
      %v1978 = vadd.f32 %v1948, %v1836
      %v1979 = vadd.f32 %v1949, %v1841
      %v1980 = vadd.f32 %v1950, %v1846
      %v1981 = vadd.f32 %v1951, %v1851
      %v1982 = vadd.f32 %v1952, %v1856
      %v1983 = vadd.f32 %v1953, %v1861
      %v1984 = vadd.f32 %v1954, %v1866
      %v1985 = vadd.f32 %v1955, %v1871
      %v1986 = vadd.f32 %v1956, %v1876
      %v1987 = vadd.f32 %v1957, %v1881
      %v1988 = vadd.f32 %v1958, %v1886
      %v1989 = vadd.f32 %v1959, %v1891
      %v1990 = vadd.f32 %v1960, %v1896
      %v1991 = vadd.f32 %v1961, %v1901
      %v1992 = vadd.f32 %v1962, %v1906
      %v1993 = vadd.f32 %v1963, %v1911
      %v1994 = vadd.f32 %v1964, %v1916
      %v1995 = vadd.f32 %v1965, %v1921
      %v1996 = vadd.f32 %v1966, %v1926
      %v1997 = vadd.f32 %v1967, %v1931
      %v1998 = vadd.f32 %v1968, %v1936
      %1999 = vst.msk [vmem:[#allocation2] sm:$0xff] %vm412, %v1969
      %2000 = vst.msk [vmem:[#allocation2 + $0x8] sm:$0xff] %vm412, %v1970
      %2001 = vst.msk [vmem:[#allocation2 + $0x10] sm:$0xff] %vm412, %v1971
      %2002 = vst.msk [vmem:[#allocation2 + $0x18] sm:$0xff] %vm412, %v1972
      %2003 = vst.msk [vmem:[#allocation2 + $0x20] sm:$0xff] %vm412, %v1973
      %2004 = vst.msk [vmem:[#allocation2 + $0x28] sm:$0xff] %vm412, %v1974
      %2005 = vst.msk [vmem:[#allocation2 + $0x30] sm:$0xff] %vm412, %v1975
      %2006 = vst.msk [vmem:[#allocation2 + $0x38] sm:$0xff] %vm412, %v1976
      %2007 = vst.msk [vmem:[#allocation2 + $0x40] sm:$0xff] %vm412, %v1977
      %2008 = vst.msk [vmem:[#allocation2 + $0x48] sm:$0xff] %vm412, %v1978
      %2009 = vst.msk [vmem:[#allocation2 + $0x50] sm:$0xff] %vm412, %v1979
      %2010 = vst.msk [vmem:[#allocation2 + $0x58] sm:$0xff] %vm412, %v1980
      %2011 = vst.msk [vmem:[#allocation2 + $0x60] sm:$0xff] %vm412, %v1981
      %2012 = vst.msk [vmem:[#allocation2 + $0x68] sm:$0xff] %vm412, %v1982
      %2013 = vst.msk [vmem:[#allocation2 + $0x70] sm:$0xff] %vm412, %v1983
      %2014 = vst.msk [vmem:[#allocation2 + $0x78] sm:$0xff] %vm412, %v1984
      %2015 = vst.msk [vmem:[#allocation2 + $0x80] sm:$0xff] %vm412, %v1985
      %2016 = vst.msk [vmem:[#allocation2 + $0x88] sm:$0xff] %vm412, %v1986
      %2017 = vst.msk [vmem:[#allocation2 + $0x90] sm:$0xff] %vm412, %v1987
      %2018 = vst.msk [vmem:[#allocation2 + $0x98] sm:$0xff] %vm412, %v1988
      %2019 = vst.msk [vmem:[#allocation2 + $0xa0] sm:$0xff] %vm412, %v1989
      %2020 = vst.msk [vmem:[#allocation2 + $0xa8] sm:$0xff] %vm412, %v1990
      %2021 = vst.msk [vmem:[#allocation2 + $0xb0] sm:$0xff] %vm412, %v1991
      %2022 = vst.msk [vmem:[#allocation2 + $0xb8] sm:$0xff] %vm412, %v1992
      %2023 = vst.msk [vmem:[#allocation2 + $0xc0] sm:$0xff] %vm412, %v1993
      %2024 = vst.msk [vmem:[#allocation2 + $0xc8] sm:$0xff] %vm412, %v1994
      %2025 = vst.msk [vmem:[#allocation2 + $0xd0] sm:$0xff] %vm412, %v1995
      %2026 = vst.msk [vmem:[#allocation2 + $0xd8] sm:$0xff] %vm412, %v1996
      %2027 = vst.msk [vmem:[#allocation2 + $0xe0] sm:$0xff] %vm412, %v1997
      %2028 = vst.msk [vmem:[#allocation2 + $0xe8] sm:$0xff] %vm412, %v1998
      %v2029 = vld [vmem:[#allocation2] sm:$0xff]
      %v2030 = vld [vmem:[#allocation2 + $0x8] sm:$0xff]
      %v2031 = vld [vmem:[#allocation2 + $0x10] sm:$0xff]
      %v2032 = vld [vmem:[#allocation2 + $0x18] sm:$0xff]
      %v2033 = vld [vmem:[#allocation2 + $0x20] sm:$0xff]
      %v2034 = vld [vmem:[#allocation2 + $0x28] sm:$0xff]
      %v2035 = vld [vmem:[#allocation2 + $0x30] sm:$0xff]
      %v2036 = vld [vmem:[#allocation2 + $0x38] sm:$0xff]
      %v2037 = vld [vmem:[#allocation2 + $0x40] sm:$0xff]
      %v2038 = vld [vmem:[#allocation2 + $0x48] sm:$0xff]
      %v2039 = vld [vmem:[#allocation2 + $0x50] sm:$0xff]
      %v2040 = vld [vmem:[#allocation2 + $0x58] sm:$0xff]
      %v2041 = vld [vmem:[#allocation2 + $0x60] sm:$0xff]
      %v2042 = vld [vmem:[#allocation2 + $0x68] sm:$0xff]
      %v2043 = vld [vmem:[#allocation2 + $0x70] sm:$0xff]
      %v2044 = vld [vmem:[#allocation2 + $0x78] sm:$0xff]
      %v2045 = vld [vmem:[#allocation2 + $0x80] sm:$0xff]
      %v2046 = vld [vmem:[#allocation2 + $0x88] sm:$0xff]
      %v2047 = vld [vmem:[#allocation2 + $0x90] sm:$0xff]
      %v2048 = vld [vmem:[#allocation2 + $0x98] sm:$0xff]
      %v2049 = vld [vmem:[#allocation2 + $0xa0] sm:$0xff]
      %v2050 = vld [vmem:[#allocation2 + $0xa8] sm:$0xff]
      %v2051 = vld [vmem:[#allocation2 + $0xb0] sm:$0xff]
      %v2052 = vld [vmem:[#allocation2 + $0xb8] sm:$0xff]
      %v2053 = vld [vmem:[#allocation2 + $0xc0] sm:$0xff]
      %v2054 = vld [vmem:[#allocation2 + $0xc8] sm:$0xff]
      %v2055 = vld [vmem:[#allocation2 + $0xd0] sm:$0xff]
      %v2056 = vld [vmem:[#allocation2 + $0xd8] sm:$0xff]
      %v2057 = vld [vmem:[#allocation2 + $0xe0] sm:$0xff]
      %v2058 = vld [vmem:[#allocation2 + $0xe8] sm:$0xff]
      %v2059 = vld [vmem:[#allocation2 + $0xf0] sm:$0xff]
      %v2060 = vld [vmem:[#allocation2 + $0xf8] sm:$0xff]
      %2061 = vst.msk [vmem:[%s258] sm:$0xff] %vm412, %v2029
      %2062 = vst.msk [vmem:[%s258 + $0x8] sm:$0xff] %vm412, %v2030
      %2063 = vst.msk [vmem:[%s258 + $0x10] sm:$0xff] %vm412, %v2031
      %2064 = vst.msk [vmem:[%s258 + $0x18] sm:$0xff] %vm412, %v2032
      %2065 = vst.msk [vmem:[%s258 + $0x20] sm:$0xff] %vm412, %v2033
      %2066 = vst.msk [vmem:[%s258 + $0x28] sm:$0xff] %vm412, %v2034
      %2067 = vst.msk [vmem:[%s258 + $0x30] sm:$0xff] %vm412, %v2035
      %2068 = vst.msk [vmem:[%s258 + $0x38] sm:$0xff] %vm412, %v2036
      %2069 = vst.msk [vmem:[%s258 + $0x40] sm:$0xff] %vm412, %v2037
      %2070 = vst.msk [vmem:[%s258 + $0x48] sm:$0xff] %vm412, %v2038
      %2071 = vst.msk [vmem:[%s258 + $0x50] sm:$0xff] %vm412, %v2039
      %2072 = vst.msk [vmem:[%s258 + $0x58] sm:$0xff] %vm412, %v2040
      %2073 = vst.msk [vmem:[%s258 + $0x60] sm:$0xff] %vm412, %v2041
      %2074 = vst.msk [vmem:[%s258 + $0x68] sm:$0xff] %vm412, %v2042
      %2075 = vst.msk [vmem:[%s258 + $0x70] sm:$0xff] %vm412, %v2043
      %2076 = vst.msk [vmem:[%s258 + $0x78] sm:$0xff] %vm412, %v2044
      %2077 = vst.msk [vmem:[%s258 + $0x80] sm:$0xff] %vm412, %v2045
      %2078 = vst.msk [vmem:[%s258 + $0x88] sm:$0xff] %vm412, %v2046
      %2079 = vst.msk [vmem:[%s258 + $0x90] sm:$0xff] %vm412, %v2047
      %2080 = vst.msk [vmem:[%s258 + $0x98] sm:$0xff] %vm412, %v2048
      %2081 = vst.msk [vmem:[%s258 + $0xa0] sm:$0xff] %vm412, %v2049
      %2082 = vst.msk [vmem:[%s258 + $0xa8] sm:$0xff] %vm412, %v2050
      %2083 = vst.msk [vmem:[%s258 + $0xb0] sm:$0xff] %vm412, %v2051
      %2084 = vst.msk [vmem:[%s258 + $0xb8] sm:$0xff] %vm412, %v2052
      %2085 = vst.msk [vmem:[%s258 + $0xc0] sm:$0xff] %vm412, %v2053
      %2086 = vst.msk [vmem:[%s258 + $0xc8] sm:$0xff] %vm412, %v2054
      %2087 = vst.msk [vmem:[%s258 + $0xd0] sm:$0xff] %vm412, %v2055
      %2088 = vst.msk [vmem:[%s258 + $0xd8] sm:$0xff] %vm412, %v2056
      %2089 = vst.msk [vmem:[%s258 + $0xe0] sm:$0xff] %vm412, %v2057
      %2090 = vst.msk [vmem:[%s258 + $0xe8] sm:$0xff] %vm412, %v2058
      %2091 = vst.msk [vmem:[%s258 + $0xf0] sm:$0xff] %vm412, %v2059
      %2092 = vst.msk [vmem:[%s258 + $0xf8] sm:$0xff] %vm412, %v2060
      %v2093 = vsel %vm412, %v2029, 0.0
      %v2094 = vsel %vm412, %v2030, 0.0
      %v2095 = vadd.f32 %v2093, %v2094
      %v2096 = vsel %vm412, %v2031, 0.0
      %v2097 = vadd.f32 %v2095, %v2096
      %v2098 = vsel %vm412, %v2032, 0.0
      %v2099 = vadd.f32 %v2097, %v2098
      %v2100 = vsel %vm412, %v2033, 0.0
      %v2101 = vadd.f32 %v2099, %v2100
      %v2102 = vsel %vm412, %v2034, 0.0
      %v2103 = vadd.f32 %v2101, %v2102
      %v2104 = vsel %vm412, %v2035, 0.0
      %v2105 = vadd.f32 %v2103, %v2104
      %v2106 = vsel %vm412, %v2036, 0.0
      %v2107 = vadd.f32 %v2105, %v2106
      %v2108 = vsel %vm412, %v2037, 0.0
      %v2109 = vadd.f32 %v2107, %v2108
      %v2110 = vsel %vm412, %v2038, 0.0
      %v2111 = vadd.f32 %v2109, %v2110
      %v2112 = vsel %vm412, %v2039, 0.0
      %v2113 = vadd.f32 %v2111, %v2112
      %v2114 = vsel %vm412, %v2040, 0.0
      %v2115 = vadd.f32 %v2113, %v2114
      %v2116 = vsel %vm412, %v2041, 0.0
      %v2117 = vadd.f32 %v2115, %v2116
      %v2118 = vsel %vm412, %v2042, 0.0
      %v2119 = vadd.f32 %v2117, %v2118
      %v2120 = vsel %vm412, %v2043, 0.0
      %v2121 = vadd.f32 %v2119, %v2120
      %v2122 = vsel %vm412, %v2044, 0.0
      %v2123 = vadd.f32 %v2121, %v2122
      %v2124 = vsel %vm412, %v2045, 0.0
      %v2125 = vadd.f32 %v2123, %v2124
      %v2126 = vsel %vm412, %v2046, 0.0
      %v2127 = vadd.f32 %v2125, %v2126
      %v2128 = vsel %vm412, %v2047, 0.0
      %v2129 = vadd.f32 %v2127, %v2128
      %v2130 = vsel %vm412, %v2048, 0.0
      %v2131 = vadd.f32 %v2129, %v2130
      %v2132 = vsel %vm412, %v2049, 0.0
      %v2133 = vadd.f32 %v2131, %v2132
      %v2134 = vsel %vm412, %v2050, 0.0
      %v2135 = vadd.f32 %v2133, %v2134
      %v2136 = vsel %vm412, %v2051, 0.0
      %v2137 = vadd.f32 %v2135, %v2136
      %v2138 = vsel %vm412, %v2052, 0.0
      %v2139 = vadd.f32 %v2137, %v2138
      %v2140 = vsel %vm412, %v2053, 0.0
      %v2141 = vadd.f32 %v2139, %v2140
      %v2142 = vsel %vm412, %v2054, 0.0
      %v2143 = vadd.f32 %v2141, %v2142
      %v2144 = vsel %vm412, %v2055, 0.0
      %v2145 = vadd.f32 %v2143, %v2144
      %v2146 = vsel %vm412, %v2056, 0.0
      %v2147 = vadd.f32 %v2145, %v2146
      %v2148 = vsel %vm412, %v2057, 0.0
      %v2149 = vadd.f32 %v2147, %v2148
      %v2150 = vsel %vm412, %v2058, 0.0
      %v2151 = vadd.f32 %v2149, %v2150
      %v2152 = vsel %vm412, %v2059, 0.0
      %v2153 = vadd.f32 %v2151, %v2152
      %v2154 = vsel %vm412, %v2060, 0.0
      %v2155 = vadd.f32 %v2153, %v2154
      %v2156 = vrot.slane %v2155, 4
      %v2157 = vadd.f32 %v2155, %v2156
      %v2158 = vrot.slane %v2157, 2
      %v2159 = vadd.f32 %v2157, %v2158
      %v2160 = vrot.slane %v2159, 1
      %v2161 = vadd.f32 %v2159, %v2160
      %vm2162 = vcmask 57344
      %2163 = vst.msk [vmem:[%s262] sm:$0x1] %vm2162, %v2161
      %v2164 = vmul.f32 %v2029, %v2029
      %v2165 = vmul.f32 %v2030, %v2030
      %v2166 = vmul.f32 %v2031, %v2031
      %v2167 = vmul.f32 %v2032, %v2032
      %v2168 = vmul.f32 %v2033, %v2033
      %v2169 = vmul.f32 %v2034, %v2034
      %v2170 = vmul.f32 %v2035, %v2035
      %v2171 = vmul.f32 %v2036, %v2036
      %v2172 = vmul.f32 %v2037, %v2037
      %v2173 = vmul.f32 %v2038, %v2038
      %v2174 = vmul.f32 %v2039, %v2039
      %v2175 = vmul.f32 %v2040, %v2040
      %v2176 = vmul.f32 %v2041, %v2041
      %v2177 = vmul.f32 %v2042, %v2042
      %v2178 = vmul.f32 %v2043, %v2043
      %v2179 = vmul.f32 %v2044, %v2044
      %v2180 = vmul.f32 %v2045, %v2045
      %v2181 = vmul.f32 %v2046, %v2046
      %v2182 = vmul.f32 %v2047, %v2047
      %v2183 = vmul.f32 %v2048, %v2048
      %v2184 = vmul.f32 %v2049, %v2049
      %v2185 = vmul.f32 %v2050, %v2050
      %v2186 = vmul.f32 %v2051, %v2051
      %v2187 = vmul.f32 %v2052, %v2052
      %v2188 = vmul.f32 %v2053, %v2053
      %v2189 = vmul.f32 %v2054, %v2054
      %v2190 = vmul.f32 %v2055, %v2055
      %v2191 = vmul.f32 %v2056, %v2056
      %v2192 = vmul.f32 %v2057, %v2057
      %v2193 = vmul.f32 %v2058, %v2058
      %v2194 = vmul.f32 %v2059, %v2059
      %v2195 = vmul.f32 %v2060, %v2060
      %v2196 = vsel %vm412, %v2164, 0.0
      %v2197 = vsel %vm412, %v2165, 0.0
      %v2198 = vadd.f32 %v2196, %v2197
      %v2199 = vsel %vm412, %v2166, 0.0
      %v2200 = vadd.f32 %v2198, %v2199
      %v2201 = vsel %vm412, %v2167, 0.0
      %v2202 = vadd.f32 %v2200, %v2201
      %v2203 = vsel %vm412, %v2168, 0.0
      %v2204 = vadd.f32 %v2202, %v2203
      %v2205 = vsel %vm412, %v2169, 0.0
      %v2206 = vadd.f32 %v2204, %v2205
      %v2207 = vsel %vm412, %v2170, 0.0
      %v2208 = vadd.f32 %v2206, %v2207
      %v2209 = vsel %vm412, %v2171, 0.0
      %v2210 = vadd.f32 %v2208, %v2209
      %v2211 = vsel %vm412, %v2172, 0.0
      %v2212 = vadd.f32 %v2210, %v2211
      %v2213 = vsel %vm412, %v2173, 0.0
      %v2214 = vadd.f32 %v2212, %v2213
      %v2215 = vsel %vm412, %v2174, 0.0
      %v2216 = vadd.f32 %v2214, %v2215
      %v2217 = vsel %vm412, %v2175, 0.0
      %v2218 = vadd.f32 %v2216, %v2217
      %v2219 = vsel %vm412, %v2176, 0.0
      %v2220 = vadd.f32 %v2218, %v2219
      %v2221 = vsel %vm412, %v2177, 0.0
      %v2222 = vadd.f32 %v2220, %v2221
      %v2223 = vsel %vm412, %v2178, 0.0
      %v2224 = vadd.f32 %v2222, %v2223
      %v2225 = vsel %vm412, %v2179, 0.0
      %v2226 = vadd.f32 %v2224, %v2225
      %v2227 = vsel %vm412, %v2180, 0.0
      %v2228 = vadd.f32 %v2226, %v2227
      %v2229 = vsel %vm412, %v2181, 0.0
      %v2230 = vadd.f32 %v2228, %v2229
      %v2231 = vsel %vm412, %v2182, 0.0
      %v2232 = vadd.f32 %v2230, %v2231
      %v2233 = vsel %vm412, %v2183, 0.0
      %v2234 = vadd.f32 %v2232, %v2233
      %v2235 = vsel %vm412, %v2184, 0.0
      %v2236 = vadd.f32 %v2234, %v2235
      %v2237 = vsel %vm412, %v2185, 0.0
      %v2238 = vadd.f32 %v2236, %v2237
      %v2239 = vsel %vm412, %v2186, 0.0
      %v2240 = vadd.f32 %v2238, %v2239
      %v2241 = vsel %vm412, %v2187, 0.0
      %v2242 = vadd.f32 %v2240, %v2241
      %v2243 = vsel %vm412, %v2188, 0.0
      %v2244 = vadd.f32 %v2242, %v2243
      %v2245 = vsel %vm412, %v2189, 0.0
      %v2246 = vadd.f32 %v2244, %v2245
      %v2247 = vsel %vm412, %v2190, 0.0
      %v2248 = vadd.f32 %v2246, %v2247
      %v2249 = vsel %vm412, %v2191, 0.0
      %v2250 = vadd.f32 %v2248, %v2249
      %v2251 = vsel %vm412, %v2192, 0.0
      %v2252 = vadd.f32 %v2250, %v2251
      %v2253 = vsel %vm412, %v2193, 0.0
      %v2254 = vadd.f32 %v2252, %v2253
      %v2255 = vsel %vm412, %v2194, 0.0
      %v2256 = vadd.f32 %v2254, %v2255
      %v2257 = vsel %vm412, %v2195, 0.0
      %v2258 = vadd.f32 %v2256, %v2257
      %v2259 = vrot.slane %v2258, 4
      %v2260 = vadd.f32 %v2258, %v2259
      %v2261 = vrot.slane %v2260, 2
      %v2262 = vadd.f32 %v2260, %v2261
      %v2263 = vrot.slane %v2262, 1
      %v2264 = vadd.f32 %v2262, %v2263
      %2265 = vst.msk [vmem:[%s262 + $0x1] sm:$0x1] %vm2162, %v2264
      %p2266 = scmp.lt.s32.totalorder %s18, 1
      %s2267 = scalar_select %p2266, %s18, 1
      %s2268 = smul.addr %s2267, 32
      %s2269 = smul.addr %s2268, 8
      %s2270 = scalar_lea.vmem %s5, %s2269
      %p2271 = scmp.lt.s32.totalorder %s18, 1
      %s2272 = scalar_select %p2271, %s18, 1
      %s2273 = smul.addr %s2272, 2
      %s2274 = scalar_lea.vmem %s6, %s2273
      // Predicated region
      $region41: #{resblock_generator.2} parent=39 // pred_check
        %p2275 = pneg %p146
      $region42: #{resblock_generator.2} parent=39 // pred_check_branch
        %2277 = sbr.rel (%p2275) target = $region44
      $region43: #{resblock_generator.2} parent=39 // pred_region
        _
      $region44: #{resblock_generator.2} parent=39 // pred_fallthru
        _
      // Predicated region
      $region45: #{resblock_generator.2} parent=39 // pred_check
        %p2278 = pneg %p172
      $region46: #{resblock_generator.2} parent=39 // pred_check_branch
        %2280 = sbr.rel (%p2278) target = $region48
      $region47: #{resblock_generator.2} parent=39 // pred_region
        _
      $region48: #{resblock_generator.2} parent=39 // pred_fallthru
        _
    $region40: #{resblock_generator.2} parent=5 // pred_fallthru
      _
    %p2281 = scmp.le.s32.totalorder 2, %s13
    // Predicated region
    $region49: #{resblock_generator.2} parent=5 // pred_check
      %p2282 = pneg %p2281
    $region50: #{resblock_generator.2} parent=5 // pred_check_branch
      %2284 = sbr.rel (%p2282) target = $region52
    $region51: #{resblock_generator.2} parent=5 // pred_region
      %s2285 = ssub.s32 %s13, 2
      // Predicated region
      $region53: #{resblock_generator.2} parent=51 // pred_check
        %p2286 = pneg %p152
      $region54: #{resblock_generator.2} parent=51 // pred_check_branch
        %2288 = sbr.rel (%p2286) target = $region56
      $region55: #{resblock_generator.2} parent=51 // pred_region
        %p2289 = scmp.lt.s32.totalorder %s19, 1
        %s2290 = scalar_select %p2289, %s19, 1
        %s2291 = smul.addr %s2290, 32
        %s2292 = smul.addr %s2291, 8
        %s2293 = scalar_lea.vmem %s5, %s2292
      $region56: #{resblock_generator.2} parent=51 // pred_fallthru
        _
      // Predicated region
      $region57: #{resblock_generator.2} parent=51 // pred_check
        %p2294 = pneg %p178
      $region58: #{resblock_generator.2} parent=51 // pred_check_branch
        %2296 = sbr.rel (%p2294) target = $region60
      $region59: #{resblock_generator.2} parent=51 // pred_region
        %p2297 = scmp.lt.s32.totalorder %s19, 1
        %s2298 = scalar_select %p2297, %s19, 1
        %s2299 = smul.addr %s2298, 2
        %s2300 = scalar_lea.vmem %s6, %s2299
      $region60: #{resblock_generator.2} parent=51 // pred_fallthru
        _
    $region52: #{resblock_generator.2} parent=5 // pred_fallthru
      _
  $region6: #{resblock_generator.2} parent=0 // loop_footer
    %s17 = sadd.s32 1, %s13
  $region7: #{resblock_generator.2} parent=0 // loop_footer_branch
    %12 = sbr.rel target = $region3
  $region8: #{resblock_generator.2} parent=0 // loop_exit
    _

// kernel: resblock_generator.3
$region0: #{resblock_generator.3}
  #allocation0 [shape = 'u32[]', space=smem, size = 0x4, offset = 0x4, fixed_abs, tag = 'smem constant byte address 0x4 - core index']
  #allocation1 [shape = 'u32[144,128]{1,0:T(1,128)}', space=vmem, size = 0x12000, scoped, tag = 'internal scratch']
  #allocation2 [shape = 'f32[256,8]{1,0:T(8,128)}', space=vmem, size = 0x20000, scoped, tag = 'scratch operand']
  %s0 = inlined_call_operand.vmem [shape: f32[2,16,16,8], index: 0, kind: input, shape index: {}]
  %s1 = inlined_call_operand.vmem [shape: f32[2,16,16,4], index: 1, kind: input, shape index: {}]
  %s2 = inlined_call_operand.vmem [shape: f32[1,8], index: 2, kind: input, shape index: {}]
  %s3 = inlined_call_operand.vmem [shape: f32[1,8], index: 3, kind: input, shape index: {}]
  %s4 = inlined_call_operand.vmem [shape: f32[3,24,8], index: 4, kind: input, shape index: {}]
  %s5 = inlined_call_operand.vmem [shape: f32[4,8], index: 5, kind: input, shape index: {}]
  %s6 = inlined_call_operand.vmem [shape: f32[1,8], index: 6, kind: input, shape index: {}]
  %s7 = inlined_call_operand.vmem [shape: f32[2,16,16,8], index: 7, kind: output, shape index: {}]
  %s8 = sld [smem:[#allocation0]]
  $region61: #{resblock_generator.3} parent=0
    _
  %s10 = ssub.s32 1, %s8
  %s11 = scalar_select 0, %s10, %s8
  loop: start=0, step=1, limit=4
  $region2: #{resblock_generator.3} parent=0 // loop_pre_header
    _
  $region3: #{resblock_generator.3} parent=0 // loop_header
    %s13 = sphi 0, %s17
    %p14 = scmp.ge.s32.totalorder %s13, 4
    %s23 = sphi 0, %s25
    %s26 = sphi 0, %s23
    %s27 = sphi 0, %s26
    %s43 = sphi 0, %s27
    %s49 = sphi 0, %s51
    %s52 = sphi 0, %s49
    %s53 = sphi 0, %s52
    %s69 = sphi 0, %s53
    %s73 = sphi 0, %s73
    %s75 = sphi 0, %s73
    %s76 = sphi 0, %s75
    %s90 = sphi 0, %s76
    %s94 = sphi 0, %s94
    %s96 = sphi 0, %s94
    %s97 = sphi 0, %s96
    %s111 = sphi 0, %s97
    %s115 = sphi 0, %s115
    %s117 = sphi 0, %s115
    %s118 = sphi 0, %s117
    %s132 = sphi 0, %s118
    %s136 = sphi 0, %s136
    %s138 = sphi 0, %s136
    %s139 = sphi 0, %s138
    %s153 = sphi 0, %s139
    %s157 = sphi 0, %s157
    %s159 = sphi 0, %s157
    %s160 = sphi 0, %s159
    %s174 = sphi 0, %s160
    %s180 = sphi 0, %s182
    %s183 = sphi 0, %s180
    %s184 = sphi 0, %s183
    %s200 = sphi 0, %s184
  $region4: #{resblock_generator.3} parent=0 // loop_header_branch
    %16 = sbr.rel (%p14) target = $region8
  $region5: #{resblock_generator.3} parent=0 // loop_body
    %s18 = ssub.s32 %s13, 1
    %s19 = ssub.s32 %s13, 2
    %s20 = sadd.s32 %s13, 1
    %s21 = ssub.s32 %s13, %s20
    %p22 = scmp.eq.s32.totalorder %s21, 0
    %s24 = sadd.s32 %s23, 1
    %s25 = scalar_select %p22, %s23, %s24
    %p28 = pneg %p22
    %p29 = scmp.eq.s32.totalorder %s13, 1
    %p30 = por %p28, %p29
    %p31 = scmp.ne.s32.totalorder %s23, %s26
    %p32 = scmp.eq.s32.totalorder %s13, 0
    %p33 = por %p31, %p32
    %p34 = scmp.ne.s32.totalorder %s23, %s26
    %p35 = scmp.eq.s32.totalorder %s18, 1
    %p36 = por %p34, %p35
    %p37 = scmp.ne.s32.totalorder %s26, %s27
    %p38 = scmp.eq.s32.totalorder %s18, 0
    %p39 = por %p37, %p38
    %p40 = scmp.ne.s32.totalorder %s26, %s27
    %p41 = scmp.eq.s32.totalorder %s19, 1
    %p42 = por %p40, %p41
    %p44 = scmp.ne.s32.totalorder %s27, %s43
    %p45 = scmp.eq.s32.totalorder %s19, 0
    %p46 = por %p44, %p45
    %s47 = ssub.s32 %s13, %s20
    %p48 = scmp.eq.s32.totalorder %s47, 0
    %s50 = sadd.s32 %s49, 1
    %s51 = scalar_select %p48, %s49, %s50
    %p54 = pneg %p48
    %p55 = scmp.eq.s32.totalorder %s13, 1
    %p56 = por %p54, %p55
    %p57 = scmp.ne.s32.totalorder %s49, %s52
    %p58 = scmp.eq.s32.totalorder %s13, 0
    %p59 = por %p57, %p58
    %p60 = scmp.ne.s32.totalorder %s49, %s52
    %p61 = scmp.eq.s32.totalorder %s18, 1
    %p62 = por %p60, %p61
    %p63 = scmp.ne.s32.totalorder %s52, %s53
    %p64 = scmp.eq.s32.totalorder %s18, 0
    %p65 = por %p63, %p64
    %p66 = scmp.ne.s32.totalorder %s52, %s53
    %p67 = scmp.eq.s32.totalorder %s19, 1
    %p68 = por %p66, %p67
    %p70 = scmp.ne.s32.totalorder %s53, %s69
    %p71 = scmp.eq.s32.totalorder %s19, 0
    %p72 = por %p70, %p71
    %s74 = sadd.s32 %s73, 1
    %p77 = scmp.eq.s32.totalorder %s13, 1
    %p78 = scmp.ne.s32.totalorder %s73, %s75
    %p79 = scmp.eq.s32.totalorder %s13, 0
    %p80 = por %p78, %p79
    %p81 = scmp.ne.s32.totalorder %s73, %s75
    %p82 = scmp.eq.s32.totalorder %s18, 1
    %p83 = por %p81, %p82
    %p84 = scmp.ne.s32.totalorder %s75, %s76
    %p85 = scmp.eq.s32.totalorder %s18, 0
    %p86 = por %p84, %p85
    %p87 = scmp.ne.s32.totalorder %s75, %s76
    %p88 = scmp.eq.s32.totalorder %s19, 1
    %p89 = por %p87, %p88
    %p91 = scmp.ne.s32.totalorder %s76, %s90
    %p92 = scmp.eq.s32.totalorder %s19, 0
    %p93 = por %p91, %p92
    %s95 = sadd.s32 %s94, 1
    %p98 = scmp.eq.s32.totalorder %s13, 1
    %p99 = scmp.ne.s32.totalorder %s94, %s96
    %p100 = scmp.eq.s32.totalorder %s13, 0
    %p101 = por %p99, %p100
    %p102 = scmp.ne.s32.totalorder %s94, %s96
    %p103 = scmp.eq.s32.totalorder %s18, 1
    %p104 = por %p102, %p103
    %p105 = scmp.ne.s32.totalorder %s96, %s97
    %p106 = scmp.eq.s32.totalorder %s18, 0
    %p107 = por %p105, %p106
    %p108 = scmp.ne.s32.totalorder %s96, %s97
    %p109 = scmp.eq.s32.totalorder %s19, 1
    %p110 = por %p108, %p109
    %p112 = scmp.ne.s32.totalorder %s97, %s111
    %p113 = scmp.eq.s32.totalorder %s19, 0
    %p114 = por %p112, %p113
    %s116 = sadd.s32 %s115, 1
    %p119 = scmp.eq.s32.totalorder %s13, 1
    %p120 = scmp.ne.s32.totalorder %s115, %s117
    %p121 = scmp.eq.s32.totalorder %s13, 0
    %p122 = por %p120, %p121
    %p123 = scmp.ne.s32.totalorder %s115, %s117
    %p124 = scmp.eq.s32.totalorder %s18, 1
    %p125 = por %p123, %p124
    %p126 = scmp.ne.s32.totalorder %s117, %s118
    %p127 = scmp.eq.s32.totalorder %s18, 0
    %p128 = por %p126, %p127
    %p129 = scmp.ne.s32.totalorder %s117, %s118
    %p130 = scmp.eq.s32.totalorder %s19, 1
    %p131 = por %p129, %p130
    %p133 = scmp.ne.s32.totalorder %s118, %s132
    %p134 = scmp.eq.s32.totalorder %s19, 0
    %p135 = por %p133, %p134
    %s137 = sadd.s32 %s136, 1
    %p140 = scmp.eq.s32.totalorder %s13, 1
    %p141 = scmp.ne.s32.totalorder %s136, %s138
    %p142 = scmp.eq.s32.totalorder %s13, 0
    %p143 = por %p141, %p142
    %p144 = scmp.ne.s32.totalorder %s136, %s138
    %p145 = scmp.eq.s32.totalorder %s18, 1
    %p146 = por %p144, %p145
    %p147 = scmp.ne.s32.totalorder %s138, %s139
    %p148 = scmp.eq.s32.totalorder %s18, 0
    %p149 = por %p147, %p148
    %p150 = scmp.ne.s32.totalorder %s138, %s139
    %p151 = scmp.eq.s32.totalorder %s19, 1
    %p152 = por %p150, %p151
    %p154 = scmp.ne.s32.totalorder %s139, %s153
    %p155 = scmp.eq.s32.totalorder %s19, 0
    %p156 = por %p154, %p155
    %s158 = sadd.s32 %s157, 1
    %p161 = scmp.eq.s32.totalorder %s13, 1
    %p162 = scmp.ne.s32.totalorder %s157, %s159
    %p163 = scmp.eq.s32.totalorder %s13, 0
    %p164 = por %p162, %p163
    %p165 = scmp.ne.s32.totalorder %s157, %s159
    %p166 = scmp.eq.s32.totalorder %s18, 1
    %p167 = por %p165, %p166
    %p168 = scmp.ne.s32.totalorder %s159, %s160
    %p169 = scmp.eq.s32.totalorder %s18, 0
    %p170 = por %p168, %p169
    %p171 = scmp.ne.s32.totalorder %s159, %s160
    %p172 = scmp.eq.s32.totalorder %s19, 1
    %p173 = por %p171, %p172
    %p175 = scmp.ne.s32.totalorder %s160, %s174
    %p176 = scmp.eq.s32.totalorder %s19, 0
    %p177 = por %p175, %p176
    %s178 = ssub.s32 %s13, %s20
    %p179 = scmp.eq.s32.totalorder %s178, 0
    %s181 = sadd.s32 %s180, 1
    %s182 = scalar_select %p179, %s180, %s181
    %p185 = pneg %p179
    %p186 = scmp.eq.s32.totalorder %s13, 1
    %p187 = por %p185, %p186
    %p188 = scmp.ne.s32.totalorder %s180, %s183
    %p189 = scmp.eq.s32.totalorder %s13, 0
    %p190 = por %p188, %p189
    %p191 = scmp.ne.s32.totalorder %s180, %s183
    %p192 = scmp.eq.s32.totalorder %s18, 1
    %p193 = por %p191, %p192
    %p194 = scmp.ne.s32.totalorder %s183, %s184
    %p195 = scmp.eq.s32.totalorder %s18, 0
    %p196 = por %p194, %p195
    %p197 = scmp.ne.s32.totalorder %s183, %s184
    %p198 = scmp.eq.s32.totalorder %s19, 1
    %p199 = por %p197, %p198
    %p201 = scmp.ne.s32.totalorder %s184, %s200
    %p202 = scmp.eq.s32.totalorder %s19, 0
    %p203 = por %p201, %p202
    %p204 = scmp.le.s32.totalorder 1, %s13
    %p205 = scmp.lt.s32.totalorder %s13, 3
    %p206 = pnand %p204, %p205
    %p207 = pneg %p206
    // Predicated region
    $region9: #{resblock_generator.3} parent=5 // pred_check
      _
    $region10: #{resblock_generator.3} parent=5 // pred_check_branch
      %209 = sbr.rel (%p206) target = $region12
    $region11: #{resblock_generator.3} parent=5 // pred_region
      %s210 = ssub.s32 %s13, 1
      // Predicated region
      $region13: #{resblock_generator.3} parent=11 // pred_check
        %p211 = pneg %p86
      $region14: #{resblock_generator.3} parent=11 // pred_check_branch
        %213 = sbr.rel (%p211) target = $region16
      $region15: #{resblock_generator.3} parent=11 // pred_region
        _
      $region16: #{resblock_generator.3} parent=11 // pred_fallthru
        _
      // Predicated region
      $region17: #{resblock_generator.3} parent=11 // pred_check
        %p214 = pneg %p107
      $region18: #{resblock_generator.3} parent=11 // pred_check_branch
        %216 = sbr.rel (%p214) target = $region20
      $region19: #{resblock_generator.3} parent=11 // pred_region
        _
      $region20: #{resblock_generator.3} parent=11 // pred_fallthru
        _
      // Predicated region
      $region21: #{resblock_generator.3} parent=11 // pred_check
        %p217 = pneg %p128
      $region22: #{resblock_generator.3} parent=11 // pred_check_branch
        %219 = sbr.rel (%p217) target = $region24
      $region23: #{resblock_generator.3} parent=11 // pred_region
        _
      $region24: #{resblock_generator.3} parent=11 // pred_fallthru
        _
      // Predicated region
      $region25: #{resblock_generator.3} parent=11 // pred_check
        %p220 = pneg %p149
      $region26: #{resblock_generator.3} parent=11 // pred_check_branch
        %222 = sbr.rel (%p220) target = $region28
      $region27: #{resblock_generator.3} parent=11 // pred_region
        _
      $region28: #{resblock_generator.3} parent=11 // pred_fallthru
        _
      // Predicated region
      $region29: #{resblock_generator.3} parent=11 // pred_check
        %p223 = pneg %p170
      $region30: #{resblock_generator.3} parent=11 // pred_check_branch
        %225 = sbr.rel (%p223) target = $region32
      $region31: #{resblock_generator.3} parent=11 // pred_region
        _
      $region32: #{resblock_generator.3} parent=11 // pred_fallthru
        _
    $region12: #{resblock_generator.3} parent=5 // pred_fallthru
      _
    %p226 = scmp.lt.s32.totalorder %s13, 2
    // Predicated region
    $region33: #{resblock_generator.3} parent=5 // pred_check
      %p227 = pneg %p226
    $region34: #{resblock_generator.3} parent=5 // pred_check_branch
      %229 = sbr.rel (%p227) target = $region36
    $region35: #{resblock_generator.3} parent=5 // pred_region
      // Predicated region
      $region37: #{resblock_generator.3} parent=35 // pred_check
        %p230 = pneg %p33
      $region38: #{resblock_generator.3} parent=35 // pred_check_branch
        %232 = sbr.rel (%p230) target = $region40
      $region39: #{resblock_generator.3} parent=35 // pred_region
        %p233 = scmp.lt.s32.totalorder %s13, 1
        %s234 = scalar_select %p233, %s13, 1
        %s235 = smul.addr %s234, 32
        %s236 = smul.addr %s235, 8
        %s237 = scalar_lea.vmem %s0, %s236
      $region40: #{resblock_generator.3} parent=35 // pred_fallthru
        _
      // Predicated region
      $region41: #{resblock_generator.3} parent=35 // pred_check
        %p238 = pneg %p59
      $region42: #{resblock_generator.3} parent=35 // pred_check_branch
        %240 = sbr.rel (%p238) target = $region44
      $region43: #{resblock_generator.3} parent=35 // pred_region
        %p241 = scmp.lt.s32.totalorder %s13, 1
        %s242 = scalar_select %p241, %s13, 1
        %s243 = smul.addr %s242, 32
        %s244 = smul.addr %s243, 8
        %s245 = scalar_lea.vmem %s1, %s244
      $region44: #{resblock_generator.3} parent=35 // pred_fallthru
        _
    $region36: #{resblock_generator.3} parent=5 // pred_fallthru
      _
    %p246 = scmp.le.s32.totalorder 1, %s13
    %p247 = scmp.lt.s32.totalorder %s13, 3
    %p248 = pnand %p246, %p247
    %p249 = pneg %p248
    // Predicated region
    $region45: #{resblock_generator.3} parent=5 // pred_check
      _
    $region46: #{resblock_generator.3} parent=5 // pred_check_branch
      %251 = sbr.rel (%p248) target = $region48
    $region47: #{resblock_generator.3} parent=5 // pred_region
      %s252 = ssub.s32 %s13, 1
      %p253 = scmp.lt.s32.totalorder %s18, 1
      %s254 = scalar_select %p253, %s18, 1
      %s255 = smul.addr %s254, 32
      %s256 = smul.addr %s255, 8
      %s257 = scalar_lea.vmem %s0, %s256
      %p258 = pneg %p39
      %p259 = pneg %p36
      %p260 = scmp.lt.s32.totalorder %s18, 1
      %s261 = scalar_select %p260, %s18, 1
      %s262 = smul.addr %s261, 32
      %s263 = smul.addr %s262, 8
      %s264 = scalar_lea.vmem %s1, %s263
      %p265 = pneg %p65
      %p266 = pneg %p62
      %p267 = pneg %p86
      %p268 = pneg %p83
      %p269 = pneg %p107
      %p270 = pneg %p104
      %p271 = pneg %p128
      %p272 = pneg %p125
      %p273 = pneg %p149
      %p274 = pneg %p146
      %p275 = pneg %p170
      %p276 = pneg %p167
      %p277 = pneg %p196
      %p278 = pneg %p193
      %p279 = scmp.lt.s32.totalorder %s18, 1
      %s280 = scalar_select %p279, %s18, 1
      %s281 = smul.addr %s280, 32
      %s282 = smul.addr %s281, 8
      %s283 = scalar_lea.vmem %s7, %s282
      %p284 = scmp.lt.s32.totalorder %s18, 1
      %s285 = scalar_select %p284, %s18, 1
      %s286 = smul.addr %s285, 32
      %s287 = smul.addr %s286, 8
      %s288 = scalar_lea.vmem %s0, %s287
      %p289 = scmp.lt.s32.totalorder %s18, 1
      %s290 = scalar_select %p289, %s18, 1
      %s291 = smul.addr %s290, 32
      %s292 = smul.addr %s291, 8
      %s293 = scalar_lea.vmem %s1, %s292
      %p294 = scmp.lt.s32.totalorder %s18, 1
      %s295 = scalar_select %p294, %s18, 1
      %s296 = smul.addr %s295, 32
      %s297 = smul.addr %s296, 8
      %s298 = scalar_lea.vmem %s7, %s297
      %v299 = vld [vmem:[%s288] sm:$0xff]
      %v300 = vld [vmem:[%s288 + $0x8] sm:$0xff]
      %v301 = vld [vmem:[%s288 + $0x10] sm:$0xff]
      %v302 = vld [vmem:[%s288 + $0x18] sm:$0xff]
      %v303 = vld [vmem:[%s288 + $0x20] sm:$0xff]
      %v304 = vld [vmem:[%s288 + $0x28] sm:$0xff]
      %v305 = vld [vmem:[%s288 + $0x30] sm:$0xff]
      %v306 = vld [vmem:[%s288 + $0x38] sm:$0xff]
      %v307 = vld [vmem:[%s288 + $0x40] sm:$0xff]
      %v308 = vld [vmem:[%s288 + $0x48] sm:$0xff]
      %v309 = vld [vmem:[%s288 + $0x50] sm:$0xff]
      %v310 = vld [vmem:[%s288 + $0x58] sm:$0xff]
      %v311 = vld [vmem:[%s288 + $0x60] sm:$0xff]
      %v312 = vld [vmem:[%s288 + $0x68] sm:$0xff]
      %v313 = vld [vmem:[%s288 + $0x70] sm:$0xff]
      %v314 = vld [vmem:[%s288 + $0x78] sm:$0xff]
      %v315 = vld [vmem:[%s288 + $0x80] sm:$0xff]
      %v316 = vld [vmem:[%s288 + $0x88] sm:$0xff]
      %v317 = vld [vmem:[%s288 + $0x90] sm:$0xff]
      %v318 = vld [vmem:[%s288 + $0x98] sm:$0xff]
      %v319 = vld [vmem:[%s288 + $0xa0] sm:$0xff]
      %v320 = vld [vmem:[%s288 + $0xa8] sm:$0xff]
      %v321 = vld [vmem:[%s288 + $0xb0] sm:$0xff]
      %v322 = vld [vmem:[%s288 + $0xb8] sm:$0xff]
      %v323 = vld [vmem:[%s288 + $0xc0] sm:$0xff]
      %v324 = vld [vmem:[%s288 + $0xc8] sm:$0xff]
      %v325 = vld [vmem:[%s288 + $0xd0] sm:$0xff]
      %v326 = vld [vmem:[%s288 + $0xd8] sm:$0xff]
      %v327 = vld [vmem:[%s288 + $0xe0] sm:$0xff]
      %v328 = vld [vmem:[%s288 + $0xe8] sm:$0xff]
      %v329 = vld [vmem:[%s288 + $0xf0] sm:$0xff]
      %v330 = vld [vmem:[%s288 + $0xf8] sm:$0xff]
      %v331 = vld [vmem:[%s2] sm:$0x1]
      %v333 = vlaneseq
      %v334 = vshrl.u32 %v333, 7
      %v335 = vsub.s32 0, %v334
      %v336 = vrot.slane %v331, %v335
      %v338 = vmul.f32 %v299, %v336
      %v339 = vmul.f32 %v300, %v336
      %v340 = vmul.f32 %v301, %v336
      %v341 = vmul.f32 %v302, %v336
      %v342 = vmul.f32 %v303, %v336
      %v343 = vmul.f32 %v304, %v336
      %v344 = vmul.f32 %v305, %v336
      %v345 = vmul.f32 %v306, %v336
      %v346 = vmul.f32 %v307, %v336
      %v347 = vmul.f32 %v308, %v336
      %v348 = vmul.f32 %v309, %v336
      %v349 = vmul.f32 %v310, %v336
      %v350 = vmul.f32 %v311, %v336
      %v351 = vmul.f32 %v312, %v336
      %v352 = vmul.f32 %v313, %v336
      %v353 = vmul.f32 %v314, %v336
      %v354 = vmul.f32 %v315, %v336
      %v355 = vmul.f32 %v316, %v336
      %v356 = vmul.f32 %v317, %v336
      %v357 = vmul.f32 %v318, %v336
      %v358 = vmul.f32 %v319, %v336
      %v359 = vmul.f32 %v320, %v336
      %v360 = vmul.f32 %v321, %v336
      %v361 = vmul.f32 %v322, %v336
      %v362 = vmul.f32 %v323, %v336
      %v363 = vmul.f32 %v324, %v336
      %v364 = vmul.f32 %v325, %v336
      %v365 = vmul.f32 %v326, %v336
      %v366 = vmul.f32 %v327, %v336
      %v367 = vmul.f32 %v328, %v336
      %v368 = vmul.f32 %v329, %v336
      %v369 = vmul.f32 %v330, %v336
      %v370 = vld [vmem:[%s3] sm:$0x1]
      %v372 = vlaneseq
      %v373 = vshrl.u32 %v372, 7
      %v374 = vsub.s32 0, %v373
      %v375 = vrot.slane %v370, %v374
      %v377 = vadd.f32 %v338, %v375
      %v378 = vadd.f32 %v339, %v375
      %v379 = vadd.f32 %v340, %v375
      %v380 = vadd.f32 %v341, %v375
      %v381 = vadd.f32 %v342, %v375
      %v382 = vadd.f32 %v343, %v375
      %v383 = vadd.f32 %v344, %v375
      %v384 = vadd.f32 %v345, %v375
      %v385 = vadd.f32 %v346, %v375
      %v386 = vadd.f32 %v347, %v375
      %v387 = vadd.f32 %v348, %v375
      %v388 = vadd.f32 %v349, %v375
      %v389 = vadd.f32 %v350, %v375
      %v390 = vadd.f32 %v351, %v375
      %v391 = vadd.f32 %v352, %v375
      %v392 = vadd.f32 %v353, %v375
      %v393 = vadd.f32 %v354, %v375
      %v394 = vadd.f32 %v355, %v375
      %v395 = vadd.f32 %v356, %v375
      %v396 = vadd.f32 %v357, %v375
      %v397 = vadd.f32 %v358, %v375
      %v398 = vadd.f32 %v359, %v375
      %v399 = vadd.f32 %v360, %v375
      %v400 = vadd.f32 %v361, %v375
      %v401 = vadd.f32 %v362, %v375
      %v402 = vadd.f32 %v363, %v375
      %v403 = vadd.f32 %v364, %v375
      %v404 = vadd.f32 %v365, %v375
      %v405 = vadd.f32 %v366, %v375
      %v406 = vadd.f32 %v367, %v375
      %v407 = vadd.f32 %v368, %v375
      %v408 = vadd.f32 %v369, %v375
      %v409 = vmax.f32 %v377, 0.0
      %v410 = vmax.f32 %v378, 0.0
      %v411 = vmax.f32 %v379, 0.0
      %v412 = vmax.f32 %v380, 0.0
      %v413 = vmax.f32 %v381, 0.0
      %v414 = vmax.f32 %v382, 0.0
      %v415 = vmax.f32 %v383, 0.0
      %v416 = vmax.f32 %v384, 0.0
      %v417 = vmax.f32 %v385, 0.0
      %v418 = vmax.f32 %v386, 0.0
      %v419 = vmax.f32 %v387, 0.0
      %v420 = vmax.f32 %v388, 0.0
      %v421 = vmax.f32 %v389, 0.0
      %v422 = vmax.f32 %v390, 0.0
      %v423 = vmax.f32 %v391, 0.0
      %v424 = vmax.f32 %v392, 0.0
      %v425 = vmax.f32 %v393, 0.0
      %v426 = vmax.f32 %v394, 0.0
      %v427 = vmax.f32 %v395, 0.0
      %v428 = vmax.f32 %v396, 0.0
      %v429 = vmax.f32 %v397, 0.0
      %v430 = vmax.f32 %v398, 0.0
      %v431 = vmax.f32 %v399, 0.0
      %v432 = vmax.f32 %v400, 0.0
      %v433 = vmax.f32 %v401, 0.0
      %v434 = vmax.f32 %v402, 0.0
      %v435 = vmax.f32 %v403, 0.0
      %v436 = vmax.f32 %v404, 0.0
      %v437 = vmax.f32 %v405, 0.0
      %v438 = vmax.f32 %v406, 0.0
      %v439 = vmax.f32 %v407, 0.0
      %v440 = vmax.f32 %v408, 0.0
      %v441 = vld [vmem:[%s6] sm:$0x1]
      %v443 = vlaneseq
      %v444 = vshrl.u32 %v443, 7
      %v445 = vsub.s32 0, %v444
      %v446 = vrot.slane %v441, %v445
      %v448 = vld [vmem:[%s293] sm:$0xff]
      %v449 = vld [vmem:[%s293 + $0x8] sm:$0xff]
      %v450 = vld [vmem:[%s293 + $0x10] sm:$0xff]
      %v451 = vld [vmem:[%s293 + $0x18] sm:$0xff]
      %v452 = vld [vmem:[%s293 + $0x20] sm:$0xff]
      %v453 = vld [vmem:[%s293 + $0x28] sm:$0xff]
      %v454 = vld [vmem:[%s293 + $0x30] sm:$0xff]
      %v455 = vld [vmem:[%s293 + $0x38] sm:$0xff]
      %v456 = vld [vmem:[%s293 + $0x40] sm:$0xff]
      %v457 = vld [vmem:[%s293 + $0x48] sm:$0xff]
      %v458 = vld [vmem:[%s293 + $0x50] sm:$0xff]
      %v459 = vld [vmem:[%s293 + $0x58] sm:$0xff]
      %v460 = vld [vmem:[%s293 + $0x60] sm:$0xff]
      %v461 = vld [vmem:[%s293 + $0x68] sm:$0xff]
      %v462 = vld [vmem:[%s293 + $0x70] sm:$0xff]
      %v463 = vld [vmem:[%s293 + $0x78] sm:$0xff]
      %v464 = vld [vmem:[%s293 + $0x80] sm:$0xff]
      %v465 = vld [vmem:[%s293 + $0x88] sm:$0xff]
      %v466 = vld [vmem:[%s293 + $0x90] sm:$0xff]
      %v467 = vld [vmem:[%s293 + $0x98] sm:$0xff]
      %v468 = vld [vmem:[%s293 + $0xa0] sm:$0xff]
      %v469 = vld [vmem:[%s293 + $0xa8] sm:$0xff]
      %v470 = vld [vmem:[%s293 + $0xb0] sm:$0xff]
      %v471 = vld [vmem:[%s293 + $0xb8] sm:$0xff]
      %v472 = vld [vmem:[%s293 + $0xc0] sm:$0xff]
      %v473 = vld [vmem:[%s293 + $0xc8] sm:$0xff]
      %v474 = vld [vmem:[%s293 + $0xd0] sm:$0xff]
      %v475 = vld [vmem:[%s293 + $0xd8] sm:$0xff]
      %v476 = vld [vmem:[%s293 + $0xe0] sm:$0xff]
      %v477 = vld [vmem:[%s293 + $0xe8] sm:$0xff]
      %v478 = vld [vmem:[%s293 + $0xf0] sm:$0xff]
      %v479 = vld [vmem:[%s293 + $0xf8] sm:$0xff]
      %v480 = vld [vmem:[%s5] sm:$0xf]
      %vm481 = vcmask 31744
      %v483 = vsel %vm481, %v448, 0
      %v486 = vsel %vm481, %v449, 0
      %v489 = vsel %vm481, %v450, 0
      %v492 = vsel %vm481, %v451, 0
      %v495 = vsel %vm481, %v452, 0
      %v498 = vsel %vm481, %v453, 0
      %v501 = vsel %vm481, %v454, 0
      %v504 = vsel %vm481, %v455, 0
      %v507 = vsel %vm481, %v456, 0
      %v510 = vsel %vm481, %v457, 0
      %v513 = vsel %vm481, %v458, 0
      %v516 = vsel %vm481, %v459, 0
      %v519 = vsel %vm481, %v460, 0
      %v522 = vsel %vm481, %v461, 0
      %v525 = vsel %vm481, %v462, 0
      %v528 = vsel %vm481, %v463, 0
      %v531 = vsel %vm481, %v464, 0
      %v534 = vsel %vm481, %v465, 0
      %v537 = vsel %vm481, %v466, 0
      %v540 = vsel %vm481, %v467, 0
      %v543 = vsel %vm481, %v468, 0
      %v546 = vsel %vm481, %v469, 0
      %v549 = vsel %vm481, %v470, 0
      %v552 = vsel %vm481, %v471, 0
      %v555 = vsel %vm481, %v472, 0
      %v558 = vsel %vm481, %v473, 0
      %v561 = vsel %vm481, %v474, 0
      %v564 = vsel %vm481, %v475, 0
      %v567 = vsel %vm481, %v476, 0
      %v570 = vsel %vm481, %v477, 0
      %v573 = vsel %vm481, %v478, 0
      %v576 = vsel %vm481, %v479, 0
      %vm578 = vcmask 1043456
      %v580 = vsel %vm578, %v480, 0
      %582 = vmatprep.subr.mxu0 0.0
      %583 = vmatpush1.msra.mxu0 %v580
      %584 = vmatprep.subr.mxu0 0.0
      %585 = vmatpush1.msra.mxu0 0.0
      %586 = vmatprep.subr.mxu0 0.0
      %587 = vmatpush1.msra.mxu0 0.0
      %588 = vmatprep.subr.mxu0 0.0
      %589 = vmatpush1.msra.mxu0 0.0
      %590 = vmatprep.subr.mxu0 0.0
      %591 = vmatpush1.msra.mxu0 0.0
      %592 = vmatprep.subr.mxu0 0.0
      %593 = vmatpush1.msra.mxu0 0.0
      %594 = vmatprep.subr.mxu0 0.0
      %595 = vmatpush1.msra.mxu0 0.0
      %596 = vmatprep.subr.mxu0 0.0
      %597 = vmatpush1.msra.mxu0 0.0
      %598 = vmatprep.subr.mxu0 0.0
      %599 = vmatpush1.msra.mxu0 0.0
      %600 = vmatprep.subr.mxu0 0.0
      %601 = vmatpush1.msra.mxu0 0.0
      %602 = vmatprep.subr.mxu0 0.0
      %603 = vmatpush1.msra.mxu0 0.0
      %604 = vmatprep.subr.mxu0 0.0
      %605 = vmatpush1.msra.mxu0 0.0
      %606 = vmatprep.subr.mxu0 0.0
      %607 = vmatpush1.msra.mxu0 0.0
      %608 = vmatprep.subr.mxu0 0.0
      %609 = vmatpush1.msra.mxu0 0.0
      %610 = vmatprep.subr.mxu0 0.0
      %611 = vmatpush1.msra.mxu0 0.0
      %612 = vmatprep.subr.mxu0 0.0
      %613 = vmatpush1.msra.mxu0 0.0
      %614 = vmatprep.subr.mxu0 0.0
      %615 = vmatpush1.msra.mxu0 0.0
      %616 = vmatprep.subr.mxu0 0.0
      %617 = vmatpush1.msra.mxu0 0.0
      %618 = vmatprep.subr.mxu0 0.0
      %619 = vmatpush1.msra.mxu0 0.0
      %620 = vmatprep.subr.mxu0 0.0
      %621 = vmatpush1.msra.mxu0 0.0
      %622 = vmatprep.subr.mxu0 0.0
      %623 = vmatpush1.msra.mxu0 0.0
      %624 = vmatprep.subr.mxu0 0.0
      %625 = vmatpush1.msra.mxu0 0.0
      %626 = vmatprep.subr.mxu0 0.0
      %627 = vmatpush1.msra.mxu0 0.0
      %628 = vmatprep.subr.mxu0 0.0
      %629 = vmatpush1.msra.mxu0 0.0
      %630 = vmatprep.subr.mxu0 0.0
      %631 = vmatpush1.msra.mxu0 0.0
      %632 = vmatprep.subr.mxu0 0.0
      %633 = vmatpush1.msra.mxu0 0.0
      %634 = vmatprep.subr.mxu0 0.0
      %635 = vmatpush1.msra.mxu0 0.0
      %636 = vmatprep.subr.mxu0 0.0
      %637 = vmatpush1.msra.mxu0 0.0
      %638 = vmatprep.subr.mxu0 0.0
      %639 = vmatpush1.msra.mxu0 0.0
      %640 = vmatprep.subr.mxu0 0.0
      %641 = vmatpush1.msra.mxu0 0.0
      %642 = vmatprep.subr.mxu0 0.0
      %643 = vmatpush1.msra.mxu0 0.0
      %644 = vmatprep.subr.mxu0 0.0
      %645 = vmatpush1.msra.mxu0 0.0
      %646 = vmatprep.mubr.f32.mxu0 0.0
      %647 = vmatmul.mubr.f32.gmra.mrb[0].mxu0 %v483
      %v648 = vpop.f32.mrb[0].mxu0
      %v649 = vadd.f32 0.0, %v648
      %v650 = vpop.f32.mrb[0].mxu0
      %651 = vmatprep.mubr.f32.mxu0 0.0
      %652 = vmatmul.mubr.f32.gmra.mrb[0].mxu0 %v486
      %v653 = vpop.f32.mrb[0].mxu0
      %v654 = vadd.f32 0.0, %v653
      %v655 = vpop.f32.mrb[0].mxu0
      %656 = vmatprep.mubr.f32.mxu0 0.0
      %657 = vmatmul.mubr.f32.gmra.mrb[0].mxu0 %v489
      %v658 = vpop.f32.mrb[0].mxu0
      %v659 = vadd.f32 0.0, %v658
      %v660 = vpop.f32.mrb[0].mxu0
      %661 = vmatprep.mubr.f32.mxu0 0.0
      %662 = vmatmul.mubr.f32.gmra.mrb[0].mxu0 %v492
      %v663 = vpop.f32.mrb[0].mxu0
      %v664 = vadd.f32 0.0, %v663
      %v665 = vpop.f32.mrb[0].mxu0
      %666 = vmatprep.mubr.f32.mxu0 0.0
      %667 = vmatmul.mubr.f32.gmra.mrb[0].mxu0 %v495
      %v668 = vpop.f32.mrb[0].mxu0
      %v669 = vadd.f32 0.0, %v668
      %v670 = vpop.f32.mrb[0].mxu0
      %671 = vmatprep.mubr.f32.mxu0 0.0
      %672 = vmatmul.mubr.f32.gmra.mrb[0].mxu0 %v498
      %v673 = vpop.f32.mrb[0].mxu0
      %v674 = vadd.f32 0.0, %v673
      %v675 = vpop.f32.mrb[0].mxu0
      %676 = vmatprep.mubr.f32.mxu0 0.0
      %677 = vmatmul.mubr.f32.gmra.mrb[0].mxu0 %v501
      %v678 = vpop.f32.mrb[0].mxu0
      %v679 = vadd.f32 0.0, %v678
      %v680 = vpop.f32.mrb[0].mxu0
      %681 = vmatprep.mubr.f32.mxu0 0.0
      %682 = vmatmul.mubr.f32.gmra.mrb[0].mxu0 %v504
      %v683 = vpop.f32.mrb[0].mxu0
      %v684 = vadd.f32 0.0, %v683
      %v685 = vpop.f32.mrb[0].mxu0
      %686 = vmatprep.mubr.f32.mxu0 0.0
      %687 = vmatmul.mubr.f32.gmra.mrb[0].mxu0 %v507
      %v688 = vpop.f32.mrb[0].mxu0
      %v689 = vadd.f32 0.0, %v688
      %v690 = vpop.f32.mrb[0].mxu0
      %691 = vmatprep.mubr.f32.mxu0 0.0
      %692 = vmatmul.mubr.f32.gmra.mrb[0].mxu0 %v510
      %v693 = vpop.f32.mrb[0].mxu0
      %v694 = vadd.f32 0.0, %v693
      %v695 = vpop.f32.mrb[0].mxu0
      %696 = vmatprep.mubr.f32.mxu0 0.0
      %697 = vmatmul.mubr.f32.gmra.mrb[0].mxu0 %v513
      %v698 = vpop.f32.mrb[0].mxu0
      %v699 = vadd.f32 0.0, %v698
      %v700 = vpop.f32.mrb[0].mxu0
      %701 = vmatprep.mubr.f32.mxu0 0.0
      %702 = vmatmul.mubr.f32.gmra.mrb[0].mxu0 %v516
      %v703 = vpop.f32.mrb[0].mxu0
      %v704 = vadd.f32 0.0, %v703
      %v705 = vpop.f32.mrb[0].mxu0
      %706 = vmatprep.mubr.f32.mxu0 0.0
      %707 = vmatmul.mubr.f32.gmra.mrb[0].mxu0 %v519
      %v708 = vpop.f32.mrb[0].mxu0
      %v709 = vadd.f32 0.0, %v708
      %v710 = vpop.f32.mrb[0].mxu0
      %711 = vmatprep.mubr.f32.mxu0 0.0
      %712 = vmatmul.mubr.f32.gmra.mrb[0].mxu0 %v522
      %v713 = vpop.f32.mrb[0].mxu0
      %v714 = vadd.f32 0.0, %v713
      %v715 = vpop.f32.mrb[0].mxu0
      %716 = vmatprep.mubr.f32.mxu0 0.0
      %717 = vmatmul.mubr.f32.gmra.mrb[0].mxu0 %v525
      %v718 = vpop.f32.mrb[0].mxu0
      %v719 = vadd.f32 0.0, %v718
      %v720 = vpop.f32.mrb[0].mxu0
      %721 = vmatprep.mubr.f32.mxu0 0.0
      %722 = vmatmul.mubr.f32.gmra.mrb[0].mxu0 %v528
      %v723 = vpop.f32.mrb[0].mxu0
      %v724 = vadd.f32 0.0, %v723
      %v725 = vpop.f32.mrb[0].mxu0
      %726 = vmatprep.mubr.f32.mxu0 0.0
      %727 = vmatmul.mubr.f32.gmra.mrb[0].mxu0 %v531
      %v728 = vpop.f32.mrb[0].mxu0
      %v729 = vadd.f32 0.0, %v728
      %v730 = vpop.f32.mrb[0].mxu0
      %731 = vmatprep.mubr.f32.mxu0 0.0
      %732 = vmatmul.mubr.f32.gmra.mrb[0].mxu0 %v534
      %v733 = vpop.f32.mrb[0].mxu0
      %v734 = vadd.f32 0.0, %v733
      %v735 = vpop.f32.mrb[0].mxu0
      %736 = vmatprep.mubr.f32.mxu0 0.0
      %737 = vmatmul.mubr.f32.gmra.mrb[0].mxu0 %v537
      %v738 = vpop.f32.mrb[0].mxu0
      %v739 = vadd.f32 0.0, %v738
      %v740 = vpop.f32.mrb[0].mxu0
      %741 = vmatprep.mubr.f32.mxu0 0.0
      %742 = vmatmul.mubr.f32.gmra.mrb[0].mxu0 %v540
      %v743 = vpop.f32.mrb[0].mxu0
      %v744 = vadd.f32 0.0, %v743
      %v745 = vpop.f32.mrb[0].mxu0
      %746 = vmatprep.mubr.f32.mxu0 0.0
      %747 = vmatmul.mubr.f32.gmra.mrb[0].mxu0 %v543
      %v748 = vpop.f32.mrb[0].mxu0
      %v749 = vadd.f32 0.0, %v748
      %v750 = vpop.f32.mrb[0].mxu0
      %751 = vmatprep.mubr.f32.mxu0 0.0
      %752 = vmatmul.mubr.f32.gmra.mrb[0].mxu0 %v546
      %v753 = vpop.f32.mrb[0].mxu0
      %v754 = vadd.f32 0.0, %v753
      %v755 = vpop.f32.mrb[0].mxu0
      %756 = vmatprep.mubr.f32.mxu0 0.0
      %757 = vmatmul.mubr.f32.gmra.mrb[0].mxu0 %v549
      %v758 = vpop.f32.mrb[0].mxu0
      %v759 = vadd.f32 0.0, %v758
      %v760 = vpop.f32.mrb[0].mxu0
      %761 = vmatprep.mubr.f32.mxu0 0.0
      %762 = vmatmul.mubr.f32.gmra.mrb[0].mxu0 %v552
      %v763 = vpop.f32.mrb[0].mxu0
      %v764 = vadd.f32 0.0, %v763
      %v765 = vpop.f32.mrb[0].mxu0
      %766 = vmatprep.mubr.f32.mxu0 0.0
      %767 = vmatmul.mubr.f32.gmra.mrb[0].mxu0 %v555
      %v768 = vpop.f32.mrb[0].mxu0
      %v769 = vadd.f32 0.0, %v768
      %v770 = vpop.f32.mrb[0].mxu0
      %771 = vmatprep.mubr.f32.mxu0 0.0
      %772 = vmatmul.mubr.f32.gmra.mrb[0].mxu0 %v558
      %v773 = vpop.f32.mrb[0].mxu0
      %v774 = vadd.f32 0.0, %v773
      %v775 = vpop.f32.mrb[0].mxu0
      %776 = vmatprep.mubr.f32.mxu0 0.0
      %777 = vmatmul.mubr.f32.gmra.mrb[0].mxu0 %v561
      %v778 = vpop.f32.mrb[0].mxu0
      %v779 = vadd.f32 0.0, %v778
      %v780 = vpop.f32.mrb[0].mxu0
      %781 = vmatprep.mubr.f32.mxu0 0.0
      %782 = vmatmul.mubr.f32.gmra.mrb[0].mxu0 %v564
      %v783 = vpop.f32.mrb[0].mxu0
      %v784 = vadd.f32 0.0, %v783
      %v785 = vpop.f32.mrb[0].mxu0
      %786 = vmatprep.mubr.f32.mxu0 0.0
      %787 = vmatmul.mubr.f32.gmra.mrb[0].mxu0 %v567
      %v788 = vpop.f32.mrb[0].mxu0
      %v789 = vadd.f32 0.0, %v788
      %v790 = vpop.f32.mrb[0].mxu0
      %791 = vmatprep.mubr.f32.mxu0 0.0
      %792 = vmatmul.mubr.f32.gmra.mrb[0].mxu0 %v570
      %v793 = vpop.f32.mrb[0].mxu0
      %v794 = vadd.f32 0.0, %v793
      %v795 = vpop.f32.mrb[0].mxu0
      %796 = vmatprep.mubr.f32.mxu0 0.0
      %797 = vmatmul.mubr.f32.gmra.mrb[0].mxu0 %v573
      %v798 = vpop.f32.mrb[0].mxu0
      %v799 = vadd.f32 0.0, %v798
      %v800 = vpop.f32.mrb[0].mxu0
      %801 = vmatprep.mubr.f32.mxu0 0.0
      %802 = vmatmul.mubr.f32.gmra.mrb[0].mxu0 %v576
      %v803 = vpop.f32.mrb[0].mxu0
      %v804 = vadd.f32 0.0, %v803
      %v805 = vpop.f32.mrb[0].mxu0
      %806 = vdwg.mxu0
      %v807 = vadd.f32 %v446, %v649
      %v808 = vadd.f32 %v446, %v654
      %v809 = vadd.f32 %v446, %v659
      %v810 = vadd.f32 %v446, %v664
      %v811 = vadd.f32 %v446, %v669
      %v812 = vadd.f32 %v446, %v674
      %v813 = vadd.f32 %v446, %v679
      %v814 = vadd.f32 %v446, %v684
      %v815 = vadd.f32 %v446, %v689
      %v816 = vadd.f32 %v446, %v694
      %v817 = vadd.f32 %v446, %v699
      %v818 = vadd.f32 %v446, %v704
      %v819 = vadd.f32 %v446, %v709
      %v820 = vadd.f32 %v446, %v714
      %v821 = vadd.f32 %v446, %v719
      %v822 = vadd.f32 %v446, %v724
      %v823 = vadd.f32 %v446, %v729
      %v824 = vadd.f32 %v446, %v734
      %v825 = vadd.f32 %v446, %v739
      %v826 = vadd.f32 %v446, %v744
      %v827 = vadd.f32 %v446, %v749
      %v828 = vadd.f32 %v446, %v754
      %v829 = vadd.f32 %v446, %v759
      %v830 = vadd.f32 %v446, %v764
      %v831 = vadd.f32 %v446, %v769
      %v832 = vadd.f32 %v446, %v774
      %v833 = vadd.f32 %v446, %v779
      %v834 = vadd.f32 %v446, %v784
      %v835 = vadd.f32 %v446, %v789
      %v836 = vadd.f32 %v446, %v794
      %v837 = vadd.f32 %v446, %v799
      %v838 = vadd.f32 %v446, %v804
      %vm839 = vcmask 64512
      %840 = vst.msk [vmem:[#allocation2] sm:$0xff] %vm839, %v807
      %841 = vst.msk [vmem:[#allocation2 + $0x8] sm:$0xff] %vm839, %v808
      %842 = vst.msk [vmem:[#allocation2 + $0x10] sm:$0xff] %vm839, %v809
      %843 = vst.msk [vmem:[#allocation2 + $0x18] sm:$0xff] %vm839, %v810
      %844 = vst.msk [vmem:[#allocation2 + $0x20] sm:$0xff] %vm839, %v811
      %845 = vst.msk [vmem:[#allocation2 + $0x28] sm:$0xff] %vm839, %v812
      %846 = vst.msk [vmem:[#allocation2 + $0x30] sm:$0xff] %vm839, %v813
      %847 = vst.msk [vmem:[#allocation2 + $0x38] sm:$0xff] %vm839, %v814
      %848 = vst.msk [vmem:[#allocation2 + $0x40] sm:$0xff] %vm839, %v815
      %849 = vst.msk [vmem:[#allocation2 + $0x48] sm:$0xff] %vm839, %v816
      %850 = vst.msk [vmem:[#allocation2 + $0x50] sm:$0xff] %vm839, %v817
      %851 = vst.msk [vmem:[#allocation2 + $0x58] sm:$0xff] %vm839, %v818
      %852 = vst.msk [vmem:[#allocation2 + $0x60] sm:$0xff] %vm839, %v819
      %853 = vst.msk [vmem:[#allocation2 + $0x68] sm:$0xff] %vm839, %v820
      %854 = vst.msk [vmem:[#allocation2 + $0x70] sm:$0xff] %vm839, %v821
      %855 = vst.msk [vmem:[#allocation2 + $0x78] sm:$0xff] %vm839, %v822
      %856 = vst.msk [vmem:[#allocation2 + $0x80] sm:$0xff] %vm839, %v823
      %857 = vst.msk [vmem:[#allocation2 + $0x88] sm:$0xff] %vm839, %v824
      %858 = vst.msk [vmem:[#allocation2 + $0x90] sm:$0xff] %vm839, %v825
      %859 = vst.msk [vmem:[#allocation2 + $0x98] sm:$0xff] %vm839, %v826
      %860 = vst.msk [vmem:[#allocation2 + $0xa0] sm:$0xff] %vm839, %v827
      %861 = vst.msk [vmem:[#allocation2 + $0xa8] sm:$0xff] %vm839, %v828
      %862 = vst.msk [vmem:[#allocation2 + $0xb0] sm:$0xff] %vm839, %v829
      %863 = vst.msk [vmem:[#allocation2 + $0xb8] sm:$0xff] %vm839, %v830
      %864 = vst.msk [vmem:[#allocation2 + $0xc0] sm:$0xff] %vm839, %v831
      %865 = vst.msk [vmem:[#allocation2 + $0xc8] sm:$0xff] %vm839, %v832
      %866 = vst.msk [vmem:[#allocation2 + $0xd0] sm:$0xff] %vm839, %v833
      %867 = vst.msk [vmem:[#allocation2 + $0xd8] sm:$0xff] %vm839, %v834
      %868 = vst.msk [vmem:[#allocation2 + $0xe0] sm:$0xff] %vm839, %v835
      %869 = vst.msk [vmem:[#allocation2 + $0xe8] sm:$0xff] %vm839, %v836
      %870 = vst.msk [vmem:[#allocation2 + $0xf0] sm:$0xff] %vm839, %v837
      %871 = vst.msk [vmem:[#allocation2 + $0xf8] sm:$0xff] %vm839, %v838
      %v872 = vlaneseq
      %v873 = vshrl.u32 %v872, 7
      %v874 = vadd.s32 %v873, 8
      %vm875 = vcmp.eq.s32.totalorder %v873, 0
      %vm876 = vcmp.eq.s32.totalorder %v874, 0
      %v877 = vrot.slane %v409, 7
      %v878 = vrot.slane %v411, 7
      %v879 = vrot.slane %v413, 7
      %v880 = vrot.slane %v415, 7
      %v881 = vrot.slane %v417, 7
      %v882 = vrot.slane %v419, 7
      %v883 = vrot.slane %v421, 7
      %v884 = vrot.slane %v423, 7
      %v885 = vrot.slane %v425, 7
      %v886 = vrot.slane %v427, 7
      %v887 = vrot.slane %v429, 7
      %v888 = vrot.slane %v431, 7
      %v889 = vrot.slane %v433, 7
      %v890 = vrot.slane %v435, 7
      %v891 = vrot.slane %v437, 7
      %v892 = vrot.slane %v439, 7
      %v893 = vrot.slane %v410, 7
      %v894 = vrot.slane %v412, 7
      %v895 = vrot.slane %v414, 7
      %v896 = vrot.slane %v416, 7
      %v897 = vrot.slane %v418, 7
      %v898 = vrot.slane %v420, 7
      %v899 = vrot.slane %v422, 7
      %v900 = vrot.slane %v424, 7
      %v901 = vrot.slane %v426, 7
      %v902 = vrot.slane %v428, 7
      %v903 = vrot.slane %v430, 7
      %v904 = vrot.slane %v432, 7
      %v905 = vrot.slane %v434, 7
      %v906 = vrot.slane %v436, 7
      %v907 = vrot.slane %v438, 7
      %v908 = vrot.slane %v440, 7
      %vm909 = vcmp.lt.s32.totalorder %v873, 1
      %v910 = vsel %vm909, %v877, %v893
      %v911 = vsel %vm909, %v878, %v894
      %v912 = vsel %vm909, %v879, %v895
      %v913 = vsel %vm909, %v880, %v896
      %v914 = vsel %vm909, %v881, %v897
      %v915 = vsel %vm909, %v882, %v898
      %v916 = vsel %vm909, %v883, %v899
      %v917 = vsel %vm909, %v884, %v900
      %v918 = vsel %vm909, %v885, %v901
      %v919 = vsel %vm909, %v886, %v902
      %v920 = vsel %vm909, %v887, %v903
      %v921 = vsel %vm909, %v888, %v904
      %v922 = vsel %vm909, %v889, %v905
      %v923 = vsel %vm909, %v890, %v906
      %v924 = vsel %vm909, %v891, %v907
      %v925 = vsel %vm909, %v892, %v908
      %v926 = vsel %vm909, %v893, %v877
      %v927 = vsel %vm909, %v894, %v878
      %v928 = vsel %vm909, %v895, %v879
      %v929 = vsel %vm909, %v896, %v880
      %v930 = vsel %vm909, %v897, %v881
      %v931 = vsel %vm909, %v898, %v882
      %v932 = vsel %vm909, %v899, %v883
      %v933 = vsel %vm909, %v900, %v884
      %v934 = vsel %vm909, %v901, %v885
      %v935 = vsel %vm909, %v902, %v886
      %v936 = vsel %vm909, %v903, %v887
      %v937 = vsel %vm909, %v904, %v888
      %v938 = vsel %vm909, %v905, %v889
      %v939 = vsel %vm909, %v906, %v890
      %v940 = vsel %vm909, %v907, %v891
      %v941 = vsel %vm909, %v908, %v892
      %v942 = vsel %vm875, 0.0, %v926
      %v943 = vsel %vm876, 0.0, %v910
      %v944 = vsel %vm875, 0.0, %v927
      %v945 = vsel %vm876, 0.0, %v911
      %v946 = vsel %vm875, 0.0, %v928
      %v947 = vsel %vm876, 0.0, %v912
      %v948 = vsel %vm875, 0.0, %v929
      %v949 = vsel %vm876, 0.0, %v913
      %v950 = vsel %vm875, 0.0, %v930
      %v951 = vsel %vm876, 0.0, %v914
      %v952 = vsel %vm875, 0.0, %v931
      %v953 = vsel %vm876, 0.0, %v915
      %v954 = vsel %vm875, 0.0, %v932
      %v955 = vsel %vm876, 0.0, %v916
      %v956 = vsel %vm875, 0.0, %v933
      %v957 = vsel %vm876, 0.0, %v917
      %v958 = vsel %vm875, 0.0, %v934
      %v959 = vsel %vm876, 0.0, %v918
      %v960 = vsel %vm875, 0.0, %v935
      %v961 = vsel %vm876, 0.0, %v919
      %v962 = vsel %vm875, 0.0, %v936
      %v963 = vsel %vm876, 0.0, %v920
      %v964 = vsel %vm875, 0.0, %v937
      %v965 = vsel %vm876, 0.0, %v921
      %v966 = vsel %vm875, 0.0, %v938
      %v967 = vsel %vm876, 0.0, %v922
      %v968 = vsel %vm875, 0.0, %v939
      %v969 = vsel %vm876, 0.0, %v923
      %v970 = vsel %vm875, 0.0, %v940
      %v971 = vsel %vm876, 0.0, %v924
      %v972 = vsel %vm875, 0.0, %v941
      %v973 = vsel %vm876, 0.0, %v925
      %vm974 = vcmp.eq.s32.totalorder %v873, 15
      %vm975 = vcmp.eq.s32.totalorder %v874, 15
      %v976 = vrot.slane %v409, 1
      %v977 = vrot.slane %v411, 1
      %v978 = vrot.slane %v413, 1
      %v979 = vrot.slane %v415, 1
      %v980 = vrot.slane %v417, 1
      %v981 = vrot.slane %v419, 1
      %v982 = vrot.slane %v421, 1
      %v983 = vrot.slane %v423, 1
      %v984 = vrot.slane %v425, 1
      %v985 = vrot.slane %v427, 1
      %v986 = vrot.slane %v429, 1
      %v987 = vrot.slane %v431, 1
      %v988 = vrot.slane %v433, 1
      %v989 = vrot.slane %v435, 1
      %v990 = vrot.slane %v437, 1
      %v991 = vrot.slane %v439, 1
      %v992 = vrot.slane %v410, 1
      %v993 = vrot.slane %v412, 1
      %v994 = vrot.slane %v414, 1
      %v995 = vrot.slane %v416, 1
      %v996 = vrot.slane %v418, 1
      %v997 = vrot.slane %v420, 1
      %v998 = vrot.slane %v422, 1
      %v999 = vrot.slane %v424, 1
      %v1000 = vrot.slane %v426, 1
      %v1001 = vrot.slane %v428, 1
      %v1002 = vrot.slane %v430, 1
      %v1003 = vrot.slane %v432, 1
      %v1004 = vrot.slane %v434, 1
      %v1005 = vrot.slane %v436, 1
      %v1006 = vrot.slane %v438, 1
      %v1007 = vrot.slane %v440, 1
      %vm1008 = vcmp.lt.s32.totalorder %v873, 7
      %v1009 = vsel %vm1008, %v976, %v992
      %v1010 = vsel %vm1008, %v977, %v993
      %v1011 = vsel %vm1008, %v978, %v994
      %v1012 = vsel %vm1008, %v979, %v995
      %v1013 = vsel %vm1008, %v980, %v996
      %v1014 = vsel %vm1008, %v981, %v997
      %v1015 = vsel %vm1008, %v982, %v998
      %v1016 = vsel %vm1008, %v983, %v999
      %v1017 = vsel %vm1008, %v984, %v1000
      %v1018 = vsel %vm1008, %v985, %v1001
      %v1019 = vsel %vm1008, %v986, %v1002
      %v1020 = vsel %vm1008, %v987, %v1003
      %v1021 = vsel %vm1008, %v988, %v1004
      %v1022 = vsel %vm1008, %v989, %v1005
      %v1023 = vsel %vm1008, %v990, %v1006
      %v1024 = vsel %vm1008, %v991, %v1007
      %v1025 = vsel %vm1008, %v992, %v976
      %v1026 = vsel %vm1008, %v993, %v977
      %v1027 = vsel %vm1008, %v994, %v978
      %v1028 = vsel %vm1008, %v995, %v979
      %v1029 = vsel %vm1008, %v996, %v980
      %v1030 = vsel %vm1008, %v997, %v981
      %v1031 = vsel %vm1008, %v998, %v982
      %v1032 = vsel %vm1008, %v999, %v983
      %v1033 = vsel %vm1008, %v1000, %v984
      %v1034 = vsel %vm1008, %v1001, %v985
      %v1035 = vsel %vm1008, %v1002, %v986
      %v1036 = vsel %vm1008, %v1003, %v987
      %v1037 = vsel %vm1008, %v1004, %v988
      %v1038 = vsel %vm1008, %v1005, %v989
      %v1039 = vsel %vm1008, %v1006, %v990
      %v1040 = vsel %vm1008, %v1007, %v991
      %v1041 = vsel %vm974, 0.0, %v1009
      %v1042 = vsel %vm975, 0.0, %v1025
      %v1043 = vsel %vm974, 0.0, %v1010
      %v1044 = vsel %vm975, 0.0, %v1026
      %v1045 = vsel %vm974, 0.0, %v1011
      %v1046 = vsel %vm975, 0.0, %v1027
      %v1047 = vsel %vm974, 0.0, %v1012
      %v1048 = vsel %vm975, 0.0, %v1028
      %v1049 = vsel %vm974, 0.0, %v1013
      %v1050 = vsel %vm975, 0.0, %v1029
      %v1051 = vsel %vm974, 0.0, %v1014
      %v1052 = vsel %vm975, 0.0, %v1030
      %v1053 = vsel %vm974, 0.0, %v1015
      %v1054 = vsel %vm975, 0.0, %v1031
      %v1055 = vsel %vm974, 0.0, %v1016
      %v1056 = vsel %vm975, 0.0, %v1032
      %v1057 = vsel %vm974, 0.0, %v1017
      %v1058 = vsel %vm975, 0.0, %v1033
      %v1059 = vsel %vm974, 0.0, %v1018
      %v1060 = vsel %vm975, 0.0, %v1034
      %v1061 = vsel %vm974, 0.0, %v1019
      %v1062 = vsel %vm975, 0.0, %v1035
      %v1063 = vsel %vm974, 0.0, %v1020
      %v1064 = vsel %vm975, 0.0, %v1036
      %v1065 = vsel %vm974, 0.0, %v1021
      %v1066 = vsel %vm975, 0.0, %v1037
      %v1067 = vsel %vm974, 0.0, %v1022
      %v1068 = vsel %vm975, 0.0, %v1038
      %v1069 = vsel %vm974, 0.0, %v1023
      %v1070 = vsel %vm975, 0.0, %v1039
      %v1071 = vsel %vm974, 0.0, %v1024
      %v1072 = vsel %vm975, 0.0, %v1040
      %1105 = vrot.lane.b32.xlu0 %v409, 8
      %v1106 = vpop.permute.xlu0 %1105
      %1107 = vrot.lane.b32.xlu0 %v410, 8
      %v1108 = vpop.permute.xlu0 %1107
      %1109 = vrot.lane.b32.xlu0 %v411, 8
      %v1110 = vpop.permute.xlu0 %1109
      %1111 = vrot.lane.b32.xlu0 %v412, 8
      %v1112 = vpop.permute.xlu0 %1111
      %1113 = vrot.lane.b32.xlu0 %v413, 8
      %v1114 = vpop.permute.xlu0 %1113
      %1115 = vrot.lane.b32.xlu0 %v414, 8
      %v1116 = vpop.permute.xlu0 %1115
      %1117 = vrot.lane.b32.xlu0 %v415, 8
      %v1118 = vpop.permute.xlu0 %1117
      %1119 = vrot.lane.b32.xlu0 %v416, 8
      %v1120 = vpop.permute.xlu0 %1119
      %1121 = vrot.lane.b32.xlu0 %v417, 8
      %v1122 = vpop.permute.xlu0 %1121
      %1123 = vrot.lane.b32.xlu0 %v418, 8
      %v1124 = vpop.permute.xlu0 %1123
      %1125 = vrot.lane.b32.xlu0 %v419, 8
      %v1126 = vpop.permute.xlu0 %1125
      %1127 = vrot.lane.b32.xlu0 %v420, 8
      %v1128 = vpop.permute.xlu0 %1127
      %1129 = vrot.lane.b32.xlu0 %v421, 8
      %v1130 = vpop.permute.xlu0 %1129
      %1131 = vrot.lane.b32.xlu0 %v422, 8
      %v1132 = vpop.permute.xlu0 %1131
      %1133 = vrot.lane.b32.xlu0 %v423, 8
      %v1134 = vpop.permute.xlu0 %1133
      %1135 = vrot.lane.b32.xlu0 %v424, 8
      %v1136 = vpop.permute.xlu0 %1135
      %1137 = vrot.lane.b32.xlu0 %v425, 8
      %v1138 = vpop.permute.xlu0 %1137
      %1139 = vrot.lane.b32.xlu0 %v426, 8
      %v1140 = vpop.permute.xlu0 %1139
      %1141 = vrot.lane.b32.xlu0 %v427, 8
      %v1142 = vpop.permute.xlu0 %1141
      %1143 = vrot.lane.b32.xlu0 %v428, 8
      %v1144 = vpop.permute.xlu0 %1143
      %1145 = vrot.lane.b32.xlu0 %v429, 8
      %v1146 = vpop.permute.xlu0 %1145
      %1147 = vrot.lane.b32.xlu0 %v430, 8
      %v1148 = vpop.permute.xlu0 %1147
      %1149 = vrot.lane.b32.xlu0 %v431, 8
      %v1150 = vpop.permute.xlu0 %1149
      %1151 = vrot.lane.b32.xlu0 %v432, 8
      %v1152 = vpop.permute.xlu0 %1151
      %1153 = vrot.lane.b32.xlu0 %v433, 8
      %v1154 = vpop.permute.xlu0 %1153
      %1155 = vrot.lane.b32.xlu0 %v434, 8
      %v1156 = vpop.permute.xlu0 %1155
      %1157 = vrot.lane.b32.xlu0 %v435, 8
      %v1158 = vpop.permute.xlu0 %1157
      %1159 = vrot.lane.b32.xlu0 %v436, 8
      %v1160 = vpop.permute.xlu0 %1159
      %1161 = vrot.lane.b32.xlu0 %v437, 8
      %v1162 = vpop.permute.xlu0 %1161
      %1163 = vrot.lane.b32.xlu0 %v438, 8
      %v1164 = vpop.permute.xlu0 %1163
      %1165 = vrot.lane.b32.xlu0 %v439, 8
      %v1166 = vpop.permute.xlu0 %1165
      %1167 = vrot.lane.b32.xlu0 %v440, 8
      %v1168 = vpop.permute.xlu0 %1167
      %1233 = vrot.lane.b32.xlu0 %v1041, 16
      %v1234 = vpop.permute.xlu0 %1233
      %1235 = vrot.lane.b32.xlu0 %v1042, 16
      %v1236 = vpop.permute.xlu0 %1235
      %1237 = vrot.lane.b32.xlu0 %v1043, 16
      %v1238 = vpop.permute.xlu0 %1237
      %1239 = vrot.lane.b32.xlu0 %v1044, 16
      %v1240 = vpop.permute.xlu0 %1239
      %1241 = vrot.lane.b32.xlu0 %v1045, 16
      %v1242 = vpop.permute.xlu0 %1241
      %1243 = vrot.lane.b32.xlu0 %v1046, 16
      %v1244 = vpop.permute.xlu0 %1243
      %1245 = vrot.lane.b32.xlu0 %v1047, 16
      %v1246 = vpop.permute.xlu0 %1245
      %1247 = vrot.lane.b32.xlu0 %v1048, 16
      %v1248 = vpop.permute.xlu0 %1247
      %1249 = vrot.lane.b32.xlu0 %v1049, 16
      %v1250 = vpop.permute.xlu0 %1249
      %1251 = vrot.lane.b32.xlu0 %v1050, 16
      %v1252 = vpop.permute.xlu0 %1251
      %1253 = vrot.lane.b32.xlu0 %v1051, 16
      %v1254 = vpop.permute.xlu0 %1253
      %1255 = vrot.lane.b32.xlu0 %v1052, 16
      %v1256 = vpop.permute.xlu0 %1255
      %1257 = vrot.lane.b32.xlu0 %v1053, 16
      %v1258 = vpop.permute.xlu0 %1257
      %1259 = vrot.lane.b32.xlu0 %v1054, 16
      %v1260 = vpop.permute.xlu0 %1259
      %1261 = vrot.lane.b32.xlu0 %v1055, 16
      %v1262 = vpop.permute.xlu0 %1261
      %1263 = vrot.lane.b32.xlu0 %v1056, 16
      %v1264 = vpop.permute.xlu0 %1263
      %1265 = vrot.lane.b32.xlu0 %v1057, 16
      %v1266 = vpop.permute.xlu0 %1265
      %1267 = vrot.lane.b32.xlu0 %v1058, 16
      %v1268 = vpop.permute.xlu0 %1267
      %1269 = vrot.lane.b32.xlu0 %v1059, 16
      %v1270 = vpop.permute.xlu0 %1269
      %1271 = vrot.lane.b32.xlu0 %v1060, 16
      %v1272 = vpop.permute.xlu0 %1271
      %1273 = vrot.lane.b32.xlu0 %v1061, 16
      %v1274 = vpop.permute.xlu0 %1273
      %1275 = vrot.lane.b32.xlu0 %v1062, 16
      %v1276 = vpop.permute.xlu0 %1275
      %1277 = vrot.lane.b32.xlu0 %v1063, 16
      %v1278 = vpop.permute.xlu0 %1277
      %1279 = vrot.lane.b32.xlu0 %v1064, 16
      %v1280 = vpop.permute.xlu0 %1279
      %1281 = vrot.lane.b32.xlu0 %v1065, 16
      %v1282 = vpop.permute.xlu0 %1281
      %1283 = vrot.lane.b32.xlu0 %v1066, 16
      %v1284 = vpop.permute.xlu0 %1283
      %1285 = vrot.lane.b32.xlu0 %v1067, 16
      %v1286 = vpop.permute.xlu0 %1285
      %1287 = vrot.lane.b32.xlu0 %v1068, 16
      %v1288 = vpop.permute.xlu0 %1287
      %1289 = vrot.lane.b32.xlu0 %v1069, 16
      %v1290 = vpop.permute.xlu0 %1289
      %1291 = vrot.lane.b32.xlu0 %v1070, 16
      %v1292 = vpop.permute.xlu0 %1291
      %1293 = vrot.lane.b32.xlu0 %v1071, 16
      %v1294 = vpop.permute.xlu0 %1293
      %1295 = vrot.lane.b32.xlu0 %v1072, 16
      %v1296 = vpop.permute.xlu0 %1295
      %v1329 = vsel %vm839, %v942, %v1106
      %v1330 = vsel %vm839, %v943, %v1108
      %v1331 = vsel %vm839, %v944, %v1110
      %v1332 = vsel %vm839, %v945, %v1112
      %v1333 = vsel %vm839, %v946, %v1114
      %v1334 = vsel %vm839, %v947, %v1116
      %v1335 = vsel %vm839, %v948, %v1118
      %v1336 = vsel %vm839, %v949, %v1120
      %v1337 = vsel %vm839, %v950, %v1122
      %v1338 = vsel %vm839, %v951, %v1124
      %v1339 = vsel %vm839, %v952, %v1126
      %v1340 = vsel %vm839, %v953, %v1128
      %v1341 = vsel %vm839, %v954, %v1130
      %v1342 = vsel %vm839, %v955, %v1132
      %v1343 = vsel %vm839, %v956, %v1134
      %v1344 = vsel %vm839, %v957, %v1136
      %v1345 = vsel %vm839, %v958, %v1138
      %v1346 = vsel %vm839, %v959, %v1140
      %v1347 = vsel %vm839, %v960, %v1142
      %v1348 = vsel %vm839, %v961, %v1144
      %v1349 = vsel %vm839, %v962, %v1146
      %v1350 = vsel %vm839, %v963, %v1148
      %v1351 = vsel %vm839, %v964, %v1150
      %v1352 = vsel %vm839, %v965, %v1152
      %v1353 = vsel %vm839, %v966, %v1154
      %v1354 = vsel %vm839, %v967, %v1156
      %v1355 = vsel %vm839, %v968, %v1158
      %v1356 = vsel %vm839, %v969, %v1160
      %v1357 = vsel %vm839, %v970, %v1162
      %v1358 = vsel %vm839, %v971, %v1164
      %v1359 = vsel %vm839, %v972, %v1166
      %v1360 = vsel %vm839, %v973, %v1168
      %vm1361 = vcmask 130048
      %v1362 = vsel %vm1361, %v1329, %v1234
      %v1363 = vsel %vm1361, %v1330, %v1236
      %v1364 = vsel %vm1361, %v1331, %v1238
      %v1365 = vsel %vm1361, %v1332, %v1240
      %v1366 = vsel %vm1361, %v1333, %v1242
      %v1367 = vsel %vm1361, %v1334, %v1244
      %v1368 = vsel %vm1361, %v1335, %v1246
      %v1369 = vsel %vm1361, %v1336, %v1248
      %v1370 = vsel %vm1361, %v1337, %v1250
      %v1371 = vsel %vm1361, %v1338, %v1252
      %v1372 = vsel %vm1361, %v1339, %v1254
      %v1373 = vsel %vm1361, %v1340, %v1256
      %v1374 = vsel %vm1361, %v1341, %v1258
      %v1375 = vsel %vm1361, %v1342, %v1260
      %v1376 = vsel %vm1361, %v1343, %v1262
      %v1377 = vsel %vm1361, %v1344, %v1264
      %v1378 = vsel %vm1361, %v1345, %v1266
      %v1379 = vsel %vm1361, %v1346, %v1268
      %v1380 = vsel %vm1361, %v1347, %v1270
      %v1381 = vsel %vm1361, %v1348, %v1272
      %v1382 = vsel %vm1361, %v1349, %v1274
      %v1383 = vsel %vm1361, %v1350, %v1276
      %v1384 = vsel %vm1361, %v1351, %v1278
      %v1385 = vsel %vm1361, %v1352, %v1280
      %v1386 = vsel %vm1361, %v1353, %v1282
      %v1387 = vsel %vm1361, %v1354, %v1284
      %v1388 = vsel %vm1361, %v1355, %v1286
      %v1389 = vsel %vm1361, %v1356, %v1288
      %v1390 = vsel %vm1361, %v1357, %v1290
      %v1391 = vsel %vm1361, %v1358, %v1292
      %v1392 = vsel %vm1361, %v1359, %v1294
      %v1393 = vsel %vm1361, %v1360, %v1296
      %v1394 = vld [vmem:[%s4] sm:$0xff]
      %v1395 = vld [vmem:[%s4 + $0x8] sm:$0xff]
      %v1396 = vld [vmem:[%s4 + $0x10] sm:$0xff]
      %vm1397 = vcmask 195584
      %v1399 = vsel %vm1397, %v1362, 0
      %v1402 = vsel %vm1397, %v1363, 0
      %v1405 = vsel %vm1397, %v1364, 0
      %v1408 = vsel %vm1397, %v1365, 0
      %v1411 = vsel %vm1397, %v1366, 0
      %v1414 = vsel %vm1397, %v1367, 0
      %v1417 = vsel %vm1397, %v1368, 0
      %v1420 = vsel %vm1397, %v1369, 0
      %v1423 = vsel %vm1397, %v1370, 0
      %v1426 = vsel %vm1397, %v1371, 0
      %v1429 = vsel %vm1397, %v1372, 0
      %v1432 = vsel %vm1397, %v1373, 0
      %v1435 = vsel %vm1397, %v1374, 0
      %v1438 = vsel %vm1397, %v1375, 0
      %v1441 = vsel %vm1397, %v1376, 0
      %v1444 = vsel %vm1397, %v1377, 0
      %v1447 = vsel %vm1397, %v1378, 0
      %v1450 = vsel %vm1397, %v1379, 0
      %v1453 = vsel %vm1397, %v1380, 0
      %v1456 = vsel %vm1397, %v1381, 0
      %v1459 = vsel %vm1397, %v1382, 0
      %v1462 = vsel %vm1397, %v1383, 0
      %v1465 = vsel %vm1397, %v1384, 0
      %v1468 = vsel %vm1397, %v1385, 0
      %v1471 = vsel %vm1397, %v1386, 0
      %v1474 = vsel %vm1397, %v1387, 0
      %v1477 = vsel %vm1397, %v1388, 0
      %v1480 = vsel %vm1397, %v1389, 0
      %v1483 = vsel %vm1397, %v1390, 0
      %v1486 = vsel %vm1397, %v1391, 0
      %v1489 = vsel %vm1397, %v1392, 0
      %v1492 = vsel %vm1397, %v1393, 0
      %1494 = vmatprep.subr.mxu0 0.0
      %1495 = vmatpush1.msra.mxu0 %v1394
      %1496 = vmatprep.subr.mxu0 0.0
      %1497 = vmatpush1.msra.mxu0 %v1395
      %1498 = vmatprep.subr.mxu0 0.0
      %1499 = vmatpush1.msra.mxu0 %v1396
      %1500 = vmatprep.subr.mxu0 0.0
      %1501 = vmatpush1.msra.mxu0 0.0
      %1502 = vmatprep.subr.mxu0 0.0
      %1503 = vmatpush1.msra.mxu0 0.0
      %1504 = vmatprep.subr.mxu0 0.0
      %1505 = vmatpush1.msra.mxu0 0.0
      %1506 = vmatprep.subr.mxu0 0.0
      %1507 = vmatpush1.msra.mxu0 0.0
      %1508 = vmatprep.subr.mxu0 0.0
      %1509 = vmatpush1.msra.mxu0 0.0
      %1510 = vmatprep.subr.mxu0 0.0
      %1511 = vmatpush1.msra.mxu0 0.0
      %1512 = vmatprep.subr.mxu0 0.0
      %1513 = vmatpush1.msra.mxu0 0.0
      %1514 = vmatprep.subr.mxu0 0.0
      %1515 = vmatpush1.msra.mxu0 0.0
      %1516 = vmatprep.subr.mxu0 0.0
      %1517 = vmatpush1.msra.mxu0 0.0
      %1518 = vmatprep.subr.mxu0 0.0
      %1519 = vmatpush1.msra.mxu0 0.0
      %1520 = vmatprep.subr.mxu0 0.0
      %1521 = vmatpush1.msra.mxu0 0.0
      %1522 = vmatprep.subr.mxu0 0.0
      %1523 = vmatpush1.msra.mxu0 0.0
      %1524 = vmatprep.subr.mxu0 0.0
      %1525 = vmatpush1.msra.mxu0 0.0
      %1526 = vmatprep.subr.mxu0 0.0
      %1527 = vmatpush1.msra.mxu0 0.0
      %1528 = vmatprep.subr.mxu0 0.0
      %1529 = vmatpush1.msra.mxu0 0.0
      %1530 = vmatprep.subr.mxu0 0.0
      %1531 = vmatpush1.msra.mxu0 0.0
      %1532 = vmatprep.subr.mxu0 0.0
      %1533 = vmatpush1.msra.mxu0 0.0
      %1534 = vmatprep.subr.mxu0 0.0
      %1535 = vmatpush1.msra.mxu0 0.0
      %1536 = vmatprep.subr.mxu0 0.0
      %1537 = vmatpush1.msra.mxu0 0.0
      %1538 = vmatprep.subr.mxu0 0.0
      %1539 = vmatpush1.msra.mxu0 0.0
      %1540 = vmatprep.subr.mxu0 0.0
      %1541 = vmatpush1.msra.mxu0 0.0
      %1542 = vmatprep.subr.mxu0 0.0
      %1543 = vmatpush1.msra.mxu0 0.0
      %1544 = vmatprep.subr.mxu0 0.0
      %1545 = vmatpush1.msra.mxu0 0.0
      %1546 = vmatprep.subr.mxu0 0.0
      %1547 = vmatpush1.msra.mxu0 0.0
      %1548 = vmatprep.subr.mxu0 0.0
      %1549 = vmatpush1.msra.mxu0 0.0
      %1550 = vmatprep.subr.mxu0 0.0
      %1551 = vmatpush1.msra.mxu0 0.0
      %1552 = vmatprep.subr.mxu0 0.0
      %1553 = vmatpush1.msra.mxu0 0.0
      %1554 = vmatprep.subr.mxu0 0.0
      %1555 = vmatpush1.msra.mxu0 0.0
      %1556 = vmatprep.subr.mxu0 0.0
      %1557 = vmatpush1.msra.mxu0 0.0
      %1558 = vmatprep.mubr.f32.mxu0 0.0
      %1559 = vmatmul.mubr.f32.gmra.mrb[0].mxu0 %v1399
      %v1560 = vpop.f32.mrb[0].mxu0
      %v1561 = vadd.f32 0.0, %v1560
      %v1562 = vpop.f32.mrb[0].mxu0
      %1563 = vmatprep.mubr.f32.mxu0 0.0
      %1564 = vmatmul.mubr.f32.gmra.mrb[0].mxu0 %v1402
      %v1565 = vpop.f32.mrb[0].mxu0
      %v1566 = vadd.f32 0.0, %v1565
      %v1567 = vpop.f32.mrb[0].mxu0
      %1568 = vmatprep.mubr.f32.mxu0 0.0
      %1569 = vmatmul.mubr.f32.gmra.mrb[0].mxu0 %v1405
      %v1570 = vpop.f32.mrb[0].mxu0
      %v1571 = vadd.f32 0.0, %v1570
      %v1572 = vpop.f32.mrb[0].mxu0
      %1573 = vmatprep.mubr.f32.mxu0 0.0
      %1574 = vmatmul.mubr.f32.gmra.mrb[0].mxu0 %v1408
      %v1575 = vpop.f32.mrb[0].mxu0
      %v1576 = vadd.f32 0.0, %v1575
      %v1577 = vpop.f32.mrb[0].mxu0
      %1578 = vmatprep.mubr.f32.mxu0 0.0
      %1579 = vmatmul.mubr.f32.gmra.mrb[0].mxu0 %v1411
      %v1580 = vpop.f32.mrb[0].mxu0
      %v1581 = vadd.f32 0.0, %v1580
      %v1582 = vpop.f32.mrb[0].mxu0
      %1583 = vmatprep.mubr.f32.mxu0 0.0
      %1584 = vmatmul.mubr.f32.gmra.mrb[0].mxu0 %v1414
      %v1585 = vpop.f32.mrb[0].mxu0
      %v1586 = vadd.f32 0.0, %v1585
      %v1587 = vpop.f32.mrb[0].mxu0
      %1588 = vmatprep.mubr.f32.mxu0 0.0
      %1589 = vmatmul.mubr.f32.gmra.mrb[0].mxu0 %v1417
      %v1590 = vpop.f32.mrb[0].mxu0
      %v1591 = vadd.f32 0.0, %v1590
      %v1592 = vpop.f32.mrb[0].mxu0
      %1593 = vmatprep.mubr.f32.mxu0 0.0
      %1594 = vmatmul.mubr.f32.gmra.mrb[0].mxu0 %v1420
      %v1595 = vpop.f32.mrb[0].mxu0
      %v1596 = vadd.f32 0.0, %v1595
      %v1597 = vpop.f32.mrb[0].mxu0
      %1598 = vmatprep.mubr.f32.mxu0 0.0
      %1599 = vmatmul.mubr.f32.gmra.mrb[0].mxu0 %v1423
      %v1600 = vpop.f32.mrb[0].mxu0
      %v1601 = vadd.f32 0.0, %v1600
      %v1602 = vpop.f32.mrb[0].mxu0
      %1603 = vmatprep.mubr.f32.mxu0 0.0
      %1604 = vmatmul.mubr.f32.gmra.mrb[0].mxu0 %v1426
      %v1605 = vpop.f32.mrb[0].mxu0
      %v1606 = vadd.f32 0.0, %v1605
      %v1607 = vpop.f32.mrb[0].mxu0
      %1608 = vmatprep.mubr.f32.mxu0 0.0
      %1609 = vmatmul.mubr.f32.gmra.mrb[0].mxu0 %v1429
      %v1610 = vpop.f32.mrb[0].mxu0
      %v1611 = vadd.f32 0.0, %v1610
      %v1612 = vpop.f32.mrb[0].mxu0
      %1613 = vmatprep.mubr.f32.mxu0 0.0
      %1614 = vmatmul.mubr.f32.gmra.mrb[0].mxu0 %v1432
      %v1615 = vpop.f32.mrb[0].mxu0
      %v1616 = vadd.f32 0.0, %v1615
      %v1617 = vpop.f32.mrb[0].mxu0
      %1618 = vmatprep.mubr.f32.mxu0 0.0
      %1619 = vmatmul.mubr.f32.gmra.mrb[0].mxu0 %v1435
      %v1620 = vpop.f32.mrb[0].mxu0
      %v1621 = vadd.f32 0.0, %v1620
      %v1622 = vpop.f32.mrb[0].mxu0
      %1623 = vmatprep.mubr.f32.mxu0 0.0
      %1624 = vmatmul.mubr.f32.gmra.mrb[0].mxu0 %v1438
      %v1625 = vpop.f32.mrb[0].mxu0
      %v1626 = vadd.f32 0.0, %v1625
      %v1627 = vpop.f32.mrb[0].mxu0
      %1628 = vmatprep.mubr.f32.mxu0 0.0
      %1629 = vmatmul.mubr.f32.gmra.mrb[0].mxu0 %v1441
      %v1630 = vpop.f32.mrb[0].mxu0
      %v1631 = vadd.f32 0.0, %v1630
      %v1632 = vpop.f32.mrb[0].mxu0
      %1633 = vmatprep.mubr.f32.mxu0 0.0
      %1634 = vmatmul.mubr.f32.gmra.mrb[0].mxu0 %v1444
      %v1635 = vpop.f32.mrb[0].mxu0
      %v1636 = vadd.f32 0.0, %v1635
      %v1637 = vpop.f32.mrb[0].mxu0
      %1638 = vmatprep.mubr.f32.mxu0 0.0
      %1639 = vmatmul.mubr.f32.gmra.mrb[0].mxu0 %v1447
      %v1640 = vpop.f32.mrb[0].mxu0
      %v1641 = vadd.f32 0.0, %v1640
      %v1642 = vpop.f32.mrb[0].mxu0
      %1643 = vmatprep.mubr.f32.mxu0 0.0
      %1644 = vmatmul.mubr.f32.gmra.mrb[0].mxu0 %v1450
      %v1645 = vpop.f32.mrb[0].mxu0
      %v1646 = vadd.f32 0.0, %v1645
      %v1647 = vpop.f32.mrb[0].mxu0
      %1648 = vmatprep.mubr.f32.mxu0 0.0
      %1649 = vmatmul.mubr.f32.gmra.mrb[0].mxu0 %v1453
      %v1650 = vpop.f32.mrb[0].mxu0
      %v1651 = vadd.f32 0.0, %v1650
      %v1652 = vpop.f32.mrb[0].mxu0
      %1653 = vmatprep.mubr.f32.mxu0 0.0
      %1654 = vmatmul.mubr.f32.gmra.mrb[0].mxu0 %v1456
      %v1655 = vpop.f32.mrb[0].mxu0
      %v1656 = vadd.f32 0.0, %v1655
      %v1657 = vpop.f32.mrb[0].mxu0
      %1658 = vmatprep.mubr.f32.mxu0 0.0
      %1659 = vmatmul.mubr.f32.gmra.mrb[0].mxu0 %v1459
      %v1660 = vpop.f32.mrb[0].mxu0
      %v1661 = vadd.f32 0.0, %v1660
      %v1662 = vpop.f32.mrb[0].mxu0
      %1663 = vmatprep.mubr.f32.mxu0 0.0
      %1664 = vmatmul.mubr.f32.gmra.mrb[0].mxu0 %v1462
      %v1665 = vpop.f32.mrb[0].mxu0
      %v1666 = vadd.f32 0.0, %v1665
      %v1667 = vpop.f32.mrb[0].mxu0
      %1668 = vmatprep.mubr.f32.mxu0 0.0
      %1669 = vmatmul.mubr.f32.gmra.mrb[0].mxu0 %v1465
      %v1670 = vpop.f32.mrb[0].mxu0
      %v1671 = vadd.f32 0.0, %v1670
      %v1672 = vpop.f32.mrb[0].mxu0
      %1673 = vmatprep.mubr.f32.mxu0 0.0
      %1674 = vmatmul.mubr.f32.gmra.mrb[0].mxu0 %v1468
      %v1675 = vpop.f32.mrb[0].mxu0
      %v1676 = vadd.f32 0.0, %v1675
      %v1677 = vpop.f32.mrb[0].mxu0
      %1678 = vmatprep.mubr.f32.mxu0 0.0
      %1679 = vmatmul.mubr.f32.gmra.mrb[0].mxu0 %v1471
      %v1680 = vpop.f32.mrb[0].mxu0
      %v1681 = vadd.f32 0.0, %v1680
      %v1682 = vpop.f32.mrb[0].mxu0
      %1683 = vmatprep.mubr.f32.mxu0 0.0
      %1684 = vmatmul.mubr.f32.gmra.mrb[0].mxu0 %v1474
      %v1685 = vpop.f32.mrb[0].mxu0
      %v1686 = vadd.f32 0.0, %v1685
      %v1687 = vpop.f32.mrb[0].mxu0
      %1688 = vmatprep.mubr.f32.mxu0 0.0
      %1689 = vmatmul.mubr.f32.gmra.mrb[0].mxu0 %v1477
      %v1690 = vpop.f32.mrb[0].mxu0
      %v1691 = vadd.f32 0.0, %v1690
      %v1692 = vpop.f32.mrb[0].mxu0
      %1693 = vmatprep.mubr.f32.mxu0 0.0
      %1694 = vmatmul.mubr.f32.gmra.mrb[0].mxu0 %v1480
      %v1695 = vpop.f32.mrb[0].mxu0
      %v1696 = vadd.f32 0.0, %v1695
      %v1697 = vpop.f32.mrb[0].mxu0
      %1698 = vmatprep.mubr.f32.mxu0 0.0
      %1699 = vmatmul.mubr.f32.gmra.mrb[0].mxu0 %v1483
      %v1700 = vpop.f32.mrb[0].mxu0
      %v1701 = vadd.f32 0.0, %v1700
      %v1702 = vpop.f32.mrb[0].mxu0
      %1703 = vmatprep.mubr.f32.mxu0 0.0
      %1704 = vmatmul.mubr.f32.gmra.mrb[0].mxu0 %v1486
      %v1705 = vpop.f32.mrb[0].mxu0
      %v1706 = vadd.f32 0.0, %v1705
      %v1707 = vpop.f32.mrb[0].mxu0
      %1708 = vmatprep.mubr.f32.mxu0 0.0
      %1709 = vmatmul.mubr.f32.gmra.mrb[0].mxu0 %v1489
      %v1710 = vpop.f32.mrb[0].mxu0
      %v1711 = vpop.f32.mrb[0].mxu0
      %1712 = vmatprep.mubr.f32.mxu0 0.0
      %1713 = vmatmul.mubr.f32.gmra.mrb[0].mxu0 %v1492
      %v1714 = vpop.f32.mrb[0].mxu0
      %v1715 = vpop.f32.mrb[0].mxu0
      %1716 = vdwg.mxu0
      %v1717 = vld [vmem:[#allocation2 + $0x10] sm:$0xff]
      %v1718 = vld [vmem:[#allocation2 + $0x18] sm:$0xff]
      %v1719 = vld [vmem:[#allocation2 + $0x20] sm:$0xff]
      %v1720 = vld [vmem:[#allocation2 + $0x28] sm:$0xff]
      %v1721 = vld [vmem:[#allocation2 + $0x30] sm:$0xff]
      %v1722 = vld [vmem:[#allocation2 + $0x38] sm:$0xff]
      %v1723 = vld [vmem:[#allocation2 + $0x40] sm:$0xff]
      %v1724 = vld [vmem:[#allocation2 + $0x48] sm:$0xff]
      %v1725 = vld [vmem:[#allocation2 + $0x50] sm:$0xff]
      %v1726 = vld [vmem:[#allocation2 + $0x58] sm:$0xff]
      %v1727 = vld [vmem:[#allocation2 + $0x60] sm:$0xff]
      %v1728 = vld [vmem:[#allocation2 + $0x68] sm:$0xff]
      %v1729 = vld [vmem:[#allocation2 + $0x70] sm:$0xff]
      %v1730 = vld [vmem:[#allocation2 + $0x78] sm:$0xff]
      %v1731 = vld [vmem:[#allocation2 + $0x80] sm:$0xff]
      %v1732 = vld [vmem:[#allocation2 + $0x88] sm:$0xff]
      %v1733 = vld [vmem:[#allocation2 + $0x90] sm:$0xff]
      %v1734 = vld [vmem:[#allocation2 + $0x98] sm:$0xff]
      %v1735 = vld [vmem:[#allocation2 + $0xa0] sm:$0xff]
      %v1736 = vld [vmem:[#allocation2 + $0xa8] sm:$0xff]
      %v1737 = vld [vmem:[#allocation2 + $0xb0] sm:$0xff]
      %v1738 = vld [vmem:[#allocation2 + $0xb8] sm:$0xff]
      %v1739 = vld [vmem:[#allocation2 + $0xc0] sm:$0xff]
      %v1740 = vld [vmem:[#allocation2 + $0xc8] sm:$0xff]
      %v1741 = vld [vmem:[#allocation2 + $0xd0] sm:$0xff]
      %v1742 = vld [vmem:[#allocation2 + $0xd8] sm:$0xff]
      %v1743 = vld [vmem:[#allocation2 + $0xe0] sm:$0xff]
      %v1744 = vld [vmem:[#allocation2 + $0xe8] sm:$0xff]
      %v1745 = vld [vmem:[#allocation2 + $0xf0] sm:$0xff]
      %v1746 = vld [vmem:[#allocation2 + $0xf8] sm:$0xff]
      %v1747 = vadd.f32 %v1717, %v1561
      %v1748 = vadd.f32 %v1718, %v1566
      %v1749 = vadd.f32 %v1719, %v1571
      %v1750 = vadd.f32 %v1720, %v1576
      %v1751 = vadd.f32 %v1721, %v1581
      %v1752 = vadd.f32 %v1722, %v1586
      %v1753 = vadd.f32 %v1723, %v1591
      %v1754 = vadd.f32 %v1724, %v1596
      %v1755 = vadd.f32 %v1725, %v1601
      %v1756 = vadd.f32 %v1726, %v1606
      %v1757 = vadd.f32 %v1727, %v1611
      %v1758 = vadd.f32 %v1728, %v1616
      %v1759 = vadd.f32 %v1729, %v1621
      %v1760 = vadd.f32 %v1730, %v1626
      %v1761 = vadd.f32 %v1731, %v1631
      %v1762 = vadd.f32 %v1732, %v1636
      %v1763 = vadd.f32 %v1733, %v1641
      %v1764 = vadd.f32 %v1734, %v1646
      %v1765 = vadd.f32 %v1735, %v1651
      %v1766 = vadd.f32 %v1736, %v1656
      %v1767 = vadd.f32 %v1737, %v1661
      %v1768 = vadd.f32 %v1738, %v1666
      %v1769 = vadd.f32 %v1739, %v1671
      %v1770 = vadd.f32 %v1740, %v1676
      %v1771 = vadd.f32 %v1741, %v1681
      %v1772 = vadd.f32 %v1742, %v1686
      %v1773 = vadd.f32 %v1743, %v1691
      %v1774 = vadd.f32 %v1744, %v1696
      %v1775 = vadd.f32 %v1745, %v1701
      %v1776 = vadd.f32 %v1746, %v1706
      %1777 = vst.msk [vmem:[#allocation2 + $0x10] sm:$0xff] %vm839, %v1747
      %1778 = vst.msk [vmem:[#allocation2 + $0x18] sm:$0xff] %vm839, %v1748
      %1779 = vst.msk [vmem:[#allocation2 + $0x20] sm:$0xff] %vm839, %v1749
      %1780 = vst.msk [vmem:[#allocation2 + $0x28] sm:$0xff] %vm839, %v1750
      %1781 = vst.msk [vmem:[#allocation2 + $0x30] sm:$0xff] %vm839, %v1751
      %1782 = vst.msk [vmem:[#allocation2 + $0x38] sm:$0xff] %vm839, %v1752
      %1783 = vst.msk [vmem:[#allocation2 + $0x40] sm:$0xff] %vm839, %v1753
      %1784 = vst.msk [vmem:[#allocation2 + $0x48] sm:$0xff] %vm839, %v1754
      %1785 = vst.msk [vmem:[#allocation2 + $0x50] sm:$0xff] %vm839, %v1755
      %1786 = vst.msk [vmem:[#allocation2 + $0x58] sm:$0xff] %vm839, %v1756
      %1787 = vst.msk [vmem:[#allocation2 + $0x60] sm:$0xff] %vm839, %v1757
      %1788 = vst.msk [vmem:[#allocation2 + $0x68] sm:$0xff] %vm839, %v1758
      %1789 = vst.msk [vmem:[#allocation2 + $0x70] sm:$0xff] %vm839, %v1759
      %1790 = vst.msk [vmem:[#allocation2 + $0x78] sm:$0xff] %vm839, %v1760
      %1791 = vst.msk [vmem:[#allocation2 + $0x80] sm:$0xff] %vm839, %v1761
      %1792 = vst.msk [vmem:[#allocation2 + $0x88] sm:$0xff] %vm839, %v1762
      %1793 = vst.msk [vmem:[#allocation2 + $0x90] sm:$0xff] %vm839, %v1763
      %1794 = vst.msk [vmem:[#allocation2 + $0x98] sm:$0xff] %vm839, %v1764
      %1795 = vst.msk [vmem:[#allocation2 + $0xa0] sm:$0xff] %vm839, %v1765
      %1796 = vst.msk [vmem:[#allocation2 + $0xa8] sm:$0xff] %vm839, %v1766
      %1797 = vst.msk [vmem:[#allocation2 + $0xb0] sm:$0xff] %vm839, %v1767
      %1798 = vst.msk [vmem:[#allocation2 + $0xb8] sm:$0xff] %vm839, %v1768
      %1799 = vst.msk [vmem:[#allocation2 + $0xc0] sm:$0xff] %vm839, %v1769
      %1800 = vst.msk [vmem:[#allocation2 + $0xc8] sm:$0xff] %vm839, %v1770
      %1801 = vst.msk [vmem:[#allocation2 + $0xd0] sm:$0xff] %vm839, %v1771
      %1802 = vst.msk [vmem:[#allocation2 + $0xd8] sm:$0xff] %vm839, %v1772
      %1803 = vst.msk [vmem:[#allocation2 + $0xe0] sm:$0xff] %vm839, %v1773
      %1804 = vst.msk [vmem:[#allocation2 + $0xe8] sm:$0xff] %vm839, %v1774
      %1805 = vst.msk [vmem:[#allocation2 + $0xf0] sm:$0xff] %vm839, %v1775
      %1806 = vst.msk [vmem:[#allocation2 + $0xf8] sm:$0xff] %vm839, %v1776
      %s1807 = scalar_lea.vmem %s4, 24
      %v1808 = vld [vmem:[%s1807] sm:$0xff]
      %v1809 = vld [vmem:[%s1807 + $0x8] sm:$0xff]
      %v1810 = vld [vmem:[%s1807 + $0x10] sm:$0xff]
      %1811 = vmatprep.subr.mxu0 0.0
      %1812 = vmatpush1.msra.mxu0 %v1808
      %1813 = vmatprep.subr.mxu0 0.0
      %1814 = vmatpush1.msra.mxu0 %v1809
      %1815 = vmatprep.subr.mxu0 0.0
      %1816 = vmatpush1.msra.mxu0 %v1810
      %1817 = vmatprep.subr.mxu0 0.0
      %1818 = vmatpush1.msra.mxu0 0.0
      %1819 = vmatprep.subr.mxu0 0.0
      %1820 = vmatpush1.msra.mxu0 0.0
      %1821 = vmatprep.subr.mxu0 0.0
      %1822 = vmatpush1.msra.mxu0 0.0
      %1823 = vmatprep.subr.mxu0 0.0
      %1824 = vmatpush1.msra.mxu0 0.0
      %1825 = vmatprep.subr.mxu0 0.0
      %1826 = vmatpush1.msra.mxu0 0.0
      %1827 = vmatprep.subr.mxu0 0.0
      %1828 = vmatpush1.msra.mxu0 0.0
      %1829 = vmatprep.subr.mxu0 0.0
      %1830 = vmatpush1.msra.mxu0 0.0
      %1831 = vmatprep.subr.mxu0 0.0
      %1832 = vmatpush1.msra.mxu0 0.0
      %1833 = vmatprep.subr.mxu0 0.0
      %1834 = vmatpush1.msra.mxu0 0.0
      %1835 = vmatprep.subr.mxu0 0.0
      %1836 = vmatpush1.msra.mxu0 0.0
      %1837 = vmatprep.subr.mxu0 0.0
      %1838 = vmatpush1.msra.mxu0 0.0
      %1839 = vmatprep.subr.mxu0 0.0
      %1840 = vmatpush1.msra.mxu0 0.0
      %1841 = vmatprep.subr.mxu0 0.0
      %1842 = vmatpush1.msra.mxu0 0.0
      %1843 = vmatprep.subr.mxu0 0.0
      %1844 = vmatpush1.msra.mxu0 0.0
      %1845 = vmatprep.subr.mxu0 0.0
      %1846 = vmatpush1.msra.mxu0 0.0
      %1847 = vmatprep.subr.mxu0 0.0
      %1848 = vmatpush1.msra.mxu0 0.0
      %1849 = vmatprep.subr.mxu0 0.0
      %1850 = vmatpush1.msra.mxu0 0.0
      %1851 = vmatprep.subr.mxu0 0.0
      %1852 = vmatpush1.msra.mxu0 0.0
      %1853 = vmatprep.subr.mxu0 0.0
      %1854 = vmatpush1.msra.mxu0 0.0
      %1855 = vmatprep.subr.mxu0 0.0
      %1856 = vmatpush1.msra.mxu0 0.0
      %1857 = vmatprep.subr.mxu0 0.0
      %1858 = vmatpush1.msra.mxu0 0.0
      %1859 = vmatprep.subr.mxu0 0.0
      %1860 = vmatpush1.msra.mxu0 0.0
      %1861 = vmatprep.subr.mxu0 0.0
      %1862 = vmatpush1.msra.mxu0 0.0
      %1863 = vmatprep.subr.mxu0 0.0
      %1864 = vmatpush1.msra.mxu0 0.0
      %1865 = vmatprep.subr.mxu0 0.0
      %1866 = vmatpush1.msra.mxu0 0.0
      %1867 = vmatprep.subr.mxu0 0.0
      %1868 = vmatpush1.msra.mxu0 0.0
      %1869 = vmatprep.subr.mxu0 0.0
      %1870 = vmatpush1.msra.mxu0 0.0
      %1871 = vmatprep.subr.mxu0 0.0
      %1872 = vmatpush1.msra.mxu0 0.0
      %1873 = vmatprep.subr.mxu0 0.0
      %1874 = vmatpush1.msra.mxu0 0.0
      %1875 = vmatprep.mubr.f32.mxu0 0.0
      %1876 = vmatmul.mubr.f32.gmra.mrb[0].mxu0 %v1399
      %v1877 = vpop.f32.mrb[0].mxu0
      %v1878 = vadd.f32 0.0, %v1877
      %v1879 = vpop.f32.mrb[0].mxu0
      %1880 = vmatprep.mubr.f32.mxu0 0.0
      %1881 = vmatmul.mubr.f32.gmra.mrb[0].mxu0 %v1402
      %v1882 = vpop.f32.mrb[0].mxu0
      %v1883 = vadd.f32 0.0, %v1882
      %v1884 = vpop.f32.mrb[0].mxu0
      %1885 = vmatprep.mubr.f32.mxu0 0.0
      %1886 = vmatmul.mubr.f32.gmra.mrb[0].mxu0 %v1405
      %v1887 = vpop.f32.mrb[0].mxu0
      %v1888 = vadd.f32 0.0, %v1887
      %v1889 = vpop.f32.mrb[0].mxu0
      %1890 = vmatprep.mubr.f32.mxu0 0.0
      %1891 = vmatmul.mubr.f32.gmra.mrb[0].mxu0 %v1408
      %v1892 = vpop.f32.mrb[0].mxu0
      %v1893 = vadd.f32 0.0, %v1892
      %v1894 = vpop.f32.mrb[0].mxu0
      %1895 = vmatprep.mubr.f32.mxu0 0.0
      %1896 = vmatmul.mubr.f32.gmra.mrb[0].mxu0 %v1411
      %v1897 = vpop.f32.mrb[0].mxu0
      %v1898 = vadd.f32 0.0, %v1897
      %v1899 = vpop.f32.mrb[0].mxu0
      %1900 = vmatprep.mubr.f32.mxu0 0.0
      %1901 = vmatmul.mubr.f32.gmra.mrb[0].mxu0 %v1414
      %v1902 = vpop.f32.mrb[0].mxu0
      %v1903 = vadd.f32 0.0, %v1902
      %v1904 = vpop.f32.mrb[0].mxu0
      %1905 = vmatprep.mubr.f32.mxu0 0.0
      %1906 = vmatmul.mubr.f32.gmra.mrb[0].mxu0 %v1417
      %v1907 = vpop.f32.mrb[0].mxu0
      %v1908 = vadd.f32 0.0, %v1907
      %v1909 = vpop.f32.mrb[0].mxu0
      %1910 = vmatprep.mubr.f32.mxu0 0.0
      %1911 = vmatmul.mubr.f32.gmra.mrb[0].mxu0 %v1420
      %v1912 = vpop.f32.mrb[0].mxu0
      %v1913 = vadd.f32 0.0, %v1912
      %v1914 = vpop.f32.mrb[0].mxu0
      %1915 = vmatprep.mubr.f32.mxu0 0.0
      %1916 = vmatmul.mubr.f32.gmra.mrb[0].mxu0 %v1423
      %v1917 = vpop.f32.mrb[0].mxu0
      %v1918 = vadd.f32 0.0, %v1917
      %v1919 = vpop.f32.mrb[0].mxu0
      %1920 = vmatprep.mubr.f32.mxu0 0.0
      %1921 = vmatmul.mubr.f32.gmra.mrb[0].mxu0 %v1426
      %v1922 = vpop.f32.mrb[0].mxu0
      %v1923 = vadd.f32 0.0, %v1922
      %v1924 = vpop.f32.mrb[0].mxu0
      %1925 = vmatprep.mubr.f32.mxu0 0.0
      %1926 = vmatmul.mubr.f32.gmra.mrb[0].mxu0 %v1429
      %v1927 = vpop.f32.mrb[0].mxu0
      %v1928 = vadd.f32 0.0, %v1927
      %v1929 = vpop.f32.mrb[0].mxu0
      %1930 = vmatprep.mubr.f32.mxu0 0.0
      %1931 = vmatmul.mubr.f32.gmra.mrb[0].mxu0 %v1432
      %v1932 = vpop.f32.mrb[0].mxu0
      %v1933 = vadd.f32 0.0, %v1932
      %v1934 = vpop.f32.mrb[0].mxu0
      %1935 = vmatprep.mubr.f32.mxu0 0.0
      %1936 = vmatmul.mubr.f32.gmra.mrb[0].mxu0 %v1435
      %v1937 = vpop.f32.mrb[0].mxu0
      %v1938 = vadd.f32 0.0, %v1937
      %v1939 = vpop.f32.mrb[0].mxu0
      %1940 = vmatprep.mubr.f32.mxu0 0.0
      %1941 = vmatmul.mubr.f32.gmra.mrb[0].mxu0 %v1438
      %v1942 = vpop.f32.mrb[0].mxu0
      %v1943 = vadd.f32 0.0, %v1942
      %v1944 = vpop.f32.mrb[0].mxu0
      %1945 = vmatprep.mubr.f32.mxu0 0.0
      %1946 = vmatmul.mubr.f32.gmra.mrb[0].mxu0 %v1441
      %v1947 = vpop.f32.mrb[0].mxu0
      %v1948 = vadd.f32 0.0, %v1947
      %v1949 = vpop.f32.mrb[0].mxu0
      %1950 = vmatprep.mubr.f32.mxu0 0.0
      %1951 = vmatmul.mubr.f32.gmra.mrb[0].mxu0 %v1444
      %v1952 = vpop.f32.mrb[0].mxu0
      %v1953 = vadd.f32 0.0, %v1952
      %v1954 = vpop.f32.mrb[0].mxu0
      %1955 = vmatprep.mubr.f32.mxu0 0.0
      %1956 = vmatmul.mubr.f32.gmra.mrb[0].mxu0 %v1447
      %v1957 = vpop.f32.mrb[0].mxu0
      %v1958 = vadd.f32 0.0, %v1957
      %v1959 = vpop.f32.mrb[0].mxu0
      %1960 = vmatprep.mubr.f32.mxu0 0.0
      %1961 = vmatmul.mubr.f32.gmra.mrb[0].mxu0 %v1450
      %v1962 = vpop.f32.mrb[0].mxu0
      %v1963 = vadd.f32 0.0, %v1962
      %v1964 = vpop.f32.mrb[0].mxu0
      %1965 = vmatprep.mubr.f32.mxu0 0.0
      %1966 = vmatmul.mubr.f32.gmra.mrb[0].mxu0 %v1453
      %v1967 = vpop.f32.mrb[0].mxu0
      %v1968 = vadd.f32 0.0, %v1967
      %v1969 = vpop.f32.mrb[0].mxu0
      %1970 = vmatprep.mubr.f32.mxu0 0.0
      %1971 = vmatmul.mubr.f32.gmra.mrb[0].mxu0 %v1456
      %v1972 = vpop.f32.mrb[0].mxu0
      %v1973 = vadd.f32 0.0, %v1972
      %v1974 = vpop.f32.mrb[0].mxu0
      %1975 = vmatprep.mubr.f32.mxu0 0.0
      %1976 = vmatmul.mubr.f32.gmra.mrb[0].mxu0 %v1459
      %v1977 = vpop.f32.mrb[0].mxu0
      %v1978 = vadd.f32 0.0, %v1977
      %v1979 = vpop.f32.mrb[0].mxu0
      %1980 = vmatprep.mubr.f32.mxu0 0.0
      %1981 = vmatmul.mubr.f32.gmra.mrb[0].mxu0 %v1462
      %v1982 = vpop.f32.mrb[0].mxu0
      %v1983 = vadd.f32 0.0, %v1982
      %v1984 = vpop.f32.mrb[0].mxu0
      %1985 = vmatprep.mubr.f32.mxu0 0.0
      %1986 = vmatmul.mubr.f32.gmra.mrb[0].mxu0 %v1465
      %v1987 = vpop.f32.mrb[0].mxu0
      %v1988 = vadd.f32 0.0, %v1987
      %v1989 = vpop.f32.mrb[0].mxu0
      %1990 = vmatprep.mubr.f32.mxu0 0.0
      %1991 = vmatmul.mubr.f32.gmra.mrb[0].mxu0 %v1468
      %v1992 = vpop.f32.mrb[0].mxu0
      %v1993 = vadd.f32 0.0, %v1992
      %v1994 = vpop.f32.mrb[0].mxu0
      %1995 = vmatprep.mubr.f32.mxu0 0.0
      %1996 = vmatmul.mubr.f32.gmra.mrb[0].mxu0 %v1471
      %v1997 = vpop.f32.mrb[0].mxu0
      %v1998 = vadd.f32 0.0, %v1997
      %v1999 = vpop.f32.mrb[0].mxu0
      %2000 = vmatprep.mubr.f32.mxu0 0.0
      %2001 = vmatmul.mubr.f32.gmra.mrb[0].mxu0 %v1474
      %v2002 = vpop.f32.mrb[0].mxu0
      %v2003 = vadd.f32 0.0, %v2002
      %v2004 = vpop.f32.mrb[0].mxu0
      %2005 = vmatprep.mubr.f32.mxu0 0.0
      %2006 = vmatmul.mubr.f32.gmra.mrb[0].mxu0 %v1477
      %v2007 = vpop.f32.mrb[0].mxu0
      %v2008 = vadd.f32 0.0, %v2007
      %v2009 = vpop.f32.mrb[0].mxu0
      %2010 = vmatprep.mubr.f32.mxu0 0.0
      %2011 = vmatmul.mubr.f32.gmra.mrb[0].mxu0 %v1480
      %v2012 = vpop.f32.mrb[0].mxu0
      %v2013 = vadd.f32 0.0, %v2012
      %v2014 = vpop.f32.mrb[0].mxu0
      %2015 = vmatprep.mubr.f32.mxu0 0.0
      %2016 = vmatmul.mubr.f32.gmra.mrb[0].mxu0 %v1483
      %v2017 = vpop.f32.mrb[0].mxu0
      %v2018 = vadd.f32 0.0, %v2017
      %v2019 = vpop.f32.mrb[0].mxu0
      %2020 = vmatprep.mubr.f32.mxu0 0.0
      %2021 = vmatmul.mubr.f32.gmra.mrb[0].mxu0 %v1486
      %v2022 = vpop.f32.mrb[0].mxu0
      %v2023 = vadd.f32 0.0, %v2022
      %v2024 = vpop.f32.mrb[0].mxu0
      %2025 = vmatprep.mubr.f32.mxu0 0.0
      %2026 = vmatmul.mubr.f32.gmra.mrb[0].mxu0 %v1489
      %v2027 = vpop.f32.mrb[0].mxu0
      %v2028 = vadd.f32 0.0, %v2027
      %v2029 = vpop.f32.mrb[0].mxu0
      %2030 = vmatprep.mubr.f32.mxu0 0.0
      %2031 = vmatmul.mubr.f32.gmra.mrb[0].mxu0 %v1492
      %v2032 = vpop.f32.mrb[0].mxu0
      %v2033 = vadd.f32 0.0, %v2032
      %v2034 = vpop.f32.mrb[0].mxu0
      %2035 = vdwg.mxu0
      %v2036 = vld [vmem:[#allocation2] sm:$0xff]
      %v2037 = vld [vmem:[#allocation2 + $0x8] sm:$0xff]
      %v2038 = vld [vmem:[#allocation2 + $0x10] sm:$0xff]
      %v2039 = vld [vmem:[#allocation2 + $0x18] sm:$0xff]
      %v2040 = vld [vmem:[#allocation2 + $0x20] sm:$0xff]
      %v2041 = vld [vmem:[#allocation2 + $0x28] sm:$0xff]
      %v2042 = vld [vmem:[#allocation2 + $0x30] sm:$0xff]
      %v2043 = vld [vmem:[#allocation2 + $0x38] sm:$0xff]
      %v2044 = vld [vmem:[#allocation2 + $0x40] sm:$0xff]
      %v2045 = vld [vmem:[#allocation2 + $0x48] sm:$0xff]
      %v2046 = vld [vmem:[#allocation2 + $0x50] sm:$0xff]
      %v2047 = vld [vmem:[#allocation2 + $0x58] sm:$0xff]
      %v2048 = vld [vmem:[#allocation2 + $0x60] sm:$0xff]
      %v2049 = vld [vmem:[#allocation2 + $0x68] sm:$0xff]
      %v2050 = vld [vmem:[#allocation2 + $0x70] sm:$0xff]
      %v2051 = vld [vmem:[#allocation2 + $0x78] sm:$0xff]
      %v2052 = vld [vmem:[#allocation2 + $0x80] sm:$0xff]
      %v2053 = vld [vmem:[#allocation2 + $0x88] sm:$0xff]
      %v2054 = vld [vmem:[#allocation2 + $0x90] sm:$0xff]
      %v2055 = vld [vmem:[#allocation2 + $0x98] sm:$0xff]
      %v2056 = vld [vmem:[#allocation2 + $0xa0] sm:$0xff]
      %v2057 = vld [vmem:[#allocation2 + $0xa8] sm:$0xff]
      %v2058 = vld [vmem:[#allocation2 + $0xb0] sm:$0xff]
      %v2059 = vld [vmem:[#allocation2 + $0xb8] sm:$0xff]
      %v2060 = vld [vmem:[#allocation2 + $0xc0] sm:$0xff]
      %v2061 = vld [vmem:[#allocation2 + $0xc8] sm:$0xff]
      %v2062 = vld [vmem:[#allocation2 + $0xd0] sm:$0xff]
      %v2063 = vld [vmem:[#allocation2 + $0xd8] sm:$0xff]
      %v2064 = vld [vmem:[#allocation2 + $0xe0] sm:$0xff]
      %v2065 = vld [vmem:[#allocation2 + $0xe8] sm:$0xff]
      %v2066 = vld [vmem:[#allocation2 + $0xf0] sm:$0xff]
      %v2067 = vld [vmem:[#allocation2 + $0xf8] sm:$0xff]
      %v2068 = vadd.f32 %v2036, %v1878
      %v2069 = vadd.f32 %v2037, %v1883
      %v2070 = vadd.f32 %v2038, %v1888
      %v2071 = vadd.f32 %v2039, %v1893
      %v2072 = vadd.f32 %v2040, %v1898
      %v2073 = vadd.f32 %v2041, %v1903
      %v2074 = vadd.f32 %v2042, %v1908
      %v2075 = vadd.f32 %v2043, %v1913
      %v2076 = vadd.f32 %v2044, %v1918
      %v2077 = vadd.f32 %v2045, %v1923
      %v2078 = vadd.f32 %v2046, %v1928
      %v2079 = vadd.f32 %v2047, %v1933
      %v2080 = vadd.f32 %v2048, %v1938
      %v2081 = vadd.f32 %v2049, %v1943
      %v2082 = vadd.f32 %v2050, %v1948
      %v2083 = vadd.f32 %v2051, %v1953
      %v2084 = vadd.f32 %v2052, %v1958
      %v2085 = vadd.f32 %v2053, %v1963
      %v2086 = vadd.f32 %v2054, %v1968
      %v2087 = vadd.f32 %v2055, %v1973
      %v2088 = vadd.f32 %v2056, %v1978
      %v2089 = vadd.f32 %v2057, %v1983
      %v2090 = vadd.f32 %v2058, %v1988
      %v2091 = vadd.f32 %v2059, %v1993
      %v2092 = vadd.f32 %v2060, %v1998
      %v2093 = vadd.f32 %v2061, %v2003
      %v2094 = vadd.f32 %v2062, %v2008
      %v2095 = vadd.f32 %v2063, %v2013
      %v2096 = vadd.f32 %v2064, %v2018
      %v2097 = vadd.f32 %v2065, %v2023
      %v2098 = vadd.f32 %v2066, %v2028
      %v2099 = vadd.f32 %v2067, %v2033
      %2100 = vst.msk [vmem:[#allocation2] sm:$0xff] %vm839, %v2068
      %2101 = vst.msk [vmem:[#allocation2 + $0x8] sm:$0xff] %vm839, %v2069
      %2102 = vst.msk [vmem:[#allocation2 + $0x10] sm:$0xff] %vm839, %v2070
      %2103 = vst.msk [vmem:[#allocation2 + $0x18] sm:$0xff] %vm839, %v2071
      %2104 = vst.msk [vmem:[#allocation2 + $0x20] sm:$0xff] %vm839, %v2072
      %2105 = vst.msk [vmem:[#allocation2 + $0x28] sm:$0xff] %vm839, %v2073
      %2106 = vst.msk [vmem:[#allocation2 + $0x30] sm:$0xff] %vm839, %v2074
      %2107 = vst.msk [vmem:[#allocation2 + $0x38] sm:$0xff] %vm839, %v2075
      %2108 = vst.msk [vmem:[#allocation2 + $0x40] sm:$0xff] %vm839, %v2076
      %2109 = vst.msk [vmem:[#allocation2 + $0x48] sm:$0xff] %vm839, %v2077
      %2110 = vst.msk [vmem:[#allocation2 + $0x50] sm:$0xff] %vm839, %v2078
      %2111 = vst.msk [vmem:[#allocation2 + $0x58] sm:$0xff] %vm839, %v2079
      %2112 = vst.msk [vmem:[#allocation2 + $0x60] sm:$0xff] %vm839, %v2080
      %2113 = vst.msk [vmem:[#allocation2 + $0x68] sm:$0xff] %vm839, %v2081
      %2114 = vst.msk [vmem:[#allocation2 + $0x70] sm:$0xff] %vm839, %v2082
      %2115 = vst.msk [vmem:[#allocation2 + $0x78] sm:$0xff] %vm839, %v2083
      %2116 = vst.msk [vmem:[#allocation2 + $0x80] sm:$0xff] %vm839, %v2084
      %2117 = vst.msk [vmem:[#allocation2 + $0x88] sm:$0xff] %vm839, %v2085
      %2118 = vst.msk [vmem:[#allocation2 + $0x90] sm:$0xff] %vm839, %v2086
      %2119 = vst.msk [vmem:[#allocation2 + $0x98] sm:$0xff] %vm839, %v2087
      %2120 = vst.msk [vmem:[#allocation2 + $0xa0] sm:$0xff] %vm839, %v2088
      %2121 = vst.msk [vmem:[#allocation2 + $0xa8] sm:$0xff] %vm839, %v2089
      %2122 = vst.msk [vmem:[#allocation2 + $0xb0] sm:$0xff] %vm839, %v2090
      %2123 = vst.msk [vmem:[#allocation2 + $0xb8] sm:$0xff] %vm839, %v2091
      %2124 = vst.msk [vmem:[#allocation2 + $0xc0] sm:$0xff] %vm839, %v2092
      %2125 = vst.msk [vmem:[#allocation2 + $0xc8] sm:$0xff] %vm839, %v2093
      %2126 = vst.msk [vmem:[#allocation2 + $0xd0] sm:$0xff] %vm839, %v2094
      %2127 = vst.msk [vmem:[#allocation2 + $0xd8] sm:$0xff] %vm839, %v2095
      %2128 = vst.msk [vmem:[#allocation2 + $0xe0] sm:$0xff] %vm839, %v2096
      %2129 = vst.msk [vmem:[#allocation2 + $0xe8] sm:$0xff] %vm839, %v2097
      %2130 = vst.msk [vmem:[#allocation2 + $0xf0] sm:$0xff] %vm839, %v2098
      %2131 = vst.msk [vmem:[#allocation2 + $0xf8] sm:$0xff] %vm839, %v2099
      %s2132 = scalar_lea.vmem %s4, 48
      %v2133 = vld [vmem:[%s2132] sm:$0xff]
      %v2134 = vld [vmem:[%s2132 + $0x8] sm:$0xff]
      %v2135 = vld [vmem:[%s2132 + $0x10] sm:$0xff]
      %2136 = vmatprep.subr.mxu0 0.0
      %2137 = vmatpush1.msra.mxu0 %v2133
      %2138 = vmatprep.subr.mxu0 0.0
      %2139 = vmatpush1.msra.mxu0 %v2134
      %2140 = vmatprep.subr.mxu0 0.0
      %2141 = vmatpush1.msra.mxu0 %v2135
      %2142 = vmatprep.subr.mxu0 0.0
      %2143 = vmatpush1.msra.mxu0 0.0
      %2144 = vmatprep.subr.mxu0 0.0
      %2145 = vmatpush1.msra.mxu0 0.0
      %2146 = vmatprep.subr.mxu0 0.0
      %2147 = vmatpush1.msra.mxu0 0.0
      %2148 = vmatprep.subr.mxu0 0.0
      %2149 = vmatpush1.msra.mxu0 0.0
      %2150 = vmatprep.subr.mxu0 0.0
      %2151 = vmatpush1.msra.mxu0 0.0
      %2152 = vmatprep.subr.mxu0 0.0
      %2153 = vmatpush1.msra.mxu0 0.0
      %2154 = vmatprep.subr.mxu0 0.0
      %2155 = vmatpush1.msra.mxu0 0.0
      %2156 = vmatprep.subr.mxu0 0.0
      %2157 = vmatpush1.msra.mxu0 0.0
      %2158 = vmatprep.subr.mxu0 0.0
      %2159 = vmatpush1.msra.mxu0 0.0
      %2160 = vmatprep.subr.mxu0 0.0
      %2161 = vmatpush1.msra.mxu0 0.0
      %2162 = vmatprep.subr.mxu0 0.0
      %2163 = vmatpush1.msra.mxu0 0.0
      %2164 = vmatprep.subr.mxu0 0.0
      %2165 = vmatpush1.msra.mxu0 0.0
      %2166 = vmatprep.subr.mxu0 0.0
      %2167 = vmatpush1.msra.mxu0 0.0
      %2168 = vmatprep.subr.mxu0 0.0
      %2169 = vmatpush1.msra.mxu0 0.0
      %2170 = vmatprep.subr.mxu0 0.0
      %2171 = vmatpush1.msra.mxu0 0.0
      %2172 = vmatprep.subr.mxu0 0.0
      %2173 = vmatpush1.msra.mxu0 0.0
      %2174 = vmatprep.subr.mxu0 0.0
      %2175 = vmatpush1.msra.mxu0 0.0
      %2176 = vmatprep.subr.mxu0 0.0
      %2177 = vmatpush1.msra.mxu0 0.0
      %2178 = vmatprep.subr.mxu0 0.0
      %2179 = vmatpush1.msra.mxu0 0.0
      %2180 = vmatprep.subr.mxu0 0.0
      %2181 = vmatpush1.msra.mxu0 0.0
      %2182 = vmatprep.subr.mxu0 0.0
      %2183 = vmatpush1.msra.mxu0 0.0
      %2184 = vmatprep.subr.mxu0 0.0
      %2185 = vmatpush1.msra.mxu0 0.0
      %2186 = vmatprep.subr.mxu0 0.0
      %2187 = vmatpush1.msra.mxu0 0.0
      %2188 = vmatprep.subr.mxu0 0.0
      %2189 = vmatpush1.msra.mxu0 0.0
      %2190 = vmatprep.subr.mxu0 0.0
      %2191 = vmatpush1.msra.mxu0 0.0
      %2192 = vmatprep.subr.mxu0 0.0
      %2193 = vmatpush1.msra.mxu0 0.0
      %2194 = vmatprep.subr.mxu0 0.0
      %2195 = vmatpush1.msra.mxu0 0.0
      %2196 = vmatprep.subr.mxu0 0.0
      %2197 = vmatpush1.msra.mxu0 0.0
      %2198 = vmatprep.subr.mxu0 0.0
      %2199 = vmatpush1.msra.mxu0 0.0
      %2200 = vmatprep.mubr.f32.mxu0 0.0
      %2201 = vmatmul.mubr.f32.gmra.mrb[0].mxu0 %v1399
      %v2202 = vpop.f32.mrb[0].mxu0
      %v2203 = vpop.f32.mrb[0].mxu0
      %2204 = vmatprep.mubr.f32.mxu0 0.0
      %2205 = vmatmul.mubr.f32.gmra.mrb[0].mxu0 %v1402
      %v2206 = vpop.f32.mrb[0].mxu0
      %v2207 = vpop.f32.mrb[0].mxu0
      %2208 = vmatprep.mubr.f32.mxu0 0.0
      %2209 = vmatmul.mubr.f32.gmra.mrb[0].mxu0 %v1405
      %v2210 = vpop.f32.mrb[0].mxu0
      %v2211 = vadd.f32 0.0, %v2210
      %v2212 = vpop.f32.mrb[0].mxu0
      %2213 = vmatprep.mubr.f32.mxu0 0.0
      %2214 = vmatmul.mubr.f32.gmra.mrb[0].mxu0 %v1408
      %v2215 = vpop.f32.mrb[0].mxu0
      %v2216 = vadd.f32 0.0, %v2215
      %v2217 = vpop.f32.mrb[0].mxu0
      %2218 = vmatprep.mubr.f32.mxu0 0.0
      %2219 = vmatmul.mubr.f32.gmra.mrb[0].mxu0 %v1411
      %v2220 = vpop.f32.mrb[0].mxu0
      %v2221 = vadd.f32 0.0, %v2220
      %v2222 = vpop.f32.mrb[0].mxu0
      %2223 = vmatprep.mubr.f32.mxu0 0.0
      %2224 = vmatmul.mubr.f32.gmra.mrb[0].mxu0 %v1414
      %v2225 = vpop.f32.mrb[0].mxu0
      %v2226 = vadd.f32 0.0, %v2225
      %v2227 = vpop.f32.mrb[0].mxu0
      %2228 = vmatprep.mubr.f32.mxu0 0.0
      %2229 = vmatmul.mubr.f32.gmra.mrb[0].mxu0 %v1417
      %v2230 = vpop.f32.mrb[0].mxu0
      %v2231 = vadd.f32 0.0, %v2230
      %v2232 = vpop.f32.mrb[0].mxu0
      %2233 = vmatprep.mubr.f32.mxu0 0.0
      %2234 = vmatmul.mubr.f32.gmra.mrb[0].mxu0 %v1420
      %v2235 = vpop.f32.mrb[0].mxu0
      %v2236 = vadd.f32 0.0, %v2235
      %v2237 = vpop.f32.mrb[0].mxu0
      %2238 = vmatprep.mubr.f32.mxu0 0.0
      %2239 = vmatmul.mubr.f32.gmra.mrb[0].mxu0 %v1423
      %v2240 = vpop.f32.mrb[0].mxu0
      %v2241 = vadd.f32 0.0, %v2240
      %v2242 = vpop.f32.mrb[0].mxu0
      %2243 = vmatprep.mubr.f32.mxu0 0.0
      %2244 = vmatmul.mubr.f32.gmra.mrb[0].mxu0 %v1426
      %v2245 = vpop.f32.mrb[0].mxu0
      %v2246 = vadd.f32 0.0, %v2245
      %v2247 = vpop.f32.mrb[0].mxu0
      %2248 = vmatprep.mubr.f32.mxu0 0.0
      %2249 = vmatmul.mubr.f32.gmra.mrb[0].mxu0 %v1429
      %v2250 = vpop.f32.mrb[0].mxu0
      %v2251 = vadd.f32 0.0, %v2250
      %v2252 = vpop.f32.mrb[0].mxu0
      %2253 = vmatprep.mubr.f32.mxu0 0.0
      %2254 = vmatmul.mubr.f32.gmra.mrb[0].mxu0 %v1432
      %v2255 = vpop.f32.mrb[0].mxu0
      %v2256 = vadd.f32 0.0, %v2255
      %v2257 = vpop.f32.mrb[0].mxu0
      %2258 = vmatprep.mubr.f32.mxu0 0.0
      %2259 = vmatmul.mubr.f32.gmra.mrb[0].mxu0 %v1435
      %v2260 = vpop.f32.mrb[0].mxu0
      %v2261 = vadd.f32 0.0, %v2260
      %v2262 = vpop.f32.mrb[0].mxu0
      %2263 = vmatprep.mubr.f32.mxu0 0.0
      %2264 = vmatmul.mubr.f32.gmra.mrb[0].mxu0 %v1438
      %v2265 = vpop.f32.mrb[0].mxu0
      %v2266 = vadd.f32 0.0, %v2265
      %v2267 = vpop.f32.mrb[0].mxu0
      %2268 = vmatprep.mubr.f32.mxu0 0.0
      %2269 = vmatmul.mubr.f32.gmra.mrb[0].mxu0 %v1441
      %v2270 = vpop.f32.mrb[0].mxu0
      %v2271 = vadd.f32 0.0, %v2270
      %v2272 = vpop.f32.mrb[0].mxu0
      %2273 = vmatprep.mubr.f32.mxu0 0.0
      %2274 = vmatmul.mubr.f32.gmra.mrb[0].mxu0 %v1444
      %v2275 = vpop.f32.mrb[0].mxu0
      %v2276 = vadd.f32 0.0, %v2275
      %v2277 = vpop.f32.mrb[0].mxu0
      %2278 = vmatprep.mubr.f32.mxu0 0.0
      %2279 = vmatmul.mubr.f32.gmra.mrb[0].mxu0 %v1447
      %v2280 = vpop.f32.mrb[0].mxu0
      %v2281 = vadd.f32 0.0, %v2280
      %v2282 = vpop.f32.mrb[0].mxu0
      %2283 = vmatprep.mubr.f32.mxu0 0.0
      %2284 = vmatmul.mubr.f32.gmra.mrb[0].mxu0 %v1450
      %v2285 = vpop.f32.mrb[0].mxu0
      %v2286 = vadd.f32 0.0, %v2285
      %v2287 = vpop.f32.mrb[0].mxu0
      %2288 = vmatprep.mubr.f32.mxu0 0.0
      %2289 = vmatmul.mubr.f32.gmra.mrb[0].mxu0 %v1453
      %v2290 = vpop.f32.mrb[0].mxu0
      %v2291 = vadd.f32 0.0, %v2290
      %v2292 = vpop.f32.mrb[0].mxu0
      %2293 = vmatprep.mubr.f32.mxu0 0.0
      %2294 = vmatmul.mubr.f32.gmra.mrb[0].mxu0 %v1456
      %v2295 = vpop.f32.mrb[0].mxu0
      %v2296 = vadd.f32 0.0, %v2295
      %v2297 = vpop.f32.mrb[0].mxu0
      %2298 = vmatprep.mubr.f32.mxu0 0.0
      %2299 = vmatmul.mubr.f32.gmra.mrb[0].mxu0 %v1459
      %v2300 = vpop.f32.mrb[0].mxu0
      %v2301 = vadd.f32 0.0, %v2300
      %v2302 = vpop.f32.mrb[0].mxu0
      %2303 = vmatprep.mubr.f32.mxu0 0.0
      %2304 = vmatmul.mubr.f32.gmra.mrb[0].mxu0 %v1462
      %v2305 = vpop.f32.mrb[0].mxu0
      %v2306 = vadd.f32 0.0, %v2305
      %v2307 = vpop.f32.mrb[0].mxu0
      %2308 = vmatprep.mubr.f32.mxu0 0.0
      %2309 = vmatmul.mubr.f32.gmra.mrb[0].mxu0 %v1465
      %v2310 = vpop.f32.mrb[0].mxu0
      %v2311 = vadd.f32 0.0, %v2310
      %v2312 = vpop.f32.mrb[0].mxu0
      %2313 = vmatprep.mubr.f32.mxu0 0.0
      %2314 = vmatmul.mubr.f32.gmra.mrb[0].mxu0 %v1468
      %v2315 = vpop.f32.mrb[0].mxu0
      %v2316 = vadd.f32 0.0, %v2315
      %v2317 = vpop.f32.mrb[0].mxu0
      %2318 = vmatprep.mubr.f32.mxu0 0.0
      %2319 = vmatmul.mubr.f32.gmra.mrb[0].mxu0 %v1471
      %v2320 = vpop.f32.mrb[0].mxu0
      %v2321 = vadd.f32 0.0, %v2320
      %v2322 = vpop.f32.mrb[0].mxu0
      %2323 = vmatprep.mubr.f32.mxu0 0.0
      %2324 = vmatmul.mubr.f32.gmra.mrb[0].mxu0 %v1474
      %v2325 = vpop.f32.mrb[0].mxu0
      %v2326 = vadd.f32 0.0, %v2325
      %v2327 = vpop.f32.mrb[0].mxu0
      %2328 = vmatprep.mubr.f32.mxu0 0.0
      %2329 = vmatmul.mubr.f32.gmra.mrb[0].mxu0 %v1477
      %v2330 = vpop.f32.mrb[0].mxu0
      %v2331 = vadd.f32 0.0, %v2330
      %v2332 = vpop.f32.mrb[0].mxu0
      %2333 = vmatprep.mubr.f32.mxu0 0.0
      %2334 = vmatmul.mubr.f32.gmra.mrb[0].mxu0 %v1480
      %v2335 = vpop.f32.mrb[0].mxu0
      %v2336 = vadd.f32 0.0, %v2335
      %v2337 = vpop.f32.mrb[0].mxu0
      %2338 = vmatprep.mubr.f32.mxu0 0.0
      %2339 = vmatmul.mubr.f32.gmra.mrb[0].mxu0 %v1483
      %v2340 = vpop.f32.mrb[0].mxu0
      %v2341 = vadd.f32 0.0, %v2340
      %v2342 = vpop.f32.mrb[0].mxu0
      %2343 = vmatprep.mubr.f32.mxu0 0.0
      %2344 = vmatmul.mubr.f32.gmra.mrb[0].mxu0 %v1486
      %v2345 = vpop.f32.mrb[0].mxu0
      %v2346 = vadd.f32 0.0, %v2345
      %v2347 = vpop.f32.mrb[0].mxu0
      %2348 = vmatprep.mubr.f32.mxu0 0.0
      %2349 = vmatmul.mubr.f32.gmra.mrb[0].mxu0 %v1489
      %v2350 = vpop.f32.mrb[0].mxu0
      %v2351 = vadd.f32 0.0, %v2350
      %v2352 = vpop.f32.mrb[0].mxu0
      %2353 = vmatprep.mubr.f32.mxu0 0.0
      %2354 = vmatmul.mubr.f32.gmra.mrb[0].mxu0 %v1492
      %v2355 = vpop.f32.mrb[0].mxu0
      %v2356 = vadd.f32 0.0, %v2355
      %v2357 = vpop.f32.mrb[0].mxu0
      %2358 = vdwg.mxu0
      %v2359 = vld [vmem:[#allocation2] sm:$0xff]
      %v2360 = vld [vmem:[#allocation2 + $0x8] sm:$0xff]
      %v2361 = vld [vmem:[#allocation2 + $0x10] sm:$0xff]
      %v2362 = vld [vmem:[#allocation2 + $0x18] sm:$0xff]
      %v2363 = vld [vmem:[#allocation2 + $0x20] sm:$0xff]
      %v2364 = vld [vmem:[#allocation2 + $0x28] sm:$0xff]
      %v2365 = vld [vmem:[#allocation2 + $0x30] sm:$0xff]
      %v2366 = vld [vmem:[#allocation2 + $0x38] sm:$0xff]
      %v2367 = vld [vmem:[#allocation2 + $0x40] sm:$0xff]
      %v2368 = vld [vmem:[#allocation2 + $0x48] sm:$0xff]
      %v2369 = vld [vmem:[#allocation2 + $0x50] sm:$0xff]
      %v2370 = vld [vmem:[#allocation2 + $0x58] sm:$0xff]
      %v2371 = vld [vmem:[#allocation2 + $0x60] sm:$0xff]
      %v2372 = vld [vmem:[#allocation2 + $0x68] sm:$0xff]
      %v2373 = vld [vmem:[#allocation2 + $0x70] sm:$0xff]
      %v2374 = vld [vmem:[#allocation2 + $0x78] sm:$0xff]
      %v2375 = vld [vmem:[#allocation2 + $0x80] sm:$0xff]
      %v2376 = vld [vmem:[#allocation2 + $0x88] sm:$0xff]
      %v2377 = vld [vmem:[#allocation2 + $0x90] sm:$0xff]
      %v2378 = vld [vmem:[#allocation2 + $0x98] sm:$0xff]
      %v2379 = vld [vmem:[#allocation2 + $0xa0] sm:$0xff]
      %v2380 = vld [vmem:[#allocation2 + $0xa8] sm:$0xff]
      %v2381 = vld [vmem:[#allocation2 + $0xb0] sm:$0xff]
      %v2382 = vld [vmem:[#allocation2 + $0xb8] sm:$0xff]
      %v2383 = vld [vmem:[#allocation2 + $0xc0] sm:$0xff]
      %v2384 = vld [vmem:[#allocation2 + $0xc8] sm:$0xff]
      %v2385 = vld [vmem:[#allocation2 + $0xd0] sm:$0xff]
      %v2386 = vld [vmem:[#allocation2 + $0xd8] sm:$0xff]
      %v2387 = vld [vmem:[#allocation2 + $0xe0] sm:$0xff]
      %v2388 = vld [vmem:[#allocation2 + $0xe8] sm:$0xff]
      %v2389 = vadd.f32 %v2359, %v2211
      %v2390 = vadd.f32 %v2360, %v2216
      %v2391 = vadd.f32 %v2361, %v2221
      %v2392 = vadd.f32 %v2362, %v2226
      %v2393 = vadd.f32 %v2363, %v2231
      %v2394 = vadd.f32 %v2364, %v2236
      %v2395 = vadd.f32 %v2365, %v2241
      %v2396 = vadd.f32 %v2366, %v2246
      %v2397 = vadd.f32 %v2367, %v2251
      %v2398 = vadd.f32 %v2368, %v2256
      %v2399 = vadd.f32 %v2369, %v2261
      %v2400 = vadd.f32 %v2370, %v2266
      %v2401 = vadd.f32 %v2371, %v2271
      %v2402 = vadd.f32 %v2372, %v2276
      %v2403 = vadd.f32 %v2373, %v2281
      %v2404 = vadd.f32 %v2374, %v2286
      %v2405 = vadd.f32 %v2375, %v2291
      %v2406 = vadd.f32 %v2376, %v2296
      %v2407 = vadd.f32 %v2377, %v2301
      %v2408 = vadd.f32 %v2378, %v2306
      %v2409 = vadd.f32 %v2379, %v2311
      %v2410 = vadd.f32 %v2380, %v2316
      %v2411 = vadd.f32 %v2381, %v2321
      %v2412 = vadd.f32 %v2382, %v2326
      %v2413 = vadd.f32 %v2383, %v2331
      %v2414 = vadd.f32 %v2384, %v2336
      %v2415 = vadd.f32 %v2385, %v2341
      %v2416 = vadd.f32 %v2386, %v2346
      %v2417 = vadd.f32 %v2387, %v2351
      %v2418 = vadd.f32 %v2388, %v2356
      %2419 = vst.msk [vmem:[#allocation2] sm:$0xff] %vm839, %v2389
      %2420 = vst.msk [vmem:[#allocation2 + $0x8] sm:$0xff] %vm839, %v2390
      %2421 = vst.msk [vmem:[#allocation2 + $0x10] sm:$0xff] %vm839, %v2391
      %2422 = vst.msk [vmem:[#allocation2 + $0x18] sm:$0xff] %vm839, %v2392
      %2423 = vst.msk [vmem:[#allocation2 + $0x20] sm:$0xff] %vm839, %v2393
      %2424 = vst.msk [vmem:[#allocation2 + $0x28] sm:$0xff] %vm839, %v2394
      %2425 = vst.msk [vmem:[#allocation2 + $0x30] sm:$0xff] %vm839, %v2395
      %2426 = vst.msk [vmem:[#allocation2 + $0x38] sm:$0xff] %vm839, %v2396
      %2427 = vst.msk [vmem:[#allocation2 + $0x40] sm:$0xff] %vm839, %v2397
      %2428 = vst.msk [vmem:[#allocation2 + $0x48] sm:$0xff] %vm839, %v2398
      %2429 = vst.msk [vmem:[#allocation2 + $0x50] sm:$0xff] %vm839, %v2399
      %2430 = vst.msk [vmem:[#allocation2 + $0x58] sm:$0xff] %vm839, %v2400
      %2431 = vst.msk [vmem:[#allocation2 + $0x60] sm:$0xff] %vm839, %v2401
      %2432 = vst.msk [vmem:[#allocation2 + $0x68] sm:$0xff] %vm839, %v2402
      %2433 = vst.msk [vmem:[#allocation2 + $0x70] sm:$0xff] %vm839, %v2403
      %2434 = vst.msk [vmem:[#allocation2 + $0x78] sm:$0xff] %vm839, %v2404
      %2435 = vst.msk [vmem:[#allocation2 + $0x80] sm:$0xff] %vm839, %v2405
      %2436 = vst.msk [vmem:[#allocation2 + $0x88] sm:$0xff] %vm839, %v2406
      %2437 = vst.msk [vmem:[#allocation2 + $0x90] sm:$0xff] %vm839, %v2407
      %2438 = vst.msk [vmem:[#allocation2 + $0x98] sm:$0xff] %vm839, %v2408
      %2439 = vst.msk [vmem:[#allocation2 + $0xa0] sm:$0xff] %vm839, %v2409
      %2440 = vst.msk [vmem:[#allocation2 + $0xa8] sm:$0xff] %vm839, %v2410
      %2441 = vst.msk [vmem:[#allocation2 + $0xb0] sm:$0xff] %vm839, %v2411
      %2442 = vst.msk [vmem:[#allocation2 + $0xb8] sm:$0xff] %vm839, %v2412
      %2443 = vst.msk [vmem:[#allocation2 + $0xc0] sm:$0xff] %vm839, %v2413
      %2444 = vst.msk [vmem:[#allocation2 + $0xc8] sm:$0xff] %vm839, %v2414
      %2445 = vst.msk [vmem:[#allocation2 + $0xd0] sm:$0xff] %vm839, %v2415
      %2446 = vst.msk [vmem:[#allocation2 + $0xd8] sm:$0xff] %vm839, %v2416
      %2447 = vst.msk [vmem:[#allocation2 + $0xe0] sm:$0xff] %vm839, %v2417
      %2448 = vst.msk [vmem:[#allocation2 + $0xe8] sm:$0xff] %vm839, %v2418
      %v2449 = vld [vmem:[#allocation2] sm:$0xff]
      %v2450 = vld [vmem:[#allocation2 + $0x8] sm:$0xff]
      %v2451 = vld [vmem:[#allocation2 + $0x10] sm:$0xff]
      %v2452 = vld [vmem:[#allocation2 + $0x18] sm:$0xff]
      %v2453 = vld [vmem:[#allocation2 + $0x20] sm:$0xff]
      %v2454 = vld [vmem:[#allocation2 + $0x28] sm:$0xff]
      %v2455 = vld [vmem:[#allocation2 + $0x30] sm:$0xff]
      %v2456 = vld [vmem:[#allocation2 + $0x38] sm:$0xff]
      %v2457 = vld [vmem:[#allocation2 + $0x40] sm:$0xff]
      %v2458 = vld [vmem:[#allocation2 + $0x48] sm:$0xff]
      %v2459 = vld [vmem:[#allocation2 + $0x50] sm:$0xff]
      %v2460 = vld [vmem:[#allocation2 + $0x58] sm:$0xff]
      %v2461 = vld [vmem:[#allocation2 + $0x60] sm:$0xff]
      %v2462 = vld [vmem:[#allocation2 + $0x68] sm:$0xff]
      %v2463 = vld [vmem:[#allocation2 + $0x70] sm:$0xff]
      %v2464 = vld [vmem:[#allocation2 + $0x78] sm:$0xff]
      %v2465 = vld [vmem:[#allocation2 + $0x80] sm:$0xff]
      %v2466 = vld [vmem:[#allocation2 + $0x88] sm:$0xff]
      %v2467 = vld [vmem:[#allocation2 + $0x90] sm:$0xff]
      %v2468 = vld [vmem:[#allocation2 + $0x98] sm:$0xff]
      %v2469 = vld [vmem:[#allocation2 + $0xa0] sm:$0xff]
      %v2470 = vld [vmem:[#allocation2 + $0xa8] sm:$0xff]
      %v2471 = vld [vmem:[#allocation2 + $0xb0] sm:$0xff]
      %v2472 = vld [vmem:[#allocation2 + $0xb8] sm:$0xff]
      %v2473 = vld [vmem:[#allocation2 + $0xc0] sm:$0xff]
      %v2474 = vld [vmem:[#allocation2 + $0xc8] sm:$0xff]
      %v2475 = vld [vmem:[#allocation2 + $0xd0] sm:$0xff]
      %v2476 = vld [vmem:[#allocation2 + $0xd8] sm:$0xff]
      %v2477 = vld [vmem:[#allocation2 + $0xe0] sm:$0xff]
      %v2478 = vld [vmem:[#allocation2 + $0xe8] sm:$0xff]
      %v2479 = vld [vmem:[#allocation2 + $0xf0] sm:$0xff]
      %v2480 = vld [vmem:[#allocation2 + $0xf8] sm:$0xff]
      %2481 = vst.msk [vmem:[%s298] sm:$0xff] %vm839, %v2449
      %2482 = vst.msk [vmem:[%s298 + $0x8] sm:$0xff] %vm839, %v2450
      %2483 = vst.msk [vmem:[%s298 + $0x10] sm:$0xff] %vm839, %v2451
      %2484 = vst.msk [vmem:[%s298 + $0x18] sm:$0xff] %vm839, %v2452
      %2485 = vst.msk [vmem:[%s298 + $0x20] sm:$0xff] %vm839, %v2453
      %2486 = vst.msk [vmem:[%s298 + $0x28] sm:$0xff] %vm839, %v2454
      %2487 = vst.msk [vmem:[%s298 + $0x30] sm:$0xff] %vm839, %v2455
      %2488 = vst.msk [vmem:[%s298 + $0x38] sm:$0xff] %vm839, %v2456
      %2489 = vst.msk [vmem:[%s298 + $0x40] sm:$0xff] %vm839, %v2457
      %2490 = vst.msk [vmem:[%s298 + $0x48] sm:$0xff] %vm839, %v2458
      %2491 = vst.msk [vmem:[%s298 + $0x50] sm:$0xff] %vm839, %v2459
      %2492 = vst.msk [vmem:[%s298 + $0x58] sm:$0xff] %vm839, %v2460
      %2493 = vst.msk [vmem:[%s298 + $0x60] sm:$0xff] %vm839, %v2461
      %2494 = vst.msk [vmem:[%s298 + $0x68] sm:$0xff] %vm839, %v2462
      %2495 = vst.msk [vmem:[%s298 + $0x70] sm:$0xff] %vm839, %v2463
      %2496 = vst.msk [vmem:[%s298 + $0x78] sm:$0xff] %vm839, %v2464
      %2497 = vst.msk [vmem:[%s298 + $0x80] sm:$0xff] %vm839, %v2465
      %2498 = vst.msk [vmem:[%s298 + $0x88] sm:$0xff] %vm839, %v2466
      %2499 = vst.msk [vmem:[%s298 + $0x90] sm:$0xff] %vm839, %v2467
      %2500 = vst.msk [vmem:[%s298 + $0x98] sm:$0xff] %vm839, %v2468
      %2501 = vst.msk [vmem:[%s298 + $0xa0] sm:$0xff] %vm839, %v2469
      %2502 = vst.msk [vmem:[%s298 + $0xa8] sm:$0xff] %vm839, %v2470
      %2503 = vst.msk [vmem:[%s298 + $0xb0] sm:$0xff] %vm839, %v2471
      %2504 = vst.msk [vmem:[%s298 + $0xb8] sm:$0xff] %vm839, %v2472
      %2505 = vst.msk [vmem:[%s298 + $0xc0] sm:$0xff] %vm839, %v2473
      %2506 = vst.msk [vmem:[%s298 + $0xc8] sm:$0xff] %vm839, %v2474
      %2507 = vst.msk [vmem:[%s298 + $0xd0] sm:$0xff] %vm839, %v2475
      %2508 = vst.msk [vmem:[%s298 + $0xd8] sm:$0xff] %vm839, %v2476
      %2509 = vst.msk [vmem:[%s298 + $0xe0] sm:$0xff] %vm839, %v2477
      %2510 = vst.msk [vmem:[%s298 + $0xe8] sm:$0xff] %vm839, %v2478
      %2511 = vst.msk [vmem:[%s298 + $0xf0] sm:$0xff] %vm839, %v2479
      %2512 = vst.msk [vmem:[%s298 + $0xf8] sm:$0xff] %vm839, %v2480
      %p2513 = scmp.lt.s32.totalorder %s18, 1
      %s2514 = scalar_select %p2513, %s18, 1
      %s2515 = smul.addr %s2514, 32
      %s2516 = smul.addr %s2515, 8
      %s2517 = scalar_lea.vmem %s7, %s2516
      // Predicated region
      $region49: #{resblock_generator.3} parent=47 // pred_check
        %p2518 = pneg %p193
      $region50: #{resblock_generator.3} parent=47 // pred_check_branch
        %2520 = sbr.rel (%p2518) target = $region52
      $region51: #{resblock_generator.3} parent=47 // pred_region
        _
      $region52: #{resblock_generator.3} parent=47 // pred_fallthru
        _
    $region48: #{resblock_generator.3} parent=5 // pred_fallthru
      _
    %p2521 = scmp.le.s32.totalorder 2, %s13
    // Predicated region
    $region53: #{resblock_generator.3} parent=5 // pred_check
      %p2522 = pneg %p2521
    $region54: #{resblock_generator.3} parent=5 // pred_check_branch
      %2524 = sbr.rel (%p2522) target = $region56
    $region55: #{resblock_generator.3} parent=5 // pred_region
      %s2525 = ssub.s32 %s13, 2
      // Predicated region
      $region57: #{resblock_generator.3} parent=55 // pred_check
        %p2526 = pneg %p199
      $region58: #{resblock_generator.3} parent=55 // pred_check_branch
        %2528 = sbr.rel (%p2526) target = $region60
      $region59: #{resblock_generator.3} parent=55 // pred_region
        %p2529 = scmp.lt.s32.totalorder %s19, 1
        %s2530 = scalar_select %p2529, %s19, 1
        %s2531 = smul.addr %s2530, 32
        %s2532 = smul.addr %s2531, 8
        %s2533 = scalar_lea.vmem %s7, %s2532
      $region60: #{resblock_generator.3} parent=55 // pred_fallthru
        _
    $region56: #{resblock_generator.3} parent=5 // pred_fallthru
      _
  $region6: #{resblock_generator.3} parent=0 // loop_footer
    %s17 = sadd.s32 1, %s13
  $region7: #{resblock_generator.3} parent=0 // loop_footer_branch
    %12 = sbr.rel target = $region3
  $region8: #{resblock_generator.3} parent=0 // loop_exit
    _

</llo_original>
